<compile_context>
chip_gen: v7x
topology: tpu7x:2x2x1
jax: 0.10.0
libtpu: 0.0.40
codegen_flags: <defaults>
</compile_context>

<pallas_src>
import numpy as np

import jax
import jax.numpy as jnp
from jax.experimental import pallas as pl
from jax.experimental.pallas import tpu as pltpu


# ------------------------------ small helpers -------------------------------

def _tree_sum(xs):
    """Balanced pairwise sum (avoids a deep serial MXU->VPU dependency chain)."""
    xs = list(xs)
    while len(xs) > 1:
        nxt = [xs[i] + xs[i + 1] for i in range(0, len(xs) - 1, 2)]
        if len(xs) % 2:
            nxt.append(xs[-1])
        xs = nxt
    return xs[0]


def _patches(x_nhwc, kh, kw):
    """Valid-conv im2col patches: (N, OH, OW, KH*KW*C), column order (kh, kw, c)."""
    n, h, w, c = x_nhwc.shape
    oh, ow = h - kh + 1, w - kw + 1
    pats = [x_nhwc[:, i:i + oh, j:j + ow, :] for i in range(kh) for j in range(kw)]
    return jnp.stack(pats, axis=3).reshape(n, oh, ow, kh * kw * c)


# ------------------------------ fused kernel --------------------------------

def net_kernel(c1_ref, w1_ref, b1_ref, w2_ref, b2_ref, wf1_ref, bf1_ref,
               wf2_ref, bf2_ref, wf3_ref, bf3_ref, o_ref, p1_sc, p_sc):
    """Whole forward pass for one sample, fully VMEM-resident."""
    f32 = jnp.float32
    bf16 = jnp.bfloat16

    # -------- stage 1: conv1 as one wide matmul per pool offset, pool, bias, relu
    # c1_ref[0, ab] : (16, 1050)  rows = (Ymod2, Y//2 padded to 8), cols = (X, kh, kw, cin)
    # w1_ref        : (1050, 84)  block-diagonal conv1 weight -> output lanes (X, c)
    y = None
    for ab in range(4):                                      # 2x2 pool offsets (a, b)
        d = jnp.dot(c1_ref[0, ab], w1_ref[...], preferred_element_type=f32)
        y = d if y is None else jnp.maximum(y, d)            # pool BEFORE bias/ReLU
    p1 = jnp.maximum(y + b1_ref[...], 0.0)                   # (16, 84) pooled conv1 map

    p1_sc[0:16, :] = p1
    p1_sc[16:24, :] = jnp.zeros((8, 84), f32)                 # pad rows (only invalid taps read them)

    # -------- stage 2: conv2 via 5 banded weight slabs per pool offset, pool, bias, relu
    # For pool offset (dy2, dx2) and vertical tap kh2 the needed pooled rows
    # Y = 2*ph2 + dy2 + kh2 are a CONTIGUOUS 8-row slice of p1_sc.
    pooled = None
    for dy2 in range(2):
        for dx2 in range(2):
            taps = []
            for kh2 in range(5):
                e = dy2 + kh2
                start = (e % 2) * 8 + (e // 2)
                lhs = p1_sc[start:start + 8, :].astype(bf16)               # (8, 84)
                taps.append(jnp.dot(lhs, w2_ref[dx2 * 5 + kh2],
                                    preferred_element_type=f32))           # (8, 112)
            acc = _tree_sum(taps)                                          # conv2 (pre-bias)
            pooled = acc if pooled is None else jnp.maximum(pooled, acc)   # 2x2 pool
    p2 = jnp.maximum(pooled + b2_ref[...], 0.0)     # (8, 112): rows ph2 (5 valid), lanes (pw2, oc)

    p_sc[0:8, :] = p2
    p_sc[8:16, :] = jnp.zeros((8, 112), f32)

    # -------- fc1 as 5 wide row-tap matmuls (flatten absorbed in the weight), fc2, fc3
    taps = []
    for ph2 in range(5):
        lhs = p_sc[ph2:ph2 + 8, :].astype(bf16)                            # (8, 112); row 0 is the tap
        taps.append(jnp.dot(lhs, wf1_ref[ph2], preferred_element_type=f32))
    h = jnp.maximum(_tree_sum(taps) + bf1_ref[...], 0.0)                   # (8, 120); row 0 is valid
    h = jnp.maximum(jnp.dot(h, wf2_ref[...], preferred_element_type=f32)
                    + bf2_ref[...], 0.0)                                   # (8, 84)
    logits = jnp.dot(h, wf3_ref[...], preferred_element_type=f32) + bf3_ref[...]   # (8, 10)
    o_ref[...] = logits[0:1, :].reshape(1, 1, 10)


# ------------------------- parameter preparation ----------------------------

def prepare_params(params):
    """Hoist all weight permutes / banded-matrix construction out of the forward path."""
    f32 = np.float32
    w1 = np.asarray(params["w1"], f32)       # (6, 3, 5, 5)   (oc, cin, kh, kw)
    w2 = np.asarray(params["w2"], f32)       # (16, 6, 5, 5)
    wf1 = np.asarray(params["wf1"], f32)     # (120, 400)     torch Linear (out, in)

    # conv1: block-diagonal (14*75, 14*6) so output lanes are (X, channel).
    w1m = w1.transpose(2, 3, 1, 0).reshape(75, 6)            # rows (kh, kw, cin), cols oc
    w1big = np.zeros((14 * 75, 14 * 6), f32)
    for X in range(14):
        w1big[X * 75:(X + 1) * 75, X * 6:(X + 1) * 6] = w1m

    # conv2: banded (84 -> 112) weight per (dx2 pool offset, kh2 vertical tap).
    w2big = np.zeros((10, 84, 112), f32)
    for dx2 in range(2):
        for kh2 in range(5):
            for pw2 in range(7):
                for kw2 in range(5):
                    X = 2 * pw2 + dx2 + kw2
                    if X < 14:
                        w2big[dx2 * 5 + kh2,
                              X * 6:(X + 1) * 6,
                              pw2 * 16:(pw2 + 1) * 16] = w2[:, :, kh2, kw2].T

    # fc1: per-ph2 (112, 120) slab; torch.flatten index = oc*25 + ph2*5 + pw2.
    wf1b = np.zeros((5, 112, 120), f32)
    for ph2 in range(5):
        for pw2 in range(5):
            cols = [oc * 25 + ph2 * 5 + pw2 for oc in range(16)]
            wf1b[ph2, pw2 * 16:(pw2 + 1) * 16, :] = wf1[:, cols].T

    return {
        "w1big": jnp.asarray(w1big, jnp.bfloat16),
        "b1t": jnp.asarray(np.tile(np.asarray(params["b1"], f32), 14).reshape(1, 84)),
        "w2big": jnp.asarray(w2big, jnp.bfloat16),
        "b2t": jnp.asarray(np.tile(np.asarray(params["b2"], f32), 7).reshape(1, 112)),
        "wf1b": jnp.asarray(wf1b, jnp.bfloat16),
        "bf1": jnp.asarray(np.asarray(params["bf1"], f32).reshape(1, 120)),
        "wf2": jnp.asarray(np.asarray(params["wf2"], f32).T),
        "bf2": jnp.asarray(np.asarray(params["bf2"], f32).reshape(1, 84)),
        "wf3": jnp.asarray(np.asarray(params["wf3"], f32).T),
        "bf3": jnp.asarray(np.asarray(params["bf3"], f32).reshape(1, 10)),
    }


# ------------------------------ full network --------------------------------

def net_forward(x_nchw, pp):
    """x_nchw: (N, 3, 32, 32) float32 -> logits (N, 10)."""
    n = x_nchw.shape[0]
    x = jnp.transpose(x_nchw, (0, 2, 3, 1)).astype(jnp.float32)     # NHWC (N, 32, 32, 3)

    # conv1 im2col (the only HBM activation), reordered so in-kernel rows are
    # (pool a, pool b | Ymod2, Y//2) and columns are (X, kh, kw, cin) = 1050.
    cols = _patches(x, 5, 5)                                        # (N, 28, 28, 75)
    cols = cols.reshape(n, 7, 2, 2, 14, 2, 75)                      # (n, Yh, Ym, a, X, b, col)
    cols = jnp.transpose(cols, (0, 3, 5, 2, 1, 4, 6))               # (n, a, b, Ym, Yh, X, col)
    cols = jnp.pad(cols, ((0, 0), (0, 0), (0, 0), (0, 0), (0, 1), (0, 0), (0, 0)))  # Yh 7->8
    cols = cols.reshape(n, 4, 16, 14 * 75).astype(jnp.bfloat16)     # (N, 4, 16, 1050)

    out = pl.pallas_call(
        net_kernel,
        out_shape=jax.ShapeDtypeStruct((n, 1, 10), jnp.float32),
        grid=(n,),
        in_specs=[
            pl.BlockSpec((1, 4, 16, 1050), lambda i: (i, 0, 0, 0)),   # per-sample activation
            pl.BlockSpec((1050, 84), lambda i: (0, 0)),               # weights: constant index_map
            pl.BlockSpec((1, 84), lambda i: (0, 0)),                  #   -> stay VMEM-resident
            pl.BlockSpec((10, 84, 112), lambda i: (0, 0, 0)),
            pl.BlockSpec((1, 112), lambda i: (0, 0)),
            pl.BlockSpec((5, 112, 120), lambda i: (0, 0, 0)),
            pl.BlockSpec((1, 120), lambda i: (0, 0)),
            pl.BlockSpec((120, 84), lambda i: (0, 0)),
            pl.BlockSpec((1, 84), lambda i: (0, 0)),
            pl.BlockSpec((84, 10), lambda i: (0, 0)),
            pl.BlockSpec((1, 10), lambda i: (0, 0)),
        ],
        out_specs=pl.BlockSpec((1, 1, 10), lambda i: (i, 0, 0)),
        scratch_shapes=[
            pltpu.VMEM((24, 84), jnp.float32),    # pooled conv1 map (+pad rows)
            pltpu.VMEM((16, 112), jnp.float32),   # pooled conv2 map (+pad rows)
        ],
        compiler_params=pltpu.CompilerParams(
            dimension_semantics=("parallel",)),   # v7x: shard batch over both TensorCores
    )(cols, pp["w1big"], pp["b1t"], pp["w2big"], pp["b2t"],
      pp["wf1b"], pp["bf1"], pp["wf2"], pp["bf2"], pp["wf3"], pp["bf3"])
    return out[:, 0, :]


def init_params(key):
    def uniform(k, shape, fan_in):
        bound = 1.0 / jnp.sqrt(float(fan_in))
        return jax.random.uniform(k, shape, jnp.float32, -bound, bound)

    ks = jax.random.split(key, 10)
    return {
        "w1": uniform(ks[0], (6, 3, 5, 5), 3 * 5 * 5),
        "b1": uniform(ks[1], (6,), 3 * 5 * 5),
        "w2": uniform(ks[2], (16, 6, 5, 5), 6 * 5 * 5),
        "b2": uniform(ks[3], (16,), 6 * 5 * 5),
        "wf1": uniform(ks[4], (120, 400), 400),   # torch Linear layout (out, in)
        "bf1": uniform(ks[5], (120,), 400),
        "wf2": uniform(ks[6], (84, 120), 120),
        "bf2": uniform(ks[7], (84,), 120),
        "wf3": uniform(ks[8], (10, 84), 84),
        "bf3": uniform(ks[9], (10,), 84),
    }


if __name__ == "__main__":
    key = jax.random.PRNGKey(0)
    k_in, k_par = jax.random.split(key)

    # fc1 (16*5*5 inputs) implies 32x32 spatial input; small batch = 2.
    x = jax.random.normal(k_in, (2, 3, 32, 32), dtype=jnp.float32)
    params = init_params(k_par)
    prepped = prepare_params(params)   # one-time weight permutes / banded matrices

    fwd = jax.jit(net_forward)
    out = fwd(x, prepped)
    out = jax.block_until_ready(out)

    assert out.shape == (2, 10), out.shape
    assert out.dtype == jnp.float32
    assert bool(jnp.all(jnp.isfinite(out)))
    print("KERNEL_OK")
</pallas_src>

<mosaic_0001>
module attributes {stable_mosaic.version = 11 : i64} {
  func.func @net_kernel(%arg0: i32, %arg1: memref<1x4x16x1050xbf16, #tpu.memory_space<vmem>>, %arg2: memref<1050x84xbf16, #tpu.memory_space<vmem>>, %arg3: memref<1x84xf32, #tpu.memory_space<vmem>>, %arg4: memref<10x84x112xbf16, #tpu.memory_space<vmem>>, %arg5: memref<1x112xf32, #tpu.memory_space<vmem>>, %arg6: memref<5x112x120xbf16, #tpu.memory_space<vmem>>, %arg7: memref<1x120xf32, #tpu.memory_space<vmem>>, %arg8: memref<120x84xf32, #tpu.memory_space<vmem>>, %arg9: memref<1x84xf32, #tpu.memory_space<vmem>>, %arg10: memref<84x10xf32, #tpu.memory_space<vmem>>, %arg11: memref<1x10xf32, #tpu.memory_space<vmem>>, %arg12: memref<1x1x10xf32, #tpu.memory_space<vmem>>, %arg13: memref<24x84xf32, #tpu.memory_space<vmem>>, %arg14: memref<16x112xf32, #tpu.memory_space<vmem>>) attributes {dimension_semantics = [#tpu.dimension_semantics<parallel>], iteration_bounds = array<i64: 2>, scalar_prefetch = 0 : i64, scratch_operands = 2 : i64, tpu.core_type = #tpu.core_type<tc>, window_params = [{transform_indices = @transform_0, window_bounds = array<i64: 1, 4, 16, 1050>}, {pipeline_mode = #tpu.pipeline_mode<synchronous>, transform_indices = @transform_1, window_bounds = array<i64: 1050, 84>}, {pipeline_mode = #tpu.pipeline_mode<synchronous>, transform_indices = @transform_2, window_bounds = array<i64: 1, 84>}, {pipeline_mode = #tpu.pipeline_mode<synchronous>, transform_indices = @transform_3, window_bounds = array<i64: 10, 84, 112>}, {pipeline_mode = #tpu.pipeline_mode<synchronous>, transform_indices = @transform_4, window_bounds = array<i64: 1, 112>}, {pipeline_mode = #tpu.pipeline_mode<synchronous>, transform_indices = @transform_5, window_bounds = array<i64: 5, 112, 120>}, {pipeline_mode = #tpu.pipeline_mode<synchronous>, transform_indices = @transform_6, window_bounds = array<i64: 1, 120>}, {pipeline_mode = #tpu.pipeline_mode<synchronous>, transform_indices = @transform_7, window_bounds = array<i64: 120, 84>}, {pipeline_mode = #tpu.pipeline_mode<synchronous>, transform_indices = @transform_8, window_bounds = array<i64: 1, 84>}, {pipeline_mode = #tpu.pipeline_mode<synchronous>, transform_indices = @transform_9, window_bounds = array<i64: 84, 10>}, {pipeline_mode = #tpu.pipeline_mode<synchronous>, transform_indices = @transform_10, window_bounds = array<i64: 1, 10>}, {transform_indices = @transform_11, window_bounds = array<i64: 1, 1, 10>}]} {
    %c0 = arith.constant 0 : index
    %c0_0 = arith.constant 0 : index
    %c0_1 = arith.constant 0 : index
    %c0_2 = arith.constant 0 : index
    %0 = vector.load %arg1[%c0, %c0_0, %c0_1, %c0_2] : memref<1x4x16x1050xbf16, #tpu.memory_space<vmem>>, vector<1x1x16x1050xbf16>
    %1 = vector.shape_cast %0 : vector<1x1x16x1050xbf16> to vector<16x1050xbf16>
    %c0_3 = arith.constant 0 : index
    %c0_4 = arith.constant 0 : index
    %2 = vector.load %arg2[%c0_3, %c0_4] : memref<1050x84xbf16, #tpu.memory_space<vmem>>, vector<1050x84xbf16>
    %cst = arith.constant dense<0.000000e+00> : vector<16x84xf32>
    %3 = tpu.matmul %1, %2, %cst {dimension_numbers = #tpu.dot_dimension_numbers<[1], [0], [0], [1], [0, 0, 1, 1], [], []>} : vector<16x1050xbf16>, vector<1050x84xbf16>, vector<16x84xf32> -> vector<16x84xf32>
    %c0_5 = arith.constant 0 : index
    %c1 = arith.constant 1 : index
    %c0_6 = arith.constant 0 : index
    %c0_7 = arith.constant 0 : index
    %4 = vector.load %arg1[%c0_5, %c1, %c0_6, %c0_7] : memref<1x4x16x1050xbf16, #tpu.memory_space<vmem>>, vector<1x1x16x1050xbf16>
    %5 = vector.shape_cast %4 : vector<1x1x16x1050xbf16> to vector<16x1050xbf16>
    %c0_8 = arith.constant 0 : index
    %c0_9 = arith.constant 0 : index
    %6 = vector.load %arg2[%c0_8, %c0_9] : memref<1050x84xbf16, #tpu.memory_space<vmem>>, vector<1050x84xbf16>
    %cst_10 = arith.constant dense<0.000000e+00> : vector<16x84xf32>
    %7 = tpu.matmul %5, %6, %cst_10 {dimension_numbers = #tpu.dot_dimension_numbers<[1], [0], [0], [1], [0, 0, 1, 1], [], []>} : vector<16x1050xbf16>, vector<1050x84xbf16>, vector<16x84xf32> -> vector<16x84xf32>
    %8 = arith.maximumf %3, %7 : vector<16x84xf32>
    %c0_11 = arith.constant 0 : index
    %c2 = arith.constant 2 : index
    %c0_12 = arith.constant 0 : index
    %c0_13 = arith.constant 0 : index
    %9 = vector.load %arg1[%c0_11, %c2, %c0_12, %c0_13] : memref<1x4x16x1050xbf16, #tpu.memory_space<vmem>>, vector<1x1x16x1050xbf16>
    %10 = vector.shape_cast %9 : vector<1x1x16x1050xbf16> to vector<16x1050xbf16>
    %c0_14 = arith.constant 0 : index
    %c0_15 = arith.constant 0 : index
    %11 = vector.load %arg2[%c0_14, %c0_15] : memref<1050x84xbf16, #tpu.memory_space<vmem>>, vector<1050x84xbf16>
    %cst_16 = arith.constant dense<0.000000e+00> : vector<16x84xf32>
    %12 = tpu.matmul %10, %11, %cst_16 {dimension_numbers = #tpu.dot_dimension_numbers<[1], [0], [0], [1], [0, 0, 1, 1], [], []>} : vector<16x1050xbf16>, vector<1050x84xbf16>, vector<16x84xf32> -> vector<16x84xf32>
    %13 = arith.maximumf %8, %12 : vector<16x84xf32>
    %c0_17 = arith.constant 0 : index
    %c3 = arith.constant 3 : index
    %c0_18 = arith.constant 0 : index
    %c0_19 = arith.constant 0 : index
    %14 = vector.load %arg1[%c0_17, %c3, %c0_18, %c0_19] : memref<1x4x16x1050xbf16, #tpu.memory_space<vmem>>, vector<1x1x16x1050xbf16>
    %15 = vector.shape_cast %14 : vector<1x1x16x1050xbf16> to vector<16x1050xbf16>
    %c0_20 = arith.constant 0 : index
    %c0_21 = arith.constant 0 : index
    %16 = vector.load %arg2[%c0_20, %c0_21] : memref<1050x84xbf16, #tpu.memory_space<vmem>>, vector<1050x84xbf16>
    %cst_22 = arith.constant dense<0.000000e+00> : vector<16x84xf32>
    %17 = tpu.matmul %15, %16, %cst_22 {dimension_numbers = #tpu.dot_dimension_numbers<[1], [0], [0], [1], [0, 0, 1, 1], [], []>} : vector<16x1050xbf16>, vector<1050x84xbf16>, vector<16x84xf32> -> vector<16x84xf32>
    %18 = arith.maximumf %13, %17 : vector<16x84xf32>
    %c0_23 = arith.constant 0 : index
    %c0_24 = arith.constant 0 : index
    %19 = vector.load %arg3[%c0_23, %c0_24] : memref<1x84xf32, #tpu.memory_space<vmem>>, vector<1x84xf32>
    %20 = vector.broadcast %19 : vector<1x84xf32> to vector<16x84xf32>
    %21 = arith.addf %18, %20 : vector<16x84xf32>
    %cst_25 = arith.constant 0.000000e+00 : f32
    %22 = vector.broadcast %cst_25 : f32 to vector<16x84xf32>
    %23 = arith.maximumf %21, %22 : vector<16x84xf32>
    %c0_26 = arith.constant 0 : index
    %c0_27 = arith.constant 0 : index
    %24 = vector.load %arg13[%c0_26, %c0_27] : memref<24x84xf32, #tpu.memory_space<vmem>>, vector<16x84xf32>
    tpu.vector_store %arg13[%c0_26, %c0_27], %23 {strides = array<i32>} : memref<24x84xf32, #tpu.memory_space<vmem>>, vector<16x84xf32>,
    %cst_28 = arith.constant 0.000000e+00 : f32
    %25 = vector.broadcast %cst_28 : f32 to vector<8x84xf32>
    %c16 = arith.constant 16 : index
    %c0_29 = arith.constant 0 : index
    %26 = vector.load %arg13[%c16, %c0_29] : memref<24x84xf32, #tpu.memory_space<vmem>>, vector<8x84xf32>
    tpu.vector_store %arg13[%c16, %c0_29], %25 {strides = array<i32>} : memref<24x84xf32, #tpu.memory_space<vmem>>, vector<8x84xf32>,
    %c0_30 = arith.constant 0 : index
    %c0_31 = arith.constant 0 : index
    %27 = vector.load %arg13[%c0_30, %c0_31] : memref<24x84xf32, #tpu.memory_space<vmem>>, vector<8x84xf32>
    %28 = arith.truncf %27 : vector<8x84xf32> to vector<8x84xbf16>
    %c0_32 = arith.constant 0 : index
    %c0_33 = arith.constant 0 : index
    %c0_34 = arith.constant 0 : index
    %29 = vector.load %arg4[%c0_32, %c0_33, %c0_34] : memref<10x84x112xbf16, #tpu.memory_space<vmem>>, vector<1x84x112xbf16>
    %30 = vector.shape_cast %29 : vector<1x84x112xbf16> to vector<84x112xbf16>
    %cst_35 = arith.constant dense<0.000000e+00> : vector<8x112xf32>
    %31 = tpu.matmul %28, %30, %cst_35 {dimension_numbers = #tpu.dot_dimension_numbers<[1], [0], [0], [1], [0, 0, 1, 1], [], []>} : vector<8x84xbf16>, vector<84x112xbf16>, vector<8x112xf32> -> vector<8x112xf32>
    %c8 = arith.constant 8 : index
    %c0_36 = arith.constant 0 : index
    %32 = vector.load %arg13[%c8, %c0_36] : memref<24x84xf32, #tpu.memory_space<vmem>>, vector<8x84xf32>
    %33 = arith.truncf %32 : vector<8x84xf32> to vector<8x84xbf16>
    %c1_37 = arith.constant 1 : index
    %c0_38 = arith.constant 0 : index
    %c0_39 = arith.constant 0 : index
    %34 = vector.load %arg4[%c1_37, %c0_38, %c0_39] : memref<10x84x112xbf16, #tpu.memory_space<vmem>>, vector<1x84x112xbf16>
    %35 = vector.shape_cast %34 : vector<1x84x112xbf16> to vector<84x112xbf16>
    %cst_40 = arith.constant dense<0.000000e+00> : vector<8x112xf32>
    %36 = tpu.matmul %33, %35, %cst_40 {dimension_numbers = #tpu.dot_dimension_numbers<[1], [0], [0], [1], [0, 0, 1, 1], [], []>} : vector<8x84xbf16>, vector<84x112xbf16>, vector<8x112xf32> -> vector<8x112xf32>
    %c1_41 = arith.constant 1 : index
    %c0_42 = arith.constant 0 : index
    %37 = vector.load %arg13[%c1_41, %c0_42] : memref<24x84xf32, #tpu.memory_space<vmem>>, vector<8x84xf32>
    %38 = arith.truncf %37 : vector<8x84xf32> to vector<8x84xbf16>
    %c2_43 = arith.constant 2 : index
    %c0_44 = arith.constant 0 : index
    %c0_45 = arith.constant 0 : index
    %39 = vector.load %arg4[%c2_43, %c0_44, %c0_45] : memref<10x84x112xbf16, #tpu.memory_space<vmem>>, vector<1x84x112xbf16>
    %40 = vector.shape_cast %39 : vector<1x84x112xbf16> to vector<84x112xbf16>
    %cst_46 = arith.constant dense<0.000000e+00> : vector<8x112xf32>
    %41 = tpu.matmul %38, %40, %cst_46 {dimension_numbers = #tpu.dot_dimension_numbers<[1], [0], [0], [1], [0, 0, 1, 1], [], []>} : vector<8x84xbf16>, vector<84x112xbf16>, vector<8x112xf32> -> vector<8x112xf32>
    %c9 = arith.constant 9 : index
    %c0_47 = arith.constant 0 : index
    %42 = vector.load %arg13[%c9, %c0_47] : memref<24x84xf32, #tpu.memory_space<vmem>>, vector<8x84xf32>
    %43 = arith.truncf %42 : vector<8x84xf32> to vector<8x84xbf16>
    %c3_48 = arith.constant 3 : index
    %c0_49 = arith.constant 0 : index
    %c0_50 = arith.constant 0 : index
    %44 = vector.load %arg4[%c3_48, %c0_49, %c0_50] : memref<10x84x112xbf16, #tpu.memory_space<vmem>>, vector<1x84x112xbf16>
    %45 = vector.shape_cast %44 : vector<1x84x112xbf16> to vector<84x112xbf16>
    %cst_51 = arith.constant dense<0.000000e+00> : vector<8x112xf32>
    %46 = tpu.matmul %43, %45, %cst_51 {dimension_numbers = #tpu.dot_dimension_numbers<[1], [0], [0], [1], [0, 0, 1, 1], [], []>} : vector<8x84xbf16>, vector<84x112xbf16>, vector<8x112xf32> -> vector<8x112xf32>
    %c2_52 = arith.constant 2 : index
    %c0_53 = arith.constant 0 : index
    %47 = vector.load %arg13[%c2_52, %c0_53] : memref<24x84xf32, #tpu.memory_space<vmem>>, vector<8x84xf32>
    %48 = arith.truncf %47 : vector<8x84xf32> to vector<8x84xbf16>
    %c4 = arith.constant 4 : index
    %c0_54 = arith.constant 0 : index
    %c0_55 = arith.constant 0 : index
    %49 = vector.load %arg4[%c4, %c0_54, %c0_55] : memref<10x84x112xbf16, #tpu.memory_space<vmem>>, vector<1x84x112xbf16>
    %50 = vector.shape_cast %49 : vector<1x84x112xbf16> to vector<84x112xbf16>
    %cst_56 = arith.constant dense<0.000000e+00> : vector<8x112xf32>
    %51 = tpu.matmul %48, %50, %cst_56 {dimension_numbers = #tpu.dot_dimension_numbers<[1], [0], [0], [1], [0, 0, 1, 1], [], []>} : vector<8x84xbf16>, vector<84x112xbf16>, vector<8x112xf32> -> vector<8x112xf32>
    %52 = arith.addf %31, %36 : vector<8x112xf32>
    %53 = arith.addf %41, %46 : vector<8x112xf32>
    %54 = arith.addf %52, %53 : vector<8x112xf32>
    %55 = arith.addf %54, %51 : vector<8x112xf32>
    %c0_57 = arith.constant 0 : index
    %c0_58 = arith.constant 0 : index
    %56 = vector.load %arg13[%c0_57, %c0_58] : memref<24x84xf32, #tpu.memory_space<vmem>>, vector<8x84xf32>
    %57 = arith.truncf %56 : vector<8x84xf32> to vector<8x84xbf16>
    %c5 = arith.constant 5 : index
    %c0_59 = arith.constant 0 : index
    %c0_60 = arith.constant 0 : index
    %58 = vector.load %arg4[%c5, %c0_59, %c0_60] : memref<10x84x112xbf16, #tpu.memory_space<vmem>>, vector<1x84x112xbf16>
    %59 = vector.shape_cast %58 : vector<1x84x112xbf16> to vector<84x112xbf16>
    %cst_61 = arith.constant dense<0.000000e+00> : vector<8x112xf32>
    %60 = tpu.matmul %57, %59, %cst_61 {dimension_numbers = #tpu.dot_dimension_numbers<[1], [0], [0], [1], [0, 0, 1, 1], [], []>} : vector<8x84xbf16>, vector<84x112xbf16>, vector<8x112xf32> -> vector<8x112xf32>
    %c8_62 = arith.constant 8 : index
    %c0_63 = arith.constant 0 : index
    %61 = vector.load %arg13[%c8_62, %c0_63] : memref<24x84xf32, #tpu.memory_space<vmem>>, vector<8x84xf32>
    %62 = arith.truncf %61 : vector<8x84xf32> to vector<8x84xbf16>
    %c6 = arith.constant 6 : index
    %c0_64 = arith.constant 0 : index
    %c0_65 = arith.constant 0 : index
    %63 = vector.load %arg4[%c6, %c0_64, %c0_65] : memref<10x84x112xbf16, #tpu.memory_space<vmem>>, vector<1x84x112xbf16>
    %64 = vector.shape_cast %63 : vector<1x84x112xbf16> to vector<84x112xbf16>
    %cst_66 = arith.constant dense<0.000000e+00> : vector<8x112xf32>
    %65 = tpu.matmul %62, %64, %cst_66 {dimension_numbers = #tpu.dot_dimension_numbers<[1], [0], [0], [1], [0, 0, 1, 1], [], []>} : vector<8x84xbf16>, vector<84x112xbf16>, vector<8x112xf32> -> vector<8x112xf32>
    %c1_67 = arith.constant 1 : index
    %c0_68 = arith.constant 0 : index
    %66 = vector.load %arg13[%c1_67, %c0_68] : memref<24x84xf32, #tpu.memory_space<vmem>>, vector<8x84xf32>
    %67 = arith.truncf %66 : vector<8x84xf32> to vector<8x84xbf16>
    %c7 = arith.constant 7 : index
    %c0_69 = arith.constant 0 : index
    %c0_70 = arith.constant 0 : index
    %68 = vector.load %arg4[%c7, %c0_69, %c0_70] : memref<10x84x112xbf16, #tpu.memory_space<vmem>>, vector<1x84x112xbf16>
    %69 = vector.shape_cast %68 : vector<1x84x112xbf16> to vector<84x112xbf16>
    %cst_71 = arith.constant dense<0.000000e+00> : vector<8x112xf32>
    %70 = tpu.matmul %67, %69, %cst_71 {dimension_numbers = #tpu.dot_dimension_numbers<[1], [0], [0], [1], [0, 0, 1, 1], [], []>} : vector<8x84xbf16>, vector<84x112xbf16>, vector<8x112xf32> -> vector<8x112xf32>
    %c9_72 = arith.constant 9 : index
    %c0_73 = arith.constant 0 : index
    %71 = vector.load %arg13[%c9_72, %c0_73] : memref<24x84xf32, #tpu.memory_space<vmem>>, vector<8x84xf32>
    %72 = arith.truncf %71 : vector<8x84xf32> to vector<8x84xbf16>
    %c8_74 = arith.constant 8 : index
    %c0_75 = arith.constant 0 : index
    %c0_76 = arith.constant 0 : index
    %73 = vector.load %arg4[%c8_74, %c0_75, %c0_76] : memref<10x84x112xbf16, #tpu.memory_space<vmem>>, vector<1x84x112xbf16>
    %74 = vector.shape_cast %73 : vector<1x84x112xbf16> to vector<84x112xbf16>
    %cst_77 = arith.constant dense<0.000000e+00> : vector<8x112xf32>
    %75 = tpu.matmul %72, %74, %cst_77 {dimension_numbers = #tpu.dot_dimension_numbers<[1], [0], [0], [1], [0, 0, 1, 1], [], []>} : vector<8x84xbf16>, vector<84x112xbf16>, vector<8x112xf32> -> vector<8x112xf32>
    %c2_78 = arith.constant 2 : index
    %c0_79 = arith.constant 0 : index
    %76 = vector.load %arg13[%c2_78, %c0_79] : memref<24x84xf32, #tpu.memory_space<vmem>>, vector<8x84xf32>
    %77 = arith.truncf %76 : vector<8x84xf32> to vector<8x84xbf16>
    %c9_80 = arith.constant 9 : index
    %c0_81 = arith.constant 0 : index
    %c0_82 = arith.constant 0 : index
    %78 = vector.load %arg4[%c9_80, %c0_81, %c0_82] : memref<10x84x112xbf16, #tpu.memory_space<vmem>>, vector<1x84x112xbf16>
    %79 = vector.shape_cast %78 : vector<1x84x112xbf16> to vector<84x112xbf16>
    %cst_83 = arith.constant dense<0.000000e+00> : vector<8x112xf32>
    %80 = tpu.matmul %77, %79, %cst_83 {dimension_numbers = #tpu.dot_dimension_numbers<[1], [0], [0], [1], [0, 0, 1, 1], [], []>} : vector<8x84xbf16>, vector<84x112xbf16>, vector<8x112xf32> -> vector<8x112xf32>
    %81 = arith.addf %60, %65 : vector<8x112xf32>
    %82 = arith.addf %70, %75 : vector<8x112xf32>
    %83 = arith.addf %81, %82 : vector<8x112xf32>
    %84 = arith.addf %83, %80 : vector<8x112xf32>
    %85 = arith.maximumf %55, %84 : vector<8x112xf32>
    %c8_84 = arith.constant 8 : index
    %c0_85 = arith.constant 0 : index
    %86 = vector.load %arg13[%c8_84, %c0_85] : memref<24x84xf32, #tpu.memory_space<vmem>>, vector<8x84xf32>
    %87 = arith.truncf %86 : vector<8x84xf32> to vector<8x84xbf16>
    %c0_86 = arith.constant 0 : index
    %c0_87 = arith.constant 0 : index
    %c0_88 = arith.constant 0 : index
    %88 = vector.load %arg4[%c0_86, %c0_87, %c0_88] : memref<10x84x112xbf16, #tpu.memory_space<vmem>>, vector<1x84x112xbf16>
    %89 = vector.shape_cast %88 : vector<1x84x112xbf16> to vector<84x112xbf16>
    %cst_89 = arith.constant dense<0.000000e+00> : vector<8x112xf32>
    %90 = tpu.matmul %87, %89, %cst_89 {dimension_numbers = #tpu.dot_dimension_numbers<[1], [0], [0], [1], [0, 0, 1, 1], [], []>} : vector<8x84xbf16>, vector<84x112xbf16>, vector<8x112xf32> -> vector<8x112xf32>
    %c1_90 = arith.constant 1 : index
    %c0_91 = arith.constant 0 : index
    %91 = vector.load %arg13[%c1_90, %c0_91] : memref<24x84xf32, #tpu.memory_space<vmem>>, vector<8x84xf32>
    %92 = arith.truncf %91 : vector<8x84xf32> to vector<8x84xbf16>
    %c1_92 = arith.constant 1 : index
    %c0_93 = arith.constant 0 : index
    %c0_94 = arith.constant 0 : index
    %93 = vector.load %arg4[%c1_92, %c0_93, %c0_94] : memref<10x84x112xbf16, #tpu.memory_space<vmem>>, vector<1x84x112xbf16>
    %94 = vector.shape_cast %93 : vector<1x84x112xbf16> to vector<84x112xbf16>
    %cst_95 = arith.constant dense<0.000000e+00> : vector<8x112xf32>
    %95 = tpu.matmul %92, %94, %cst_95 {dimension_numbers = #tpu.dot_dimension_numbers<[1], [0], [0], [1], [0, 0, 1, 1], [], []>} : vector<8x84xbf16>, vector<84x112xbf16>, vector<8x112xf32> -> vector<8x112xf32>
    %c9_96 = arith.constant 9 : index
    %c0_97 = arith.constant 0 : index
    %96 = vector.load %arg13[%c9_96, %c0_97] : memref<24x84xf32, #tpu.memory_space<vmem>>, vector<8x84xf32>
    %97 = arith.truncf %96 : vector<8x84xf32> to vector<8x84xbf16>
    %c2_98 = arith.constant 2 : index
    %c0_99 = arith.constant 0 : index
    %c0_100 = arith.constant 0 : index
    %98 = vector.load %arg4[%c2_98, %c0_99, %c0_100] : memref<10x84x112xbf16, #tpu.memory_space<vmem>>, vector<1x84x112xbf16>
    %99 = vector.shape_cast %98 : vector<1x84x112xbf16> to vector<84x112xbf16>
    %cst_101 = arith.constant dense<0.000000e+00> : vector<8x112xf32>
    %100 = tpu.matmul %97, %99, %cst_101 {dimension_numbers = #tpu.dot_dimension_numbers<[1], [0], [0], [1], [0, 0, 1, 1], [], []>} : vector<8x84xbf16>, vector<84x112xbf16>, vector<8x112xf32> -> vector<8x112xf32>
    %c2_102 = arith.constant 2 : index
    %c0_103 = arith.constant 0 : index
    %101 = vector.load %arg13[%c2_102, %c0_103] : memref<24x84xf32, #tpu.memory_space<vmem>>, vector<8x84xf32>
    %102 = arith.truncf %101 : vector<8x84xf32> to vector<8x84xbf16>
    %c3_104 = arith.constant 3 : index
    %c0_105 = arith.constant 0 : index
    %c0_106 = arith.constant 0 : index
    %103 = vector.load %arg4[%c3_104, %c0_105, %c0_106] : memref<10x84x112xbf16, #tpu.memory_space<vmem>>, vector<1x84x112xbf16>
    %104 = vector.shape_cast %103 : vector<1x84x112xbf16> to vector<84x112xbf16>
    %cst_107 = arith.constant dense<0.000000e+00> : vector<8x112xf32>
    %105 = tpu.matmul %102, %104, %cst_107 {dimension_numbers = #tpu.dot_dimension_numbers<[1], [0], [0], [1], [0, 0, 1, 1], [], []>} : vector<8x84xbf16>, vector<84x112xbf16>, vector<8x112xf32> -> vector<8x112xf32>
    %c10 = arith.constant 10 : index
    %c0_108 = arith.constant 0 : index
    %106 = vector.load %arg13[%c10, %c0_108] : memref<24x84xf32, #tpu.memory_space<vmem>>, vector<8x84xf32>
    %107 = arith.truncf %106 : vector<8x84xf32> to vector<8x84xbf16>
    %c4_109 = arith.constant 4 : index
    %c0_110 = arith.constant 0 : index
    %c0_111 = arith.constant 0 : index
    %108 = vector.load %arg4[%c4_109, %c0_110, %c0_111] : memref<10x84x112xbf16, #tpu.memory_space<vmem>>, vector<1x84x112xbf16>
    %109 = vector.shape_cast %108 : vector<1x84x112xbf16> to vector<84x112xbf16>
    %cst_112 = arith.constant dense<0.000000e+00> : vector<8x112xf32>
    %110 = tpu.matmul %107, %109, %cst_112 {dimension_numbers = #tpu.dot_dimension_numbers<[1], [0], [0], [1], [0, 0, 1, 1], [], []>} : vector<8x84xbf16>, vector<84x112xbf16>, vector<8x112xf32> -> vector<8x112xf32>
    %111 = arith.addf %90, %95 : vector<8x112xf32>
    %112 = arith.addf %100, %105 : vector<8x112xf32>
    %113 = arith.addf %111, %112 : vector<8x112xf32>
    %114 = arith.addf %113, %110 : vector<8x112xf32>
    %115 = arith.maximumf %85, %114 : vector<8x112xf32>
    %c8_113 = arith.constant 8 : index
    %c0_114 = arith.constant 0 : index
    %116 = vector.load %arg13[%c8_113, %c0_114] : memref<24x84xf32, #tpu.memory_space<vmem>>, vector<8x84xf32>
    %117 = arith.truncf %116 : vector<8x84xf32> to vector<8x84xbf16>
    %c5_115 = arith.constant 5 : index
    %c0_116 = arith.constant 0 : index
    %c0_117 = arith.constant 0 : index
    %118 = vector.load %arg4[%c5_115, %c0_116, %c0_117] : memref<10x84x112xbf16, #tpu.memory_space<vmem>>, vector<1x84x112xbf16>
    %119 = vector.shape_cast %118 : vector<1x84x112xbf16> to vector<84x112xbf16>
    %cst_118 = arith.constant dense<0.000000e+00> : vector<8x112xf32>
    %120 = tpu.matmul %117, %119, %cst_118 {dimension_numbers = #tpu.dot_dimension_numbers<[1], [0], [0], [1], [0, 0, 1, 1], [], []>} : vector<8x84xbf16>, vector<84x112xbf16>, vector<8x112xf32> -> vector<8x112xf32>
    %c1_119 = arith.constant 1 : index
    %c0_120 = arith.constant 0 : index
    %121 = vector.load %arg13[%c1_119, %c0_120] : memref<24x84xf32, #tpu.memory_space<vmem>>, vector<8x84xf32>
    %122 = arith.truncf %121 : vector<8x84xf32> to vector<8x84xbf16>
    %c6_121 = arith.constant 6 : index
    %c0_122 = arith.constant 0 : index
    %c0_123 = arith.constant 0 : index
    %123 = vector.load %arg4[%c6_121, %c0_122, %c0_123] : memref<10x84x112xbf16, #tpu.memory_space<vmem>>, vector<1x84x112xbf16>
    %124 = vector.shape_cast %123 : vector<1x84x112xbf16> to vector<84x112xbf16>
    %cst_124 = arith.constant dense<0.000000e+00> : vector<8x112xf32>
    %125 = tpu.matmul %122, %124, %cst_124 {dimension_numbers = #tpu.dot_dimension_numbers<[1], [0], [0], [1], [0, 0, 1, 1], [], []>} : vector<8x84xbf16>, vector<84x112xbf16>, vector<8x112xf32> -> vector<8x112xf32>
    %c9_125 = arith.constant 9 : index
    %c0_126 = arith.constant 0 : index
    %126 = vector.load %arg13[%c9_125, %c0_126] : memref<24x84xf32, #tpu.memory_space<vmem>>, vector<8x84xf32>
    %127 = arith.truncf %126 : vector<8x84xf32> to vector<8x84xbf16>
    %c7_127 = arith.constant 7 : index
    %c0_128 = arith.constant 0 : index
    %c0_129 = arith.constant 0 : index
    %128 = vector.load %arg4[%c7_127, %c0_128, %c0_129] : memref<10x84x112xbf16, #tpu.memory_space<vmem>>, vector<1x84x112xbf16>
    %129 = vector.shape_cast %128 : vector<1x84x112xbf16> to vector<84x112xbf16>
    %cst_130 = arith.constant dense<0.000000e+00> : vector<8x112xf32>
    %130 = tpu.matmul %127, %129, %cst_130 {dimension_numbers = #tpu.dot_dimension_numbers<[1], [0], [0], [1], [0, 0, 1, 1], [], []>} : vector<8x84xbf16>, vector<84x112xbf16>, vector<8x112xf32> -> vector<8x112xf32>
    %c2_131 = arith.constant 2 : index
    %c0_132 = arith.constant 0 : index
    %131 = vector.load %arg13[%c2_131, %c0_132] : memref<24x84xf32, #tpu.memory_space<vmem>>, vector<8x84xf32>
    %132 = arith.truncf %131 : vector<8x84xf32> to vector<8x84xbf16>
    %c8_133 = arith.constant 8 : index
    %c0_134 = arith.constant 0 : index
    %c0_135 = arith.constant 0 : index
    %133 = vector.load %arg4[%c8_133, %c0_134, %c0_135] : memref<10x84x112xbf16, #tpu.memory_space<vmem>>, vector<1x84x112xbf16>
    %134 = vector.shape_cast %133 : vector<1x84x112xbf16> to vector<84x112xbf16>
    %cst_136 = arith.constant dense<0.000000e+00> : vector<8x112xf32>
    %135 = tpu.matmul %132, %134, %cst_136 {dimension_numbers = #tpu.dot_dimension_numbers<[1], [0], [0], [1], [0, 0, 1, 1], [], []>} : vector<8x84xbf16>, vector<84x112xbf16>, vector<8x112xf32> -> vector<8x112xf32>
    %c10_137 = arith.constant 10 : index
    %c0_138 = arith.constant 0 : index
    %136 = vector.load %arg13[%c10_137, %c0_138] : memref<24x84xf32, #tpu.memory_space<vmem>>, vector<8x84xf32>
    %137 = arith.truncf %136 : vector<8x84xf32> to vector<8x84xbf16>
    %c9_139 = arith.constant 9 : index
    %c0_140 = arith.constant 0 : index
    %c0_141 = arith.constant 0 : index
    %138 = vector.load %arg4[%c9_139, %c0_140, %c0_141] : memref<10x84x112xbf16, #tpu.memory_space<vmem>>, vector<1x84x112xbf16>
    %139 = vector.shape_cast %138 : vector<1x84x112xbf16> to vector<84x112xbf16>
    %cst_142 = arith.constant dense<0.000000e+00> : vector<8x112xf32>
    %140 = tpu.matmul %137, %139, %cst_142 {dimension_numbers = #tpu.dot_dimension_numbers<[1], [0], [0], [1], [0, 0, 1, 1], [], []>} : vector<8x84xbf16>, vector<84x112xbf16>, vector<8x112xf32> -> vector<8x112xf32>
    %141 = arith.addf %120, %125 : vector<8x112xf32>
    %142 = arith.addf %130, %135 : vector<8x112xf32>
    %143 = arith.addf %141, %142 : vector<8x112xf32>
    %144 = arith.addf %143, %140 : vector<8x112xf32>
    %145 = arith.maximumf %115, %144 : vector<8x112xf32>
    %c0_143 = arith.constant 0 : index
    %c0_144 = arith.constant 0 : index
    %146 = vector.load %arg5[%c0_143, %c0_144] : memref<1x112xf32, #tpu.memory_space<vmem>>, vector<1x112xf32>
    %147 = vector.broadcast %146 : vector<1x112xf32> to vector<8x112xf32>
    %148 = arith.addf %145, %147 : vector<8x112xf32>
    %cst_145 = arith.constant 0.000000e+00 : f32
    %149 = vector.broadcast %cst_145 : f32 to vector<8x112xf32>
    %150 = arith.maximumf %148, %149 : vector<8x112xf32>
    %c0_146 = arith.constant 0 : index
    %c0_147 = arith.constant 0 : index
    %151 = vector.load %arg14[%c0_146, %c0_147] : memref<16x112xf32, #tpu.memory_space<vmem>>, vector<8x112xf32>
    tpu.vector_store %arg14[%c0_146, %c0_147], %150 {strides = array<i32>} : memref<16x112xf32, #tpu.memory_space<vmem>>, vector<8x112xf32>,
    %cst_148 = arith.constant 0.000000e+00 : f32
    %152 = vector.broadcast %cst_148 : f32 to vector<8x112xf32>
    %c8_149 = arith.constant 8 : index
    %c0_150 = arith.constant 0 : index
    %153 = vector.load %arg14[%c8_149, %c0_150] : memref<16x112xf32, #tpu.memory_space<vmem>>, vector<8x112xf32>
    tpu.vector_store %arg14[%c8_149, %c0_150], %152 {strides = array<i32>} : memref<16x112xf32, #tpu.memory_space<vmem>>, vector<8x112xf32>,
    %c0_151 = arith.constant 0 : index
    %c0_152 = arith.constant 0 : index
    %154 = vector.load %arg14[%c0_151, %c0_152] : memref<16x112xf32, #tpu.memory_space<vmem>>, vector<8x112xf32>
    %155 = arith.truncf %154 : vector<8x112xf32> to vector<8x112xbf16>
    %c0_153 = arith.constant 0 : index
    %c0_154 = arith.constant 0 : index
    %c0_155 = arith.constant 0 : index
    %156 = vector.load %arg6[%c0_153, %c0_154, %c0_155] : memref<5x112x120xbf16, #tpu.memory_space<vmem>>, vector<1x112x120xbf16>
    %157 = vector.shape_cast %156 : vector<1x112x120xbf16> to vector<112x120xbf16>
    %cst_156 = arith.constant dense<0.000000e+00> : vector<8x120xf32>
    %158 = tpu.matmul %155, %157, %cst_156 {dimension_numbers = #tpu.dot_dimension_numbers<[1], [0], [0], [1], [0, 0, 1, 1], [], []>} : vector<8x112xbf16>, vector<112x120xbf16>, vector<8x120xf32> -> vector<8x120xf32>
    %c1_157 = arith.constant 1 : index
    %c0_158 = arith.constant 0 : index
    %159 = vector.load %arg14[%c1_157, %c0_158] : memref<16x112xf32, #tpu.memory_space<vmem>>, vector<8x112xf32>
    %160 = arith.truncf %159 : vector<8x112xf32> to vector<8x112xbf16>
    %c1_159 = arith.constant 1 : index
    %c0_160 = arith.constant 0 : index
    %c0_161 = arith.constant 0 : index
    %161 = vector.load %arg6[%c1_159, %c0_160, %c0_161] : memref<5x112x120xbf16, #tpu.memory_space<vmem>>, vector<1x112x120xbf16>
    %162 = vector.shape_cast %161 : vector<1x112x120xbf16> to vector<112x120xbf16>
    %cst_162 = arith.constant dense<0.000000e+00> : vector<8x120xf32>
    %163 = tpu.matmul %160, %162, %cst_162 {dimension_numbers = #tpu.dot_dimension_numbers<[1], [0], [0], [1], [0, 0, 1, 1], [], []>} : vector<8x112xbf16>, vector<112x120xbf16>, vector<8x120xf32> -> vector<8x120xf32>
    %c2_163 = arith.constant 2 : index
    %c0_164 = arith.constant 0 : index
    %164 = vector.load %arg14[%c2_163, %c0_164] : memref<16x112xf32, #tpu.memory_space<vmem>>, vector<8x112xf32>
    %165 = arith.truncf %164 : vector<8x112xf32> to vector<8x112xbf16>
    %c2_165 = arith.constant 2 : index
    %c0_166 = arith.constant 0 : index
    %c0_167 = arith.constant 0 : index
    %166 = vector.load %arg6[%c2_165, %c0_166, %c0_167] : memref<5x112x120xbf16, #tpu.memory_space<vmem>>, vector<1x112x120xbf16>
    %167 = vector.shape_cast %166 : vector<1x112x120xbf16> to vector<112x120xbf16>
    %cst_168 = arith.constant dense<0.000000e+00> : vector<8x120xf32>
    %168 = tpu.matmul %165, %167, %cst_168 {dimension_numbers = #tpu.dot_dimension_numbers<[1], [0], [0], [1], [0, 0, 1, 1], [], []>} : vector<8x112xbf16>, vector<112x120xbf16>, vector<8x120xf32> -> vector<8x120xf32>
    %c3_169 = arith.constant 3 : index
    %c0_170 = arith.constant 0 : index
    %169 = vector.load %arg14[%c3_169, %c0_170] : memref<16x112xf32, #tpu.memory_space<vmem>>, vector<8x112xf32>
    %170 = arith.truncf %169 : vector<8x112xf32> to vector<8x112xbf16>
    %c3_171 = arith.constant 3 : index
    %c0_172 = arith.constant 0 : index
    %c0_173 = arith.constant 0 : index
    %171 = vector.load %arg6[%c3_171, %c0_172, %c0_173] : memref<5x112x120xbf16, #tpu.memory_space<vmem>>, vector<1x112x120xbf16>
    %172 = vector.shape_cast %171 : vector<1x112x120xbf16> to vector<112x120xbf16>
    %cst_174 = arith.constant dense<0.000000e+00> : vector<8x120xf32>
    %173 = tpu.matmul %170, %172, %cst_174 {dimension_numbers = #tpu.dot_dimension_numbers<[1], [0], [0], [1], [0, 0, 1, 1], [], []>} : vector<8x112xbf16>, vector<112x120xbf16>, vector<8x120xf32> -> vector<8x120xf32>
    %c4_175 = arith.constant 4 : index
    %c0_176 = arith.constant 0 : index
    %174 = vector.load %arg14[%c4_175, %c0_176] : memref<16x112xf32, #tpu.memory_space<vmem>>, vector<8x112xf32>
    %175 = arith.truncf %174 : vector<8x112xf32> to vector<8x112xbf16>
    %c4_177 = arith.constant 4 : index
    %c0_178 = arith.constant 0 : index
    %c0_179 = arith.constant 0 : index
    %176 = vector.load %arg6[%c4_177, %c0_178, %c0_179] : memref<5x112x120xbf16, #tpu.memory_space<vmem>>, vector<1x112x120xbf16>
    %177 = vector.shape_cast %176 : vector<1x112x120xbf16> to vector<112x120xbf16>
    %cst_180 = arith.constant dense<0.000000e+00> : vector<8x120xf32>
    %178 = tpu.matmul %175, %177, %cst_180 {dimension_numbers = #tpu.dot_dimension_numbers<[1], [0], [0], [1], [0, 0, 1, 1], [], []>} : vector<8x112xbf16>, vector<112x120xbf16>, vector<8x120xf32> -> vector<8x120xf32>
    %179 = arith.addf %158, %163 : vector<8x120xf32>
    %180 = arith.addf %168, %173 : vector<8x120xf32>
    %181 = arith.addf %179, %180 : vector<8x120xf32>
    %182 = arith.addf %181, %178 : vector<8x120xf32>
    %c0_181 = arith.constant 0 : index
    %c0_182 = arith.constant 0 : index
    %183 = vector.load %arg7[%c0_181, %c0_182] : memref<1x120xf32, #tpu.memory_space<vmem>>, vector<1x120xf32>
    %184 = vector.broadcast %183 : vector<1x120xf32> to vector<8x120xf32>
    %185 = arith.addf %182, %184 : vector<8x120xf32>
    %cst_183 = arith.constant 0.000000e+00 : f32
    %186 = vector.broadcast %cst_183 : f32 to vector<8x120xf32>
    %187 = arith.maximumf %185, %186 : vector<8x120xf32>
    %c0_184 = arith.constant 0 : index
    %c0_185 = arith.constant 0 : index
    %188 = vector.load %arg8[%c0_184, %c0_185] : memref<120x84xf32, #tpu.memory_space<vmem>>, vector<120x84xf32>
    %cst_186 = arith.constant dense<0.000000e+00> : vector<8x84xf32>
    %189 = tpu.matmul %187, %188, %cst_186 {dimension_numbers = #tpu.dot_dimension_numbers<[1], [0], [0], [1], [0, 0, 1, 1], [], []>} : vector<8x120xf32>, vector<120x84xf32>, vector<8x84xf32> -> vector<8x84xf32>
    %c0_187 = arith.constant 0 : index
    %c0_188 = arith.constant 0 : index
    %190 = vector.load %arg9[%c0_187, %c0_188] : memref<1x84xf32, #tpu.memory_space<vmem>>, vector<1x84xf32>
    %191 = vector.broadcast %190 : vector<1x84xf32> to vector<8x84xf32>
    %192 = arith.addf %189, %191 : vector<8x84xf32>
    %cst_189 = arith.constant 0.000000e+00 : f32
    %193 = vector.broadcast %cst_189 : f32 to vector<8x84xf32>
    %194 = arith.maximumf %192, %193 : vector<8x84xf32>
    %c0_190 = arith.constant 0 : index
    %c0_191 = arith.constant 0 : index
    %195 = vector.load %arg10[%c0_190, %c0_191] : memref<84x10xf32, #tpu.memory_space<vmem>>, vector<84x10xf32>
    %cst_192 = arith.constant dense<0.000000e+00> : vector<8x10xf32>
    %196 = tpu.matmul %194, %195, %cst_192 {dimension_numbers = #tpu.dot_dimension_numbers<[1], [0], [0], [1], [0, 0, 1, 1], [], []>} : vector<8x84xf32>, vector<84x10xf32>, vector<8x10xf32> -> vector<8x10xf32>
    %c0_193 = arith.constant 0 : index
    %c0_194 = arith.constant 0 : index
    %197 = vector.load %arg11[%c0_193, %c0_194] : memref<1x10xf32, #tpu.memory_space<vmem>>, vector<1x10xf32>
    %198 = vector.broadcast %197 : vector<1x10xf32> to vector<8x10xf32>
    %199 = arith.addf %196, %198 : vector<8x10xf32>
    %200 = vector.extract_strided_slice %199 {offsets = [0, 0], sizes = [1, 10], strides = [1, 1]} : vector<8x10xf32> to vector<1x10xf32>
    %201 = vector.shape_cast %200 : vector<1x10xf32> to vector<1x1x10xf32>
    %c0_195 = arith.constant 0 : index
    %c0_196 = arith.constant 0 : index
    %c0_197 = arith.constant 0 : index
    %202 = vector.load %arg12[%c0_195, %c0_196, %c0_197] : memref<1x1x10xf32, #tpu.memory_space<vmem>>, vector<1x1x10xf32>
    tpu.vector_store %arg12[%c0_195, %c0_196, %c0_197], %201 {strides = array<i32>} : memref<1x1x10xf32, #tpu.memory_space<vmem>>, vector<1x1x10xf32>,
    return
  }
  func.func @transform_0(%arg0: i32) -> (i32, i32, i32, i32) {
    %c0_i32 = arith.constant 0 : i32
    %c0_i32_0 = arith.constant 0 : i32
    %c0_i32_1 = arith.constant 0 : i32
    %c0_i32_2 = arith.constant 0 : i32
    return %arg0, %c0_i32, %c0_i32_0, %c0_i32_1 : i32, i32, i32, i32
  }
  func.func @transform_1(%arg0: i32) -> (i32, i32) {
    %c0_i32 = arith.constant 0 : i32
    %c0_i32_0 = arith.constant 0 : i32
    %c0_i32_1 = arith.constant 0 : i32
    return %c0_i32, %c0_i32_0 : i32, i32
  }
  func.func @transform_2(%arg0: i32) -> (i32, i32) {
    %c0_i32 = arith.constant 0 : i32
    %c0_i32_0 = arith.constant 0 : i32
    %c0_i32_1 = arith.constant 0 : i32
    return %c0_i32, %c0_i32_0 : i32, i32
  }
  func.func @transform_3(%arg0: i32) -> (i32, i32, i32) {
    %c0_i32 = arith.constant 0 : i32
    %c0_i32_0 = arith.constant 0 : i32
    %c0_i32_1 = arith.constant 0 : i32
    %c0_i32_2 = arith.constant 0 : i32
    return %c0_i32, %c0_i32_0, %c0_i32_1 : i32, i32, i32
  }
  func.func @transform_4(%arg0: i32) -> (i32, i32) {
    %c0_i32 = arith.constant 0 : i32
    %c0_i32_0 = arith.constant 0 : i32
    %c0_i32_1 = arith.constant 0 : i32
    return %c0_i32, %c0_i32_0 : i32, i32
  }
  func.func @transform_5(%arg0: i32) -> (i32, i32, i32) {
    %c0_i32 = arith.constant 0 : i32
    %c0_i32_0 = arith.constant 0 : i32
    %c0_i32_1 = arith.constant 0 : i32
    %c0_i32_2 = arith.constant 0 : i32
    return %c0_i32, %c0_i32_0, %c0_i32_1 : i32, i32, i32
  }
  func.func @transform_6(%arg0: i32) -> (i32, i32) {
    %c0_i32 = arith.constant 0 : i32
    %c0_i32_0 = arith.constant 0 : i32
    %c0_i32_1 = arith.constant 0 : i32
    return %c0_i32, %c0_i32_0 : i32, i32
  }
  func.func @transform_7(%arg0: i32) -> (i32, i32) {
    %c0_i32 = arith.constant 0 : i32
    %c0_i32_0 = arith.constant 0 : i32
    %c0_i32_1 = arith.constant 0 : i32
    return %c0_i32, %c0_i32_0 : i32, i32
  }
  func.func @transform_8(%arg0: i32) -> (i32, i32) {
    %c0_i32 = arith.constant 0 : i32
    %c0_i32_0 = arith.constant 0 : i32
    %c0_i32_1 = arith.constant 0 : i32
    return %c0_i32, %c0_i32_0 : i32, i32
  }
  func.func @transform_9(%arg0: i32) -> (i32, i32) {
    %c0_i32 = arith.constant 0 : i32
    %c0_i32_0 = arith.constant 0 : i32
    %c0_i32_1 = arith.constant 0 : i32
    return %c0_i32, %c0_i32_0 : i32, i32
  }
  func.func @transform_10(%arg0: i32) -> (i32, i32) {
    %c0_i32 = arith.constant 0 : i32
    %c0_i32_0 = arith.constant 0 : i32
    %c0_i32_1 = arith.constant 0 : i32
    return %c0_i32, %c0_i32_0 : i32, i32
  }
  func.func @transform_11(%arg0: i32) -> (i32, i32, i32) {
    %c0_i32 = arith.constant 0 : i32
    %c0_i32_0 = arith.constant 0 : i32
    %c0_i32_1 = arith.constant 0 : i32
    return %arg0, %c0_i32, %c0_i32_0 : i32, i32, i32
  }
}

</mosaic_0001>

<llo_original>
// kernel: net_forward.1
$region0: #{net_forward.1}
  #allocation0 [shape = 'u32[]', space=smem, size = 0x4, offset = 0x4, fixed_abs, tag = 'smem constant byte address 0x4 - core index']
  #allocation1 [shape = 'u32[144,128]{1,0:T(1,128)}', space=vmem, size = 0x12000, scoped, tag = 'internal scratch']
  #allocation2 [shape = 'f32[24,84]{1,0:T(8,128)}', space=vmem, size = 0x3000, scoped, tag = 'scratch operand']
  #allocation3 [shape = 'f32[16,112]{1,0:T(8,128)}', space=vmem, size = 0x2000, scoped, tag = 'scratch operand']
  %s0 = inlined_call_operand.vmem [shape: bf16[2,4,16,1050], index: 0, kind: input, shape index: {}]
  %s1 = inlined_call_operand.vmem [shape: bf16[1050,84], index: 1, kind: input, shape index: {}]
  %s2 = inlined_call_operand.vmem [shape: f32[1,84], index: 2, kind: input, shape index: {}]
  %s3 = inlined_call_operand.vmem [shape: bf16[10,84,112], index: 3, kind: input, shape index: {}]
  %s4 = inlined_call_operand.vmem [shape: f32[1,112], index: 4, kind: input, shape index: {}]
  %s5 = inlined_call_operand.vmem [shape: bf16[5,112,120], index: 5, kind: input, shape index: {}]
  %s6 = inlined_call_operand.vmem [shape: f32[1,120], index: 6, kind: input, shape index: {}]
  %s7 = inlined_call_operand.vmem [shape: f32[120,84], index: 7, kind: input, shape index: {}]
  %s8 = inlined_call_operand.vmem [shape: f32[1,84], index: 8, kind: input, shape index: {}]
  %s9 = inlined_call_operand.vmem [shape: f32[84,10], index: 9, kind: input, shape index: {}]
  %s10 = inlined_call_operand.vmem [shape: f32[1,10], index: 10, kind: input, shape index: {}]
  %s11 = inlined_call_operand.hbm [shape: f32[2,1,10], index: 11, kind: output, shape index: {}]
  %s12 = sld [smem:[#allocation0]]
  $region77: #{net_forward.1} parent=0
    _
  %s14 = ssub.s32 1, %s12
  %s15 = scalar_select 0, %s14, %s12
  $region1: #{net_forward.1} parent=0
    #allocation4 [shape = 'u8[1024]{0}', space=vmem, size = 0x400, scoped, tag = 'output window, operand 0']
    #allocation5 [shape = 's32[2]{0}', space=sflag, size = 0x8, scoped, tag = 'scoped memory for net_forward.1']
    %16 = vsyncpa [#allocation5], 0
    %s17 = scalar_lea.sflag [#allocation5], 1
    %18 = vsyncpa %s17, 0
    loop: start=0, step=1, limit=4
    $region2: #{net_forward.1} parent=1 // loop_pre_header
      _
    $region3: #{net_forward.1} parent=1 // loop_header
      %s20 = sphi 0, %s24
      %p21 = scmp.ge.s32.totalorder %s20, 4
      %s30 = sphi 0, %s32
      %s33 = sphi 0, %s30
      %s34 = sphi 0, %s33
      %s50 = sphi 0, %s34
      %s54 = sphi 0, %s54
      %s56 = sphi 0, %s54
      %s57 = sphi 0, %s56
      %s71 = sphi 0, %s57
      %s75 = sphi 0, %s75
      %s77 = sphi 0, %s75
      %s78 = sphi 0, %s77
      %s92 = sphi 0, %s78
      %s96 = sphi 0, %s96
      %s98 = sphi 0, %s96
      %s99 = sphi 0, %s98
      %s113 = sphi 0, %s99
      %s117 = sphi 0, %s117
      %s119 = sphi 0, %s117
      %s120 = sphi 0, %s119
      %s134 = sphi 0, %s120
      %s138 = sphi 0, %s138
      %s140 = sphi 0, %s138
      %s141 = sphi 0, %s140
      %s155 = sphi 0, %s141
      %s159 = sphi 0, %s159
      %s161 = sphi 0, %s159
      %s162 = sphi 0, %s161
      %s176 = sphi 0, %s162
      %s180 = sphi 0, %s180
      %s182 = sphi 0, %s180
      %s183 = sphi 0, %s182
      %s197 = sphi 0, %s183
      %s201 = sphi 0, %s201
      %s203 = sphi 0, %s201
      %s204 = sphi 0, %s203
      %s218 = sphi 0, %s204
      %s222 = sphi 0, %s222
      %s224 = sphi 0, %s222
      %s225 = sphi 0, %s224
      %s239 = sphi 0, %s225
      %s243 = sphi 0, %s243
      %s245 = sphi 0, %s243
      %s246 = sphi 0, %s245
      %s260 = sphi 0, %s246
      %s266 = sphi 0, %s268
      %s269 = sphi 0, %s266
      %s270 = sphi 0, %s269
      %s286 = sphi 0, %s270
    $region4: #{net_forward.1} parent=1 // loop_header_branch
      %23 = sbr.rel (%p21) target = $region8
    $region5: #{net_forward.1} parent=1 // loop_body
      %s25 = ssub.s32 %s20, 1
      %s26 = ssub.s32 %s20, 2
      %s27 = sadd.s32 %s20, 1
      %s28 = ssub.s32 %s20, %s27
      %p29 = scmp.eq.s32.totalorder %s28, 0
      %s31 = sadd.s32 %s30, 1
      %s32 = scalar_select %p29, %s30, %s31
      %p35 = pneg %p29
      %p36 = scmp.eq.s32.totalorder %s20, 1
      %p37 = por %p35, %p36
      %p38 = scmp.ne.s32.totalorder %s30, %s33
      %p39 = scmp.eq.s32.totalorder %s20, 0
      %p40 = por %p38, %p39
      %p41 = scmp.ne.s32.totalorder %s30, %s33
      %p42 = scmp.eq.s32.totalorder %s25, 1
      %p43 = por %p41, %p42
      %p44 = scmp.ne.s32.totalorder %s33, %s34
      %p45 = scmp.eq.s32.totalorder %s25, 0
      %p46 = por %p44, %p45
      %p47 = scmp.ne.s32.totalorder %s33, %s34
      %p48 = scmp.eq.s32.totalorder %s26, 1
      %p49 = por %p47, %p48
      %p51 = scmp.ne.s32.totalorder %s34, %s50
      %p52 = scmp.eq.s32.totalorder %s26, 0
      %p53 = por %p51, %p52
      %s55 = sadd.s32 %s54, 1
      %p58 = scmp.eq.s32.totalorder %s20, 1
      %p59 = scmp.ne.s32.totalorder %s54, %s56
      %p60 = scmp.eq.s32.totalorder %s20, 0
      %p61 = por %p59, %p60
      %p62 = scmp.ne.s32.totalorder %s54, %s56
      %p63 = scmp.eq.s32.totalorder %s25, 1
      %p64 = por %p62, %p63
      %p65 = scmp.ne.s32.totalorder %s56, %s57
      %p66 = scmp.eq.s32.totalorder %s25, 0
      %p67 = por %p65, %p66
      %p68 = scmp.ne.s32.totalorder %s56, %s57
      %p69 = scmp.eq.s32.totalorder %s26, 1
      %p70 = por %p68, %p69
      %p72 = scmp.ne.s32.totalorder %s57, %s71
      %p73 = scmp.eq.s32.totalorder %s26, 0
      %p74 = por %p72, %p73
      %s76 = sadd.s32 %s75, 1
      %p79 = scmp.eq.s32.totalorder %s20, 1
      %p80 = scmp.ne.s32.totalorder %s75, %s77
      %p81 = scmp.eq.s32.totalorder %s20, 0
      %p82 = por %p80, %p81
      %p83 = scmp.ne.s32.totalorder %s75, %s77
      %p84 = scmp.eq.s32.totalorder %s25, 1
      %p85 = por %p83, %p84
      %p86 = scmp.ne.s32.totalorder %s77, %s78
      %p87 = scmp.eq.s32.totalorder %s25, 0
      %p88 = por %p86, %p87
      %p89 = scmp.ne.s32.totalorder %s77, %s78
      %p90 = scmp.eq.s32.totalorder %s26, 1
      %p91 = por %p89, %p90
      %p93 = scmp.ne.s32.totalorder %s78, %s92
      %p94 = scmp.eq.s32.totalorder %s26, 0
      %p95 = por %p93, %p94
      %s97 = sadd.s32 %s96, 1
      %p100 = scmp.eq.s32.totalorder %s20, 1
      %p101 = scmp.ne.s32.totalorder %s96, %s98
      %p102 = scmp.eq.s32.totalorder %s20, 0
      %p103 = por %p101, %p102
      %p104 = scmp.ne.s32.totalorder %s96, %s98
      %p105 = scmp.eq.s32.totalorder %s25, 1
      %p106 = por %p104, %p105
      %p107 = scmp.ne.s32.totalorder %s98, %s99
      %p108 = scmp.eq.s32.totalorder %s25, 0
      %p109 = por %p107, %p108
      %p110 = scmp.ne.s32.totalorder %s98, %s99
      %p111 = scmp.eq.s32.totalorder %s26, 1
      %p112 = por %p110, %p111
      %p114 = scmp.ne.s32.totalorder %s99, %s113
      %p115 = scmp.eq.s32.totalorder %s26, 0
      %p116 = por %p114, %p115
      %s118 = sadd.s32 %s117, 1
      %p121 = scmp.eq.s32.totalorder %s20, 1
      %p122 = scmp.ne.s32.totalorder %s117, %s119
      %p123 = scmp.eq.s32.totalorder %s20, 0
      %p124 = por %p122, %p123
      %p125 = scmp.ne.s32.totalorder %s117, %s119
      %p126 = scmp.eq.s32.totalorder %s25, 1
      %p127 = por %p125, %p126
      %p128 = scmp.ne.s32.totalorder %s119, %s120
      %p129 = scmp.eq.s32.totalorder %s25, 0
      %p130 = por %p128, %p129
      %p131 = scmp.ne.s32.totalorder %s119, %s120
      %p132 = scmp.eq.s32.totalorder %s26, 1
      %p133 = por %p131, %p132
      %p135 = scmp.ne.s32.totalorder %s120, %s134
      %p136 = scmp.eq.s32.totalorder %s26, 0
      %p137 = por %p135, %p136
      %s139 = sadd.s32 %s138, 1
      %p142 = scmp.eq.s32.totalorder %s20, 1
      %p143 = scmp.ne.s32.totalorder %s138, %s140
      %p144 = scmp.eq.s32.totalorder %s20, 0
      %p145 = por %p143, %p144
      %p146 = scmp.ne.s32.totalorder %s138, %s140
      %p147 = scmp.eq.s32.totalorder %s25, 1
      %p148 = por %p146, %p147
      %p149 = scmp.ne.s32.totalorder %s140, %s141
      %p150 = scmp.eq.s32.totalorder %s25, 0
      %p151 = por %p149, %p150
      %p152 = scmp.ne.s32.totalorder %s140, %s141
      %p153 = scmp.eq.s32.totalorder %s26, 1
      %p154 = por %p152, %p153
      %p156 = scmp.ne.s32.totalorder %s141, %s155
      %p157 = scmp.eq.s32.totalorder %s26, 0
      %p158 = por %p156, %p157
      %s160 = sadd.s32 %s159, 1
      %p163 = scmp.eq.s32.totalorder %s20, 1
      %p164 = scmp.ne.s32.totalorder %s159, %s161
      %p165 = scmp.eq.s32.totalorder %s20, 0
      %p166 = por %p164, %p165
      %p167 = scmp.ne.s32.totalorder %s159, %s161
      %p168 = scmp.eq.s32.totalorder %s25, 1
      %p169 = por %p167, %p168
      %p170 = scmp.ne.s32.totalorder %s161, %s162
      %p171 = scmp.eq.s32.totalorder %s25, 0
      %p172 = por %p170, %p171
      %p173 = scmp.ne.s32.totalorder %s161, %s162
      %p174 = scmp.eq.s32.totalorder %s26, 1
      %p175 = por %p173, %p174
      %p177 = scmp.ne.s32.totalorder %s162, %s176
      %p178 = scmp.eq.s32.totalorder %s26, 0
      %p179 = por %p177, %p178
      %s181 = sadd.s32 %s180, 1
      %p184 = scmp.eq.s32.totalorder %s20, 1
      %p185 = scmp.ne.s32.totalorder %s180, %s182
      %p186 = scmp.eq.s32.totalorder %s20, 0
      %p187 = por %p185, %p186
      %p188 = scmp.ne.s32.totalorder %s180, %s182
      %p189 = scmp.eq.s32.totalorder %s25, 1
      %p190 = por %p188, %p189
      %p191 = scmp.ne.s32.totalorder %s182, %s183
      %p192 = scmp.eq.s32.totalorder %s25, 0
      %p193 = por %p191, %p192
      %p194 = scmp.ne.s32.totalorder %s182, %s183
      %p195 = scmp.eq.s32.totalorder %s26, 1
      %p196 = por %p194, %p195
      %p198 = scmp.ne.s32.totalorder %s183, %s197
      %p199 = scmp.eq.s32.totalorder %s26, 0
      %p200 = por %p198, %p199
      %s202 = sadd.s32 %s201, 1
      %p205 = scmp.eq.s32.totalorder %s20, 1
      %p206 = scmp.ne.s32.totalorder %s201, %s203
      %p207 = scmp.eq.s32.totalorder %s20, 0
      %p208 = por %p206, %p207
      %p209 = scmp.ne.s32.totalorder %s201, %s203
      %p210 = scmp.eq.s32.totalorder %s25, 1
      %p211 = por %p209, %p210
      %p212 = scmp.ne.s32.totalorder %s203, %s204
      %p213 = scmp.eq.s32.totalorder %s25, 0
      %p214 = por %p212, %p213
      %p215 = scmp.ne.s32.totalorder %s203, %s204
      %p216 = scmp.eq.s32.totalorder %s26, 1
      %p217 = por %p215, %p216
      %p219 = scmp.ne.s32.totalorder %s204, %s218
      %p220 = scmp.eq.s32.totalorder %s26, 0
      %p221 = por %p219, %p220
      %s223 = sadd.s32 %s222, 1
      %p226 = scmp.eq.s32.totalorder %s20, 1
      %p227 = scmp.ne.s32.totalorder %s222, %s224
      %p228 = scmp.eq.s32.totalorder %s20, 0
      %p229 = por %p227, %p228
      %p230 = scmp.ne.s32.totalorder %s222, %s224
      %p231 = scmp.eq.s32.totalorder %s25, 1
      %p232 = por %p230, %p231
      %p233 = scmp.ne.s32.totalorder %s224, %s225
      %p234 = scmp.eq.s32.totalorder %s25, 0
      %p235 = por %p233, %p234
      %p236 = scmp.ne.s32.totalorder %s224, %s225
      %p237 = scmp.eq.s32.totalorder %s26, 1
      %p238 = por %p236, %p237
      %p240 = scmp.ne.s32.totalorder %s225, %s239
      %p241 = scmp.eq.s32.totalorder %s26, 0
      %p242 = por %p240, %p241
      %s244 = sadd.s32 %s243, 1
      %p247 = scmp.eq.s32.totalorder %s20, 1
      %p248 = scmp.ne.s32.totalorder %s243, %s245
      %p249 = scmp.eq.s32.totalorder %s20, 0
      %p250 = por %p248, %p249
      %p251 = scmp.ne.s32.totalorder %s243, %s245
      %p252 = scmp.eq.s32.totalorder %s25, 1
      %p253 = por %p251, %p252
      %p254 = scmp.ne.s32.totalorder %s245, %s246
      %p255 = scmp.eq.s32.totalorder %s25, 0
      %p256 = por %p254, %p255
      %p257 = scmp.ne.s32.totalorder %s245, %s246
      %p258 = scmp.eq.s32.totalorder %s26, 1
      %p259 = por %p257, %p258
      %p261 = scmp.ne.s32.totalorder %s246, %s260
      %p262 = scmp.eq.s32.totalorder %s26, 0
      %p263 = por %p261, %p262
      %s264 = ssub.s32 %s20, %s27
      %p265 = scmp.eq.s32.totalorder %s264, 0
      %s267 = sadd.s32 %s266, 1
      %s268 = scalar_select %p265, %s266, %s267
      %p271 = pneg %p265
      %p272 = scmp.eq.s32.totalorder %s20, 1
      %p273 = por %p271, %p272
      %p274 = scmp.ne.s32.totalorder %s266, %s269
      %p275 = scmp.eq.s32.totalorder %s20, 0
      %p276 = por %p274, %p275
      %p277 = scmp.ne.s32.totalorder %s266, %s269
      %p278 = scmp.eq.s32.totalorder %s25, 1
      %p279 = por %p277, %p278
      %p280 = scmp.ne.s32.totalorder %s269, %s270
      %p281 = scmp.eq.s32.totalorder %s25, 0
      %p282 = por %p280, %p281
      %p283 = scmp.ne.s32.totalorder %s269, %s270
      %p284 = scmp.eq.s32.totalorder %s26, 1
      %p285 = por %p283, %p284
      %p287 = scmp.ne.s32.totalorder %s270, %s286
      %p288 = scmp.eq.s32.totalorder %s26, 0
      %p289 = por %p287, %p288
      %p290 = scmp.le.s32.totalorder 1, %s20
      %p291 = scmp.lt.s32.totalorder %s20, 3
      %p292 = pnand %p290, %p291
      %p293 = pneg %p292
      // Predicated region
      $region9: #{net_forward.1} parent=5 // pred_check
        _
      $region10: #{net_forward.1} parent=5 // pred_check_branch
        %295 = sbr.rel (%p292) target = $region12
      $region11: #{net_forward.1} parent=5 // pred_region
        %s296 = ssub.s32 %s20, 1
        // Predicated region
        $region13: #{net_forward.1} parent=11 // pred_check
          %p297 = pneg %p67
        $region14: #{net_forward.1} parent=11 // pred_check_branch
          %299 = sbr.rel (%p297) target = $region16
        $region15: #{net_forward.1} parent=11 // pred_region
          _
        $region16: #{net_forward.1} parent=11 // pred_fallthru
          _
        // Predicated region
        $region17: #{net_forward.1} parent=11 // pred_check
          %p300 = pneg %p88
        $region18: #{net_forward.1} parent=11 // pred_check_branch
          %302 = sbr.rel (%p300) target = $region20
        $region19: #{net_forward.1} parent=11 // pred_region
          _
        $region20: #{net_forward.1} parent=11 // pred_fallthru
          _
        // Predicated region
        $region21: #{net_forward.1} parent=11 // pred_check
          %p303 = pneg %p109
        $region22: #{net_forward.1} parent=11 // pred_check_branch
          %305 = sbr.rel (%p303) target = $region24
        $region23: #{net_forward.1} parent=11 // pred_region
          _
        $region24: #{net_forward.1} parent=11 // pred_fallthru
          _
        // Predicated region
        $region25: #{net_forward.1} parent=11 // pred_check
          %p306 = pneg %p130
        $region26: #{net_forward.1} parent=11 // pred_check_branch
          %308 = sbr.rel (%p306) target = $region28
        $region27: #{net_forward.1} parent=11 // pred_region
          _
        $region28: #{net_forward.1} parent=11 // pred_fallthru
          _
        // Predicated region
        $region29: #{net_forward.1} parent=11 // pred_check
          %p309 = pneg %p151
        $region30: #{net_forward.1} parent=11 // pred_check_branch
          %311 = sbr.rel (%p309) target = $region32
        $region31: #{net_forward.1} parent=11 // pred_region
          _
        $region32: #{net_forward.1} parent=11 // pred_fallthru
          _
        // Predicated region
        $region33: #{net_forward.1} parent=11 // pred_check
          %p312 = pneg %p172
        $region34: #{net_forward.1} parent=11 // pred_check_branch
          %314 = sbr.rel (%p312) target = $region36
        $region35: #{net_forward.1} parent=11 // pred_region
          _
        $region36: #{net_forward.1} parent=11 // pred_fallthru
          _
        // Predicated region
        $region37: #{net_forward.1} parent=11 // pred_check
          %p315 = pneg %p193
        $region38: #{net_forward.1} parent=11 // pred_check_branch
          %317 = sbr.rel (%p315) target = $region40
        $region39: #{net_forward.1} parent=11 // pred_region
          _
        $region40: #{net_forward.1} parent=11 // pred_fallthru
          _
        // Predicated region
        $region41: #{net_forward.1} parent=11 // pred_check
          %p318 = pneg %p214
        $region42: #{net_forward.1} parent=11 // pred_check_branch
          %320 = sbr.rel (%p318) target = $region44
        $region43: #{net_forward.1} parent=11 // pred_region
          _
        $region44: #{net_forward.1} parent=11 // pred_fallthru
          _
        // Predicated region
        $region45: #{net_forward.1} parent=11 // pred_check
          %p321 = pneg %p235
        $region46: #{net_forward.1} parent=11 // pred_check_branch
          %323 = sbr.rel (%p321) target = $region48
        $region47: #{net_forward.1} parent=11 // pred_region
          _
        $region48: #{net_forward.1} parent=11 // pred_fallthru
          _
        // Predicated region
        $region49: #{net_forward.1} parent=11 // pred_check
          %p324 = pneg %p256
        $region50: #{net_forward.1} parent=11 // pred_check_branch
          %326 = sbr.rel (%p324) target = $region52
        $region51: #{net_forward.1} parent=11 // pred_region
          _
        $region52: #{net_forward.1} parent=11 // pred_fallthru
          _
      $region12: #{net_forward.1} parent=5 // pred_fallthru
        _
      %p327 = scmp.lt.s32.totalorder %s20, 2
      // Predicated region
      $region53: #{net_forward.1} parent=5 // pred_check
        %p328 = pneg %p327
      $region54: #{net_forward.1} parent=5 // pred_check_branch
        %330 = sbr.rel (%p328) target = $region56
      $region55: #{net_forward.1} parent=5 // pred_region
        // Predicated region
        $region57: #{net_forward.1} parent=55 // pred_check
          %p331 = pneg %p40
        $region58: #{net_forward.1} parent=55 // pred_check_branch
          %333 = sbr.rel (%p331) target = $region60
        $region59: #{net_forward.1} parent=55 // pred_region
          %p334 = scmp.lt.s32.totalorder %s20, 1
          %s335 = scalar_select %p334, %s20, 1
          %s336 = smul.addr %s335, 72
          %s337 = smul.addr %s336, 4
          %s338 = scalar_lea.vmem %s0, %s337
        $region60: #{net_forward.1} parent=55 // pred_fallthru
          _
      $region56: #{net_forward.1} parent=5 // pred_fallthru
        _
      %p339 = scmp.le.s32.totalorder 1, %s20
      %p340 = scmp.lt.s32.totalorder %s20, 3
      %p341 = pnand %p339, %p340
      %p342 = pneg %p341
      // Predicated region
      $region61: #{net_forward.1} parent=5 // pred_check
        _
      $region62: #{net_forward.1} parent=5 // pred_check_branch
        %344 = sbr.rel (%p341) target = $region64
      $region63: #{net_forward.1} parent=5 // pred_region
        %s345 = ssub.s32 %s20, 1
        %p346 = scmp.lt.s32.totalorder %s25, 1
        %s347 = scalar_select %p346, %s25, 1
        %s348 = smul.addr %s347, 72
        %s349 = smul.addr %s348, 4
        %s350 = scalar_lea.vmem %s0, %s349
        %p351 = pneg %p46
        %p352 = pneg %p43
        %p353 = pneg %p67
        %p354 = pneg %p64
        %p355 = pneg %p88
        %p356 = pneg %p85
        %p357 = pneg %p109
        %p358 = pneg %p106
        %p359 = pneg %p130
        %p360 = pneg %p127
        %p361 = pneg %p151
        %p362 = pneg %p148
        %p363 = pneg %p172
        %p364 = pneg %p169
        %p365 = pneg %p193
        %p366 = pneg %p190
        %p367 = pneg %p214
        %p368 = pneg %p211
        %p369 = pneg %p235
        %p370 = pneg %p232
        %p371 = pneg %p256
        %p372 = pneg %p253
        %p373 = pneg %p282
        %p374 = pneg %p279
        %s375 = sand.u32 %s269, 1
        %s376 = scalar_lea.sflag [#allocation5], %s375
        %s377 = sand.u32 %s269, 1
        %s378 = scalar_lea.vmem [#allocation4], %s377
        %p379 = scmp.lt.s32.totalorder %s25, 1
        %s380 = scalar_select %p379, %s25, 1
        %s381 = smul.addr %s380, 72
        %s382 = smul.addr %s381, 4
        %s383 = scalar_lea.vmem %s0, %s382
        %v385 = vld [vmem:[%s383] sm:$0xff]
        %v386 = vld [vmem:[%s383 + $0x8] sm:$0xff]
        %v387 = vld [vmem:[%s383 + $0x10] sm:$0xff]
        %v388 = vld [vmem:[%s383 + $0x18] sm:$0xff]
        %v389 = vld [vmem:[%s383 + $0x20] sm:$0xf]
        %v390 = vld [vmem:[%s383 + $0x24] sm:$0xff]
        %v391 = vld [vmem:[%s383 + $0x2c] sm:$0xff]
        %v392 = vld [vmem:[%s383 + $0x34] sm:$0xff]
        %v393 = vld [vmem:[%s383 + $0x3c] sm:$0xff]
        %v394 = vld [vmem:[%s383 + $0x44] sm:$0xf]
        %v395 = vld [vmem:[%s1] sm:$0xf]
        %v396 = vld [vmem:[%s1 + $0x4] sm:$0xf]
        %v397 = vld [vmem:[%s1 + $0x8] sm:$0xf]
        %v398 = vld [vmem:[%s1 + $0xc] sm:$0xf]
        %v399 = vld [vmem:[%s1 + $0x10] sm:$0xf]
        %v400 = vld [vmem:[%s1 + $0x14] sm:$0xf]
        %v401 = vld [vmem:[%s1 + $0x18] sm:$0xf]
        %v402 = vld [vmem:[%s1 + $0x1c] sm:$0xf]
        %v403 = vld [vmem:[%s1 + $0x20] sm:$0xf]
        %v404 = vld [vmem:[%s1 + $0x24] sm:$0xf]
        %v405 = vld [vmem:[%s1 + $0x28] sm:$0xf]
        %v406 = vld [vmem:[%s1 + $0x2c] sm:$0xf]
        %v407 = vld [vmem:[%s1 + $0x30] sm:$0xf]
        %v408 = vld [vmem:[%s1 + $0x34] sm:$0xf]
        %v409 = vld [vmem:[%s1 + $0x38] sm:$0xf]
        %v410 = vld [vmem:[%s1 + $0x3c] sm:$0xf]
        %v411 = vld [vmem:[%s1 + $0x40] sm:$0xf]
        %v412 = vld [vmem:[%s1 + $0x44] sm:$0xf]
        %v413 = vld [vmem:[%s1 + $0x48] sm:$0xf]
        %v414 = vld [vmem:[%s1 + $0x4c] sm:$0xf]
        %v415 = vld [vmem:[%s1 + $0x50] sm:$0xf]
        %v416 = vld [vmem:[%s1 + $0x54] sm:$0xf]
        %v417 = vld [vmem:[%s1 + $0x58] sm:$0xf]
        %v418 = vld [vmem:[%s1 + $0x5c] sm:$0xf]
        %v419 = vld [vmem:[%s1 + $0x60] sm:$0xf]
        %v420 = vld [vmem:[%s1 + $0x64] sm:$0xf]
        %v421 = vld [vmem:[%s1 + $0x68] sm:$0xf]
        %v422 = vld [vmem:[%s1 + $0x6c] sm:$0xf]
        %v423 = vld [vmem:[%s1 + $0x70] sm:$0xf]
        %v424 = vld [vmem:[%s1 + $0x74] sm:$0xf]
        %v425 = vld [vmem:[%s1 + $0x78] sm:$0xf]
        %v426 = vld [vmem:[%s1 + $0x7c] sm:$0xf]
        %v427 = vld [vmem:[%s1 + $0x80] sm:$0xf]
        %v428 = vld [vmem:[%s1 + $0x84] sm:$0xf]
        %v429 = vld [vmem:[%s1 + $0x88] sm:$0xf]
        %v430 = vld [vmem:[%s1 + $0x8c] sm:$0xf]
        %v431 = vld [vmem:[%s1 + $0x90] sm:$0xf]
        %v432 = vld [vmem:[%s1 + $0x94] sm:$0xf]
        %v433 = vld [vmem:[%s1 + $0x98] sm:$0xf]
        %v434 = vld [vmem:[%s1 + $0x9c] sm:$0xf]
        %v435 = vld [vmem:[%s1 + $0xa0] sm:$0xf]
        %v436 = vld [vmem:[%s1 + $0xa4] sm:$0xf]
        %v437 = vld [vmem:[%s1 + $0xa8] sm:$0xf]
        %v438 = vld [vmem:[%s1 + $0xac] sm:$0xf]
        %v439 = vld [vmem:[%s1 + $0xb0] sm:$0xf]
        %v440 = vld [vmem:[%s1 + $0xb4] sm:$0xf]
        %v441 = vld [vmem:[%s1 + $0xb8] sm:$0xf]
        %v442 = vld [vmem:[%s1 + $0xbc] sm:$0xf]
        %v443 = vld [vmem:[%s1 + $0xc0] sm:$0xf]
        %v444 = vld [vmem:[%s1 + $0xc4] sm:$0xf]
        %v445 = vld [vmem:[%s1 + $0xc8] sm:$0xf]
        %v446 = vld [vmem:[%s1 + $0xcc] sm:$0xf]
        %v447 = vld [vmem:[%s1 + $0xd0] sm:$0xf]
        %v448 = vld [vmem:[%s1 + $0xd4] sm:$0xf]
        %v449 = vld [vmem:[%s1 + $0xd8] sm:$0xf]
        %v450 = vld [vmem:[%s1 + $0xdc] sm:$0xf]
        %v451 = vld [vmem:[%s1 + $0xe0] sm:$0xf]
        %v452 = vld [vmem:[%s1 + $0xe4] sm:$0xf]
        %v453 = vld [vmem:[%s1 + $0xe8] sm:$0xf]
        %v454 = vld [vmem:[%s1 + $0xec] sm:$0xf]
        %v455 = vld [vmem:[%s1 + $0xf0] sm:$0xf]
        %v456 = vld [vmem:[%s1 + $0xf4] sm:$0xf]
        %v457 = vld [vmem:[%s1 + $0xf8] sm:$0xf]
        %v458 = vld [vmem:[%s1 + $0xfc] sm:$0xf]
        %v459 = vld [vmem:[%s1 + $0x100] sm:$0xf]
        %v460 = vld [vmem:[%s1 + $0x104] sm:$0xf]
        %v461 = vld [vmem:[%s1 + $0x108] sm:$0xf]
        %v462 = vld [vmem:[%s1 + $0x10c] sm:$0xf]
        %v463 = vld [vmem:[%s1 + $0x110] sm:$0xf]
        %v464 = vld [vmem:[%s1 + $0x114] sm:$0xf]
        %v465 = vld [vmem:[%s1 + $0x118] sm:$0xf]
        %v466 = vld [vmem:[%s1 + $0x11c] sm:$0xf]
        %v467 = vld [vmem:[%s1 + $0x120] sm:$0xf]
        %v468 = vld [vmem:[%s1 + $0x124] sm:$0xf]
        %v469 = vld [vmem:[%s1 + $0x128] sm:$0xf]
        %v470 = vld [vmem:[%s1 + $0x12c] sm:$0xf]
        %v471 = vld [vmem:[%s1 + $0x130] sm:$0xf]
        %v472 = vld [vmem:[%s1 + $0x134] sm:$0xf]
        %v473 = vld [vmem:[%s1 + $0x138] sm:$0xf]
        %v474 = vld [vmem:[%s1 + $0x13c] sm:$0xf]
        %v475 = vld [vmem:[%s1 + $0x140] sm:$0xf]
        %v476 = vld [vmem:[%s1 + $0x144] sm:$0xf]
        %v477 = vld [vmem:[%s1 + $0x148] sm:$0xf]
        %v478 = vld [vmem:[%s1 + $0x14c] sm:$0xf]
        %v479 = vld [vmem:[%s1 + $0x150] sm:$0xf]
        %v480 = vld [vmem:[%s1 + $0x154] sm:$0xf]
        %v481 = vld [vmem:[%s1 + $0x158] sm:$0xf]
        %v482 = vld [vmem:[%s1 + $0x15c] sm:$0xf]
        %v483 = vld [vmem:[%s1 + $0x160] sm:$0xf]
        %v484 = vld [vmem:[%s1 + $0x164] sm:$0xf]
        %v485 = vld [vmem:[%s1 + $0x168] sm:$0xf]
        %v486 = vld [vmem:[%s1 + $0x16c] sm:$0xf]
        %v487 = vld [vmem:[%s1 + $0x170] sm:$0xf]
        %v488 = vld [vmem:[%s1 + $0x174] sm:$0xf]
        %v489 = vld [vmem:[%s1 + $0x178] sm:$0xf]
        %v490 = vld [vmem:[%s1 + $0x17c] sm:$0xf]
        %v491 = vld [vmem:[%s1 + $0x180] sm:$0xf]
        %v492 = vld [vmem:[%s1 + $0x184] sm:$0xf]
        %v493 = vld [vmem:[%s1 + $0x188] sm:$0xf]
        %v494 = vld [vmem:[%s1 + $0x18c] sm:$0xf]
        %v495 = vld [vmem:[%s1 + $0x190] sm:$0xf]
        %v496 = vld [vmem:[%s1 + $0x194] sm:$0xf]
        %v497 = vld [vmem:[%s1 + $0x198] sm:$0xf]
        %v498 = vld [vmem:[%s1 + $0x19c] sm:$0xf]
        %v499 = vld [vmem:[%s1 + $0x1a0] sm:$0xf]
        %v500 = vld [vmem:[%s1 + $0x1a4] sm:$0xf]
        %v501 = vld [vmem:[%s1 + $0x1a8] sm:$0xf]
        %v502 = vld [vmem:[%s1 + $0x1ac] sm:$0xf]
        %v503 = vld [vmem:[%s1 + $0x1b0] sm:$0xf]
        %v504 = vld [vmem:[%s1 + $0x1b4] sm:$0xf]
        %v505 = vld [vmem:[%s1 + $0x1b8] sm:$0xf]
        %v506 = vld [vmem:[%s1 + $0x1bc] sm:$0xf]
        %v507 = vld [vmem:[%s1 + $0x1c0] sm:$0xf]
        %v508 = vld [vmem:[%s1 + $0x1c4] sm:$0xf]
        %v509 = vld [vmem:[%s1 + $0x1c8] sm:$0xf]
        %v510 = vld [vmem:[%s1 + $0x1cc] sm:$0xf]
        %v511 = vld [vmem:[%s1 + $0x1d0] sm:$0xf]
        %v512 = vld [vmem:[%s1 + $0x1d4] sm:$0xf]
        %v513 = vld [vmem:[%s1 + $0x1d8] sm:$0xf]
        %v514 = vld [vmem:[%s1 + $0x1dc] sm:$0xf]
        %v515 = vld [vmem:[%s1 + $0x1e0] sm:$0xf]
        %v516 = vld [vmem:[%s1 + $0x1e4] sm:$0xf]
        %v517 = vld [vmem:[%s1 + $0x1e8] sm:$0xf]
        %v518 = vld [vmem:[%s1 + $0x1ec] sm:$0xf]
        %v519 = vld [vmem:[%s1 + $0x1f0] sm:$0xf]
        %v520 = vld [vmem:[%s1 + $0x1f4] sm:$0xf]
        %v521 = vld [vmem:[%s1 + $0x1f8] sm:$0xf]
        %v522 = vld [vmem:[%s1 + $0x1fc] sm:$0xf]
        %v523 = vld [vmem:[%s1 + $0x200] sm:$0xf]
        %v524 = vld [vmem:[%s1 + $0x204] sm:$0xf]
        %v525 = vld [vmem:[%s1 + $0x208] sm:$0xf]
        %v526 = vld [vmem:[%s1 + $0x20c] sm:$0x1]
        %v537 = vunpack.c.l.b16 %v385
        %v538 = vunpack.c.h.b16 %v385
        %v539 = vunpack.c.l.b16 %v386
        %v540 = vunpack.c.h.b16 %v386
        %v541 = vunpack.c.l.b16 %v387
        %v542 = vunpack.c.h.b16 %v387
        %v543 = vunpack.c.l.b16 %v388
        %v544 = vunpack.c.h.b16 %v388
        %v545 = vunpack.c.l.b16 %v389
        %v546 = vunpack.c.l.b16 %v390
        %v547 = vunpack.c.h.b16 %v390
        %v548 = vunpack.c.l.b16 %v391
        %v549 = vunpack.c.h.b16 %v391
        %v550 = vunpack.c.l.b16 %v392
        %v551 = vunpack.c.h.b16 %v392
        %v552 = vunpack.c.l.b16 %v393
        %v553 = vunpack.c.h.b16 %v393
        %v554 = vunpack.c.l.b16 %v394
        %v555 = vpack.c.b16 %v546, %v537
        %v556 = vpack.c.b16 %v547, %v538
        %v557 = vpack.c.b16 %v548, %v539
        %v558 = vpack.c.b16 %v549, %v540
        %v559 = vpack.c.b16 %v550, %v541
        %v560 = vpack.c.b16 %v551, %v542
        %v561 = vpack.c.b16 %v552, %v543
        %v562 = vpack.c.b16 %v553, %v544
        %v563 = vpack.c.b16 %v554, %v545
        %v704 = vunpack.c.l.b16 %v395
        %v705 = vunpack.c.l.b16 %v396
        %v706 = vunpack.c.l.b16 %v397
        %v707 = vunpack.c.l.b16 %v398
        %v708 = vunpack.c.l.b16 %v399
        %v709 = vunpack.c.l.b16 %v400
        %v710 = vunpack.c.l.b16 %v401
        %v711 = vunpack.c.l.b16 %v402
        %v712 = vunpack.c.l.b16 %v403
        %v713 = vunpack.c.l.b16 %v404
        %v714 = vunpack.c.l.b16 %v405
        %v715 = vunpack.c.l.b16 %v406
        %v716 = vunpack.c.l.b16 %v407
        %v717 = vunpack.c.l.b16 %v408
        %v718 = vunpack.c.l.b16 %v409
        %v719 = vunpack.c.l.b16 %v410
        %v720 = vunpack.c.l.b16 %v411
        %v721 = vunpack.c.l.b16 %v412
        %v722 = vunpack.c.l.b16 %v413
        %v723 = vunpack.c.l.b16 %v414
        %v724 = vunpack.c.l.b16 %v415
        %v725 = vunpack.c.l.b16 %v416
        %v726 = vunpack.c.l.b16 %v417
        %v727 = vunpack.c.l.b16 %v418
        %v728 = vunpack.c.l.b16 %v419
        %v729 = vunpack.c.l.b16 %v420
        %v730 = vunpack.c.l.b16 %v421
        %v731 = vunpack.c.l.b16 %v422
        %v732 = vunpack.c.l.b16 %v423
        %v733 = vunpack.c.l.b16 %v424
        %v734 = vunpack.c.l.b16 %v425
        %v735 = vunpack.c.l.b16 %v426
        %v736 = vunpack.c.l.b16 %v427
        %v737 = vunpack.c.l.b16 %v428
        %v738 = vunpack.c.l.b16 %v429
        %v739 = vunpack.c.l.b16 %v430
        %v740 = vunpack.c.l.b16 %v431
        %v741 = vunpack.c.l.b16 %v432
        %v742 = vunpack.c.l.b16 %v433
        %v743 = vunpack.c.l.b16 %v434
        %v744 = vunpack.c.l.b16 %v435
        %v745 = vunpack.c.l.b16 %v436
        %v746 = vunpack.c.l.b16 %v437
        %v747 = vunpack.c.l.b16 %v438
        %v748 = vunpack.c.l.b16 %v439
        %v749 = vunpack.c.l.b16 %v440
        %v750 = vunpack.c.l.b16 %v441
        %v751 = vunpack.c.l.b16 %v442
        %v752 = vunpack.c.l.b16 %v443
        %v753 = vunpack.c.l.b16 %v444
        %v754 = vunpack.c.l.b16 %v445
        %v755 = vunpack.c.l.b16 %v446
        %v756 = vunpack.c.l.b16 %v447
        %v757 = vunpack.c.l.b16 %v448
        %v758 = vunpack.c.l.b16 %v449
        %v759 = vunpack.c.l.b16 %v450
        %v760 = vunpack.c.l.b16 %v451
        %v761 = vunpack.c.l.b16 %v452
        %v762 = vunpack.c.l.b16 %v453
        %v763 = vunpack.c.l.b16 %v454
        %v764 = vunpack.c.l.b16 %v455
        %v765 = vunpack.c.l.b16 %v456
        %v766 = vunpack.c.l.b16 %v457
        %v767 = vunpack.c.l.b16 %v458
        %v768 = vunpack.c.l.b16 %v459
        %v769 = vunpack.c.l.b16 %v460
        %v770 = vunpack.c.l.b16 %v461
        %v771 = vunpack.c.l.b16 %v462
        %v772 = vunpack.c.l.b16 %v463
        %v773 = vunpack.c.l.b16 %v464
        %v774 = vunpack.c.l.b16 %v465
        %v775 = vunpack.c.l.b16 %v466
        %v776 = vunpack.c.l.b16 %v467
        %v777 = vunpack.c.l.b16 %v468
        %v778 = vunpack.c.l.b16 %v469
        %v779 = vunpack.c.l.b16 %v470
        %v780 = vunpack.c.l.b16 %v471
        %v781 = vunpack.c.l.b16 %v472
        %v782 = vunpack.c.l.b16 %v473
        %v783 = vunpack.c.l.b16 %v474
        %v784 = vunpack.c.l.b16 %v475
        %v785 = vunpack.c.l.b16 %v476
        %v786 = vunpack.c.l.b16 %v477
        %v787 = vunpack.c.l.b16 %v478
        %v788 = vunpack.c.l.b16 %v479
        %v789 = vunpack.c.l.b16 %v480
        %v790 = vunpack.c.l.b16 %v481
        %v791 = vunpack.c.l.b16 %v482
        %v792 = vunpack.c.l.b16 %v483
        %v793 = vunpack.c.l.b16 %v484
        %v794 = vunpack.c.l.b16 %v485
        %v795 = vunpack.c.l.b16 %v486
        %v796 = vunpack.c.l.b16 %v487
        %v797 = vunpack.c.l.b16 %v488
        %v798 = vunpack.c.l.b16 %v489
        %v799 = vunpack.c.l.b16 %v490
        %v800 = vunpack.c.l.b16 %v491
        %v801 = vunpack.c.l.b16 %v492
        %v802 = vunpack.c.l.b16 %v493
        %v803 = vunpack.c.l.b16 %v494
        %v804 = vunpack.c.l.b16 %v495
        %v805 = vunpack.c.l.b16 %v496
        %v806 = vunpack.c.l.b16 %v497
        %v807 = vunpack.c.l.b16 %v498
        %v808 = vunpack.c.l.b16 %v499
        %v809 = vunpack.c.l.b16 %v500
        %v810 = vunpack.c.l.b16 %v501
        %v811 = vunpack.c.l.b16 %v502
        %v812 = vunpack.c.l.b16 %v503
        %v813 = vunpack.c.l.b16 %v504
        %v814 = vunpack.c.l.b16 %v505
        %v815 = vunpack.c.l.b16 %v506
        %v816 = vunpack.c.l.b16 %v507
        %v817 = vunpack.c.l.b16 %v508
        %v818 = vunpack.c.l.b16 %v509
        %v819 = vunpack.c.l.b16 %v510
        %v820 = vunpack.c.l.b16 %v511
        %v821 = vunpack.c.l.b16 %v512
        %v822 = vunpack.c.l.b16 %v513
        %v823 = vunpack.c.l.b16 %v514
        %v824 = vunpack.c.l.b16 %v515
        %v825 = vunpack.c.l.b16 %v516
        %v826 = vunpack.c.l.b16 %v517
        %v827 = vunpack.c.l.b16 %v518
        %v828 = vunpack.c.l.b16 %v519
        %v829 = vunpack.c.l.b16 %v520
        %v830 = vunpack.c.l.b16 %v521
        %v831 = vunpack.c.l.b16 %v522
        %v832 = vunpack.c.l.b16 %v523
        %v833 = vunpack.c.l.b16 %v524
        %v834 = vunpack.c.l.b16 %v525
        %v835 = vunpack.c.l.b16 %v526
        %v836 = vpack.c.b16 %v705, %v704
        %v837 = vpack.c.b16 %v707, %v706
        %v838 = vpack.c.b16 %v709, %v708
        %v839 = vpack.c.b16 %v711, %v710
        %v840 = vpack.c.b16 %v713, %v712
        %v841 = vpack.c.b16 %v715, %v714
        %v842 = vpack.c.b16 %v717, %v716
        %v843 = vpack.c.b16 %v719, %v718
        %v844 = vpack.c.b16 %v721, %v720
        %v845 = vpack.c.b16 %v723, %v722
        %v846 = vpack.c.b16 %v725, %v724
        %v847 = vpack.c.b16 %v727, %v726
        %v848 = vpack.c.b16 %v729, %v728
        %v849 = vpack.c.b16 %v731, %v730
        %v850 = vpack.c.b16 %v733, %v732
        %v851 = vpack.c.b16 %v735, %v734
        %v852 = vpack.c.b16 %v737, %v736
        %v853 = vpack.c.b16 %v739, %v738
        %v854 = vpack.c.b16 %v741, %v740
        %v855 = vpack.c.b16 %v743, %v742
        %v856 = vpack.c.b16 %v745, %v744
        %v857 = vpack.c.b16 %v747, %v746
        %v858 = vpack.c.b16 %v749, %v748
        %v859 = vpack.c.b16 %v751, %v750
        %v860 = vpack.c.b16 %v753, %v752
        %v861 = vpack.c.b16 %v755, %v754
        %v862 = vpack.c.b16 %v757, %v756
        %v863 = vpack.c.b16 %v759, %v758
        %v864 = vpack.c.b16 %v761, %v760
        %v865 = vpack.c.b16 %v763, %v762
        %v866 = vpack.c.b16 %v765, %v764
        %v867 = vpack.c.b16 %v767, %v766
        %v868 = vpack.c.b16 %v769, %v768
        %v869 = vpack.c.b16 %v771, %v770
        %v870 = vpack.c.b16 %v773, %v772
        %v871 = vpack.c.b16 %v775, %v774
        %v872 = vpack.c.b16 %v777, %v776
        %v873 = vpack.c.b16 %v779, %v778
        %v874 = vpack.c.b16 %v781, %v780
        %v875 = vpack.c.b16 %v783, %v782
        %v876 = vpack.c.b16 %v785, %v784
        %v877 = vpack.c.b16 %v787, %v786
        %v878 = vpack.c.b16 %v789, %v788
        %v879 = vpack.c.b16 %v791, %v790
        %v880 = vpack.c.b16 %v793, %v792
        %v881 = vpack.c.b16 %v795, %v794
        %v882 = vpack.c.b16 %v797, %v796
        %v883 = vpack.c.b16 %v799, %v798
        %v884 = vpack.c.b16 %v801, %v800
        %v885 = vpack.c.b16 %v803, %v802
        %v886 = vpack.c.b16 %v805, %v804
        %v887 = vpack.c.b16 %v807, %v806
        %v888 = vpack.c.b16 %v809, %v808
        %v889 = vpack.c.b16 %v811, %v810
        %v890 = vpack.c.b16 %v813, %v812
        %v891 = vpack.c.b16 %v815, %v814
        %v892 = vpack.c.b16 %v817, %v816
        %v893 = vpack.c.b16 %v819, %v818
        %v894 = vpack.c.b16 %v821, %v820
        %v895 = vpack.c.b16 %v823, %v822
        %v896 = vpack.c.b16 %v825, %v824
        %v897 = vpack.c.b16 %v827, %v826
        %v898 = vpack.c.b16 %v829, %v828
        %v899 = vpack.c.b16 %v831, %v830
        %v900 = vpack.c.b16 %v833, %v832
        %v901 = vpack.c.b16 %v835, %v834
        %vm967 = vcmask 211968
        %v969 = vsel %vm967, %v563, 0
        %vm971 = vcmask 1044480
        %v973 = vsel %vm971, %v901, 0
        %975 = vmatprep.subr.bf16.mxu0 0
        %976 = vmatpush1.bf16.msra.mxu0 %v836
        %977 = vmatprep.subr.bf16.mxu0 0
        %978 = vmatpush1.bf16.msra.mxu0 %v837
        %979 = vmatprep.subr.bf16.mxu0 0
        %980 = vmatpush1.bf16.msra.mxu0 %v838
        %981 = vmatprep.subr.bf16.mxu0 0
        %982 = vmatpush1.bf16.msra.mxu0 %v839
        %983 = vmatprep.subr.bf16.mxu0 0
        %984 = vmatpush1.bf16.msra.mxu0 %v840
        %985 = vmatprep.subr.bf16.mxu0 0
        %986 = vmatpush1.bf16.msra.mxu0 %v841
        %987 = vmatprep.subr.bf16.mxu0 0
        %988 = vmatpush1.bf16.msra.mxu0 %v842
        %989 = vmatprep.subr.bf16.mxu0 0
        %990 = vmatpush1.bf16.msra.mxu0 %v843
        %991 = vmatprep.subr.bf16.mxu0 0
        %992 = vmatpush1.bf16.msra.mxu0 %v844
        %993 = vmatprep.subr.bf16.mxu0 0
        %994 = vmatpush1.bf16.msra.mxu0 %v845
        %995 = vmatprep.subr.bf16.mxu0 0
        %996 = vmatpush1.bf16.msra.mxu0 %v846
        %997 = vmatprep.subr.bf16.mxu0 0
        %998 = vmatpush1.bf16.msra.mxu0 %v847
        %999 = vmatprep.subr.bf16.mxu0 0
        %1000 = vmatpush1.bf16.msra.mxu0 %v848
        %1001 = vmatprep.subr.bf16.mxu0 0
        %1002 = vmatpush1.bf16.msra.mxu0 %v849
        %1003 = vmatprep.subr.bf16.mxu0 0
        %1004 = vmatpush1.bf16.msra.mxu0 %v850
        %1005 = vmatprep.subr.bf16.mxu0 0
        %1006 = vmatpush1.bf16.msra.mxu0 %v851
        %1007 = vmatprep.mubr.bf16.mxu0 %v556
        %1008 = vmatmul.mubr.bf16.gmra.mrb[0].mxu0 %v555
        %v1009 = vpop.f32.mrb[0].mxu0
        %v1010 = vadd.f32 0.0, %v1009
        %v1011 = vpop.f32.mrb[0].mxu0
        %v1012 = vpop.f32.mrb[0].mxu0
        %v1013 = vadd.f32 0.0, %v1012
        %v1014 = vpop.f32.mrb[0].mxu0
        %1015 = vdwg.mxu0
        %1016 = vmatprep.subr.bf16.mxu0 0
        %1017 = vmatpush1.bf16.msra.mxu0 %v852
        %1018 = vmatprep.subr.bf16.mxu0 0
        %1019 = vmatpush1.bf16.msra.mxu0 %v853
        %1020 = vmatprep.subr.bf16.mxu0 0
        %1021 = vmatpush1.bf16.msra.mxu0 %v854
        %1022 = vmatprep.subr.bf16.mxu0 0
        %1023 = vmatpush1.bf16.msra.mxu0 %v855
        %1024 = vmatprep.subr.bf16.mxu0 0
        %1025 = vmatpush1.bf16.msra.mxu0 %v856
        %1026 = vmatprep.subr.bf16.mxu0 0
        %1027 = vmatpush1.bf16.msra.mxu0 %v857
        %1028 = vmatprep.subr.bf16.mxu0 0
        %1029 = vmatpush1.bf16.msra.mxu0 %v858
        %1030 = vmatprep.subr.bf16.mxu0 0
        %1031 = vmatpush1.bf16.msra.mxu0 %v859
        %1032 = vmatprep.subr.bf16.mxu0 0
        %1033 = vmatpush1.bf16.msra.mxu0 %v860
        %1034 = vmatprep.subr.bf16.mxu0 0
        %1035 = vmatpush1.bf16.msra.mxu0 %v861
        %1036 = vmatprep.subr.bf16.mxu0 0
        %1037 = vmatpush1.bf16.msra.mxu0 %v862
        %1038 = vmatprep.subr.bf16.mxu0 0
        %1039 = vmatpush1.bf16.msra.mxu0 %v863
        %1040 = vmatprep.subr.bf16.mxu0 0
        %1041 = vmatpush1.bf16.msra.mxu0 %v864
        %1042 = vmatprep.subr.bf16.mxu0 0
        %1043 = vmatpush1.bf16.msra.mxu0 %v865
        %1044 = vmatprep.subr.bf16.mxu0 0
        %1045 = vmatpush1.bf16.msra.mxu0 %v866
        %1046 = vmatprep.subr.bf16.mxu0 0
        %1047 = vmatpush1.bf16.msra.mxu0 %v867
        %1048 = vmatprep.mubr.bf16.mxu0 %v558
        %1049 = vmatmul.mubr.bf16.gmra.mrb[0].mxu0 %v557
        %v1050 = vpop.f32.mrb[0].mxu0
        %v1051 = vadd.f32 %v1010, %v1050
        %v1052 = vpop.f32.mrb[0].mxu0
        %v1053 = vpop.f32.mrb[0].mxu0
        %v1054 = vadd.f32 %v1013, %v1053
        %v1055 = vpop.f32.mrb[0].mxu0
        %1056 = vdwg.mxu0
        %1057 = vmatprep.subr.bf16.mxu0 0
        %1058 = vmatpush1.bf16.msra.mxu0 %v868
        %1059 = vmatprep.subr.bf16.mxu0 0
        %1060 = vmatpush1.bf16.msra.mxu0 %v869
        %1061 = vmatprep.subr.bf16.mxu0 0
        %1062 = vmatpush1.bf16.msra.mxu0 %v870
        %1063 = vmatprep.subr.bf16.mxu0 0
        %1064 = vmatpush1.bf16.msra.mxu0 %v871
        %1065 = vmatprep.subr.bf16.mxu0 0
        %1066 = vmatpush1.bf16.msra.mxu0 %v872
        %1067 = vmatprep.subr.bf16.mxu0 0
        %1068 = vmatpush1.bf16.msra.mxu0 %v873
        %1069 = vmatprep.subr.bf16.mxu0 0
        %1070 = vmatpush1.bf16.msra.mxu0 %v874
        %1071 = vmatprep.subr.bf16.mxu0 0
        %1072 = vmatpush1.bf16.msra.mxu0 %v875
        %1073 = vmatprep.subr.bf16.mxu0 0
        %1074 = vmatpush1.bf16.msra.mxu0 %v876
        %1075 = vmatprep.subr.bf16.mxu0 0
        %1076 = vmatpush1.bf16.msra.mxu0 %v877
        %1077 = vmatprep.subr.bf16.mxu0 0
        %1078 = vmatpush1.bf16.msra.mxu0 %v878
        %1079 = vmatprep.subr.bf16.mxu0 0
        %1080 = vmatpush1.bf16.msra.mxu0 %v879
        %1081 = vmatprep.subr.bf16.mxu0 0
        %1082 = vmatpush1.bf16.msra.mxu0 %v880
        %1083 = vmatprep.subr.bf16.mxu0 0
        %1084 = vmatpush1.bf16.msra.mxu0 %v881
        %1085 = vmatprep.subr.bf16.mxu0 0
        %1086 = vmatpush1.bf16.msra.mxu0 %v882
        %1087 = vmatprep.subr.bf16.mxu0 0
        %1088 = vmatpush1.bf16.msra.mxu0 %v883
        %1089 = vmatprep.mubr.bf16.mxu0 %v560
        %1090 = vmatmul.mubr.bf16.gmra.mrb[0].mxu0 %v559
        %v1091 = vpop.f32.mrb[0].mxu0
        %v1092 = vadd.f32 %v1051, %v1091
        %v1093 = vpop.f32.mrb[0].mxu0
        %v1094 = vpop.f32.mrb[0].mxu0
        %v1095 = vadd.f32 %v1054, %v1094
        %v1096 = vpop.f32.mrb[0].mxu0
        %1097 = vdwg.mxu0
        %1098 = vmatprep.subr.bf16.mxu0 0
        %1099 = vmatpush1.bf16.msra.mxu0 %v884
        %1100 = vmatprep.subr.bf16.mxu0 0
        %1101 = vmatpush1.bf16.msra.mxu0 %v885
        %1102 = vmatprep.subr.bf16.mxu0 0
        %1103 = vmatpush1.bf16.msra.mxu0 %v886
        %1104 = vmatprep.subr.bf16.mxu0 0
        %1105 = vmatpush1.bf16.msra.mxu0 %v887
        %1106 = vmatprep.subr.bf16.mxu0 0
        %1107 = vmatpush1.bf16.msra.mxu0 %v888
        %1108 = vmatprep.subr.bf16.mxu0 0
        %1109 = vmatpush1.bf16.msra.mxu0 %v889
        %1110 = vmatprep.subr.bf16.mxu0 0
        %1111 = vmatpush1.bf16.msra.mxu0 %v890
        %1112 = vmatprep.subr.bf16.mxu0 0
        %1113 = vmatpush1.bf16.msra.mxu0 %v891
        %1114 = vmatprep.subr.bf16.mxu0 0
        %1115 = vmatpush1.bf16.msra.mxu0 %v892
        %1116 = vmatprep.subr.bf16.mxu0 0
        %1117 = vmatpush1.bf16.msra.mxu0 %v893
        %1118 = vmatprep.subr.bf16.mxu0 0
        %1119 = vmatpush1.bf16.msra.mxu0 %v894
        %1120 = vmatprep.subr.bf16.mxu0 0
        %1121 = vmatpush1.bf16.msra.mxu0 %v895
        %1122 = vmatprep.subr.bf16.mxu0 0
        %1123 = vmatpush1.bf16.msra.mxu0 %v896
        %1124 = vmatprep.subr.bf16.mxu0 0
        %1125 = vmatpush1.bf16.msra.mxu0 %v897
        %1126 = vmatprep.subr.bf16.mxu0 0
        %1127 = vmatpush1.bf16.msra.mxu0 %v898
        %1128 = vmatprep.subr.bf16.mxu0 0
        %1129 = vmatpush1.bf16.msra.mxu0 %v899
        %1130 = vmatprep.mubr.bf16.mxu0 %v562
        %1131 = vmatmul.mubr.bf16.gmra.mrb[0].mxu0 %v561
        %v1132 = vpop.f32.mrb[0].mxu0
        %v1133 = vadd.f32 %v1092, %v1132
        %v1134 = vpop.f32.mrb[0].mxu0
        %v1135 = vpop.f32.mrb[0].mxu0
        %v1136 = vadd.f32 %v1095, %v1135
        %v1137 = vpop.f32.mrb[0].mxu0
        %1138 = vdwg.mxu0
        %1139 = vmatprep.subr.bf16.mxu0 0
        %1140 = vmatpush1.bf16.msra.mxu0 %v900
        %1141 = vmatprep.subr.bf16.mxu0 0
        %1142 = vmatpush1.bf16.msra.mxu0 %v973
        %1143 = vmatprep.subr.bf16.mxu0 0
        %1144 = vmatpush1.bf16.msra.mxu0 0
        %1145 = vmatprep.subr.bf16.mxu0 0
        %1146 = vmatpush1.bf16.msra.mxu0 0
        %1147 = vmatprep.subr.bf16.mxu0 0
        %1148 = vmatpush1.bf16.msra.mxu0 0
        %1149 = vmatprep.subr.bf16.mxu0 0
        %1150 = vmatpush1.bf16.msra.mxu0 0
        %1151 = vmatprep.subr.bf16.mxu0 0
        %1152 = vmatpush1.bf16.msra.mxu0 0
        %1153 = vmatprep.subr.bf16.mxu0 0
        %1154 = vmatpush1.bf16.msra.mxu0 0
        %1155 = vmatprep.subr.bf16.mxu0 0
        %1156 = vmatpush1.bf16.msra.mxu0 0
        %1157 = vmatprep.subr.bf16.mxu0 0
        %1158 = vmatpush1.bf16.msra.mxu0 0
        %1159 = vmatprep.subr.bf16.mxu0 0
        %1160 = vmatpush1.bf16.msra.mxu0 0
        %1161 = vmatprep.subr.bf16.mxu0 0
        %1162 = vmatpush1.bf16.msra.mxu0 0
        %1163 = vmatprep.subr.bf16.mxu0 0
        %1164 = vmatpush1.bf16.msra.mxu0 0
        %1165 = vmatprep.subr.bf16.mxu0 0
        %1166 = vmatpush1.bf16.msra.mxu0 0
        %1167 = vmatprep.subr.bf16.mxu0 0
        %1168 = vmatpush1.bf16.msra.mxu0 0
        %1169 = vmatprep.subr.bf16.mxu0 0
        %1170 = vmatpush1.bf16.msra.mxu0 0
        %1171 = vmatprep.mubr.bf16.mxu0 0
        %1172 = vmatmul.mubr.bf16.gmra.mrb[0].mxu0 %v969
        %v1173 = vpop.f32.mrb[0].mxu0
        %v1174 = vadd.f32 %v1133, %v1173
        %v1175 = vpop.f32.mrb[0].mxu0
        %v1176 = vpop.f32.mrb[0].mxu0
        %v1177 = vadd.f32 %v1136, %v1176
        %v1178 = vpop.f32.mrb[0].mxu0
        %1179 = vdwg.mxu0
        %s1180 = scalar_lea.vmem %s383, 72
        %v1181 = vld [vmem:[%s1180] sm:$0xff]
        %v1182 = vld [vmem:[%s1180 + $0x8] sm:$0xff]
        %v1183 = vld [vmem:[%s1180 + $0x10] sm:$0xff]
        %v1184 = vld [vmem:[%s1180 + $0x18] sm:$0xff]
        %v1185 = vld [vmem:[%s1180 + $0x20] sm:$0xf]
        %v1186 = vld [vmem:[%s1180 + $0x24] sm:$0xff]
        %v1187 = vld [vmem:[%s1180 + $0x2c] sm:$0xff]
        %v1188 = vld [vmem:[%s1180 + $0x34] sm:$0xff]
        %v1189 = vld [vmem:[%s1180 + $0x3c] sm:$0xff]
        %v1190 = vld [vmem:[%s1180 + $0x44] sm:$0xf]
        %v1201 = vunpack.c.l.b16 %v1181
        %v1202 = vunpack.c.h.b16 %v1181
        %v1203 = vunpack.c.l.b16 %v1182
        %v1204 = vunpack.c.h.b16 %v1182
        %v1205 = vunpack.c.l.b16 %v1183
        %v1206 = vunpack.c.h.b16 %v1183
        %v1207 = vunpack.c.l.b16 %v1184
        %v1208 = vunpack.c.h.b16 %v1184
        %v1209 = vunpack.c.l.b16 %v1185
        %v1210 = vunpack.c.l.b16 %v1186
        %v1211 = vunpack.c.h.b16 %v1186
        %v1212 = vunpack.c.l.b16 %v1187
        %v1213 = vunpack.c.h.b16 %v1187
        %v1214 = vunpack.c.l.b16 %v1188
        %v1215 = vunpack.c.h.b16 %v1188
        %v1216 = vunpack.c.l.b16 %v1189
        %v1217 = vunpack.c.h.b16 %v1189
        %v1218 = vunpack.c.l.b16 %v1190
        %v1219 = vpack.c.b16 %v1210, %v1201
        %v1220 = vpack.c.b16 %v1211, %v1202
        %v1221 = vpack.c.b16 %v1212, %v1203
        %v1222 = vpack.c.b16 %v1213, %v1204
        %v1223 = vpack.c.b16 %v1214, %v1205
        %v1224 = vpack.c.b16 %v1215, %v1206
        %v1225 = vpack.c.b16 %v1216, %v1207
        %v1226 = vpack.c.b16 %v1217, %v1208
        %v1227 = vpack.c.b16 %v1218, %v1209
        %v1237 = vsel %vm967, %v1227, 0
        %1239 = vmatprep.subr.bf16.mxu0 0
        %1240 = vmatpush1.bf16.msra.mxu0 %v836
        %1241 = vmatprep.subr.bf16.mxu0 0
        %1242 = vmatpush1.bf16.msra.mxu0 %v837
        %1243 = vmatprep.subr.bf16.mxu0 0
        %1244 = vmatpush1.bf16.msra.mxu0 %v838
        %1245 = vmatprep.subr.bf16.mxu0 0
        %1246 = vmatpush1.bf16.msra.mxu0 %v839
        %1247 = vmatprep.subr.bf16.mxu0 0
        %1248 = vmatpush1.bf16.msra.mxu0 %v840
        %1249 = vmatprep.subr.bf16.mxu0 0
        %1250 = vmatpush1.bf16.msra.mxu0 %v841
        %1251 = vmatprep.subr.bf16.mxu0 0
        %1252 = vmatpush1.bf16.msra.mxu0 %v842
        %1253 = vmatprep.subr.bf16.mxu0 0
        %1254 = vmatpush1.bf16.msra.mxu0 %v843
        %1255 = vmatprep.subr.bf16.mxu0 0
        %1256 = vmatpush1.bf16.msra.mxu0 %v844
        %1257 = vmatprep.subr.bf16.mxu0 0
        %1258 = vmatpush1.bf16.msra.mxu0 %v845
        %1259 = vmatprep.subr.bf16.mxu0 0
        %1260 = vmatpush1.bf16.msra.mxu0 %v846
        %1261 = vmatprep.subr.bf16.mxu0 0
        %1262 = vmatpush1.bf16.msra.mxu0 %v847
        %1263 = vmatprep.subr.bf16.mxu0 0
        %1264 = vmatpush1.bf16.msra.mxu0 %v848
        %1265 = vmatprep.subr.bf16.mxu0 0
        %1266 = vmatpush1.bf16.msra.mxu0 %v849
        %1267 = vmatprep.subr.bf16.mxu0 0
        %1268 = vmatpush1.bf16.msra.mxu0 %v850
        %1269 = vmatprep.subr.bf16.mxu0 0
        %1270 = vmatpush1.bf16.msra.mxu0 %v851
        %1271 = vmatprep.mubr.bf16.mxu0 %v1220
        %1272 = vmatmul.mubr.bf16.gmra.mrb[0].mxu0 %v1219
        %v1273 = vpop.f32.mrb[0].mxu0
        %v1274 = vadd.f32 0.0, %v1273
        %v1275 = vpop.f32.mrb[0].mxu0
        %v1276 = vpop.f32.mrb[0].mxu0
        %v1277 = vadd.f32 0.0, %v1276
        %v1278 = vpop.f32.mrb[0].mxu0
        %1279 = vdwg.mxu0
        %1280 = vmatprep.subr.bf16.mxu0 0
        %1281 = vmatpush1.bf16.msra.mxu0 %v852
        %1282 = vmatprep.subr.bf16.mxu0 0
        %1283 = vmatpush1.bf16.msra.mxu0 %v853
        %1284 = vmatprep.subr.bf16.mxu0 0
        %1285 = vmatpush1.bf16.msra.mxu0 %v854
        %1286 = vmatprep.subr.bf16.mxu0 0
        %1287 = vmatpush1.bf16.msra.mxu0 %v855
        %1288 = vmatprep.subr.bf16.mxu0 0
        %1289 = vmatpush1.bf16.msra.mxu0 %v856
        %1290 = vmatprep.subr.bf16.mxu0 0
        %1291 = vmatpush1.bf16.msra.mxu0 %v857
        %1292 = vmatprep.subr.bf16.mxu0 0
        %1293 = vmatpush1.bf16.msra.mxu0 %v858
        %1294 = vmatprep.subr.bf16.mxu0 0
        %1295 = vmatpush1.bf16.msra.mxu0 %v859
        %1296 = vmatprep.subr.bf16.mxu0 0
        %1297 = vmatpush1.bf16.msra.mxu0 %v860
        %1298 = vmatprep.subr.bf16.mxu0 0
        %1299 = vmatpush1.bf16.msra.mxu0 %v861
        %1300 = vmatprep.subr.bf16.mxu0 0
        %1301 = vmatpush1.bf16.msra.mxu0 %v862
        %1302 = vmatprep.subr.bf16.mxu0 0
        %1303 = vmatpush1.bf16.msra.mxu0 %v863
        %1304 = vmatprep.subr.bf16.mxu0 0
        %1305 = vmatpush1.bf16.msra.mxu0 %v864
        %1306 = vmatprep.subr.bf16.mxu0 0
        %1307 = vmatpush1.bf16.msra.mxu0 %v865
        %1308 = vmatprep.subr.bf16.mxu0 0
        %1309 = vmatpush1.bf16.msra.mxu0 %v866
        %1310 = vmatprep.subr.bf16.mxu0 0
        %1311 = vmatpush1.bf16.msra.mxu0 %v867
        %1312 = vmatprep.mubr.bf16.mxu0 %v1222
        %1313 = vmatmul.mubr.bf16.gmra.mrb[0].mxu0 %v1221
        %v1314 = vpop.f32.mrb[0].mxu0
        %v1315 = vadd.f32 %v1274, %v1314
        %v1316 = vpop.f32.mrb[0].mxu0
        %v1317 = vpop.f32.mrb[0].mxu0
        %v1318 = vadd.f32 %v1277, %v1317
        %v1319 = vpop.f32.mrb[0].mxu0
        %1320 = vdwg.mxu0
        %1321 = vmatprep.subr.bf16.mxu0 0
        %1322 = vmatpush1.bf16.msra.mxu0 %v868
        %1323 = vmatprep.subr.bf16.mxu0 0
        %1324 = vmatpush1.bf16.msra.mxu0 %v869
        %1325 = vmatprep.subr.bf16.mxu0 0
        %1326 = vmatpush1.bf16.msra.mxu0 %v870
        %1327 = vmatprep.subr.bf16.mxu0 0
        %1328 = vmatpush1.bf16.msra.mxu0 %v871
        %1329 = vmatprep.subr.bf16.mxu0 0
        %1330 = vmatpush1.bf16.msra.mxu0 %v872
        %1331 = vmatprep.subr.bf16.mxu0 0
        %1332 = vmatpush1.bf16.msra.mxu0 %v873
        %1333 = vmatprep.subr.bf16.mxu0 0
        %1334 = vmatpush1.bf16.msra.mxu0 %v874
        %1335 = vmatprep.subr.bf16.mxu0 0
        %1336 = vmatpush1.bf16.msra.mxu0 %v875
        %1337 = vmatprep.subr.bf16.mxu0 0
        %1338 = vmatpush1.bf16.msra.mxu0 %v876
        %1339 = vmatprep.subr.bf16.mxu0 0
        %1340 = vmatpush1.bf16.msra.mxu0 %v877
        %1341 = vmatprep.subr.bf16.mxu0 0
        %1342 = vmatpush1.bf16.msra.mxu0 %v878
        %1343 = vmatprep.subr.bf16.mxu0 0
        %1344 = vmatpush1.bf16.msra.mxu0 %v879
        %1345 = vmatprep.subr.bf16.mxu0 0
        %1346 = vmatpush1.bf16.msra.mxu0 %v880
        %1347 = vmatprep.subr.bf16.mxu0 0
        %1348 = vmatpush1.bf16.msra.mxu0 %v881
        %1349 = vmatprep.subr.bf16.mxu0 0
        %1350 = vmatpush1.bf16.msra.mxu0 %v882
        %1351 = vmatprep.subr.bf16.mxu0 0
        %1352 = vmatpush1.bf16.msra.mxu0 %v883
        %1353 = vmatprep.mubr.bf16.mxu0 %v1224
        %1354 = vmatmul.mubr.bf16.gmra.mrb[0].mxu0 %v1223
        %v1355 = vpop.f32.mrb[0].mxu0
        %v1356 = vadd.f32 %v1315, %v1355
        %v1357 = vpop.f32.mrb[0].mxu0
        %v1358 = vpop.f32.mrb[0].mxu0
        %v1359 = vadd.f32 %v1318, %v1358
        %v1360 = vpop.f32.mrb[0].mxu0
        %1361 = vdwg.mxu0
        %1362 = vmatprep.subr.bf16.mxu0 0
        %1363 = vmatpush1.bf16.msra.mxu0 %v884
        %1364 = vmatprep.subr.bf16.mxu0 0
        %1365 = vmatpush1.bf16.msra.mxu0 %v885
        %1366 = vmatprep.subr.bf16.mxu0 0
        %1367 = vmatpush1.bf16.msra.mxu0 %v886
        %1368 = vmatprep.subr.bf16.mxu0 0
        %1369 = vmatpush1.bf16.msra.mxu0 %v887
        %1370 = vmatprep.subr.bf16.mxu0 0
        %1371 = vmatpush1.bf16.msra.mxu0 %v888
        %1372 = vmatprep.subr.bf16.mxu0 0
        %1373 = vmatpush1.bf16.msra.mxu0 %v889
        %1374 = vmatprep.subr.bf16.mxu0 0
        %1375 = vmatpush1.bf16.msra.mxu0 %v890
        %1376 = vmatprep.subr.bf16.mxu0 0
        %1377 = vmatpush1.bf16.msra.mxu0 %v891
        %1378 = vmatprep.subr.bf16.mxu0 0
        %1379 = vmatpush1.bf16.msra.mxu0 %v892
        %1380 = vmatprep.subr.bf16.mxu0 0
        %1381 = vmatpush1.bf16.msra.mxu0 %v893
        %1382 = vmatprep.subr.bf16.mxu0 0
        %1383 = vmatpush1.bf16.msra.mxu0 %v894
        %1384 = vmatprep.subr.bf16.mxu0 0
        %1385 = vmatpush1.bf16.msra.mxu0 %v895
        %1386 = vmatprep.subr.bf16.mxu0 0
        %1387 = vmatpush1.bf16.msra.mxu0 %v896
        %1388 = vmatprep.subr.bf16.mxu0 0
        %1389 = vmatpush1.bf16.msra.mxu0 %v897
        %1390 = vmatprep.subr.bf16.mxu0 0
        %1391 = vmatpush1.bf16.msra.mxu0 %v898
        %1392 = vmatprep.subr.bf16.mxu0 0
        %1393 = vmatpush1.bf16.msra.mxu0 %v899
        %1394 = vmatprep.mubr.bf16.mxu0 %v1226
        %1395 = vmatmul.mubr.bf16.gmra.mrb[0].mxu0 %v1225
        %v1396 = vpop.f32.mrb[0].mxu0
        %v1397 = vadd.f32 %v1356, %v1396
        %v1398 = vpop.f32.mrb[0].mxu0
        %v1399 = vpop.f32.mrb[0].mxu0
        %v1400 = vadd.f32 %v1359, %v1399
        %v1401 = vpop.f32.mrb[0].mxu0
        %1402 = vdwg.mxu0
        %1403 = vmatprep.subr.bf16.mxu0 0
        %1404 = vmatpush1.bf16.msra.mxu0 %v900
        %1405 = vmatprep.subr.bf16.mxu0 0
        %1406 = vmatpush1.bf16.msra.mxu0 %v973
        %1407 = vmatprep.subr.bf16.mxu0 0
        %1408 = vmatpush1.bf16.msra.mxu0 0
        %1409 = vmatprep.subr.bf16.mxu0 0
        %1410 = vmatpush1.bf16.msra.mxu0 0
        %1411 = vmatprep.subr.bf16.mxu0 0
        %1412 = vmatpush1.bf16.msra.mxu0 0
        %1413 = vmatprep.subr.bf16.mxu0 0
        %1414 = vmatpush1.bf16.msra.mxu0 0
        %1415 = vmatprep.subr.bf16.mxu0 0
        %1416 = vmatpush1.bf16.msra.mxu0 0
        %1417 = vmatprep.subr.bf16.mxu0 0
        %1418 = vmatpush1.bf16.msra.mxu0 0
        %1419 = vmatprep.subr.bf16.mxu0 0
        %1420 = vmatpush1.bf16.msra.mxu0 0
        %1421 = vmatprep.subr.bf16.mxu0 0
        %1422 = vmatpush1.bf16.msra.mxu0 0
        %1423 = vmatprep.subr.bf16.mxu0 0
        %1424 = vmatpush1.bf16.msra.mxu0 0
        %1425 = vmatprep.subr.bf16.mxu0 0
        %1426 = vmatpush1.bf16.msra.mxu0 0
        %1427 = vmatprep.subr.bf16.mxu0 0
        %1428 = vmatpush1.bf16.msra.mxu0 0
        %1429 = vmatprep.subr.bf16.mxu0 0
        %1430 = vmatpush1.bf16.msra.mxu0 0
        %1431 = vmatprep.subr.bf16.mxu0 0
        %1432 = vmatpush1.bf16.msra.mxu0 0
        %1433 = vmatprep.subr.bf16.mxu0 0
        %1434 = vmatpush1.bf16.msra.mxu0 0
        %1435 = vmatprep.mubr.bf16.mxu0 0
        %1436 = vmatmul.mubr.bf16.gmra.mrb[0].mxu0 %v1237
        %v1437 = vpop.f32.mrb[0].mxu0
        %v1438 = vadd.f32 %v1397, %v1437
        %v1439 = vpop.f32.mrb[0].mxu0
        %v1440 = vpop.f32.mrb[0].mxu0
        %v1441 = vadd.f32 %v1400, %v1440
        %v1442 = vpop.f32.mrb[0].mxu0
        %1443 = vdwg.mxu0
        %v1444 = vmax.f32 %v1174, %v1438
        %v1445 = vmax.f32 %v1177, %v1441
        %s1446 = scalar_lea.vmem %s383, 144
        %v1447 = vld [vmem:[%s1446] sm:$0xff]
        %v1448 = vld [vmem:[%s1446 + $0x8] sm:$0xff]
        %v1449 = vld [vmem:[%s1446 + $0x10] sm:$0xff]
        %v1450 = vld [vmem:[%s1446 + $0x18] sm:$0xff]
        %v1451 = vld [vmem:[%s1446 + $0x20] sm:$0xf]
        %v1452 = vld [vmem:[%s1446 + $0x24] sm:$0xff]
        %v1453 = vld [vmem:[%s1446 + $0x2c] sm:$0xff]
        %v1454 = vld [vmem:[%s1446 + $0x34] sm:$0xff]
        %v1455 = vld [vmem:[%s1446 + $0x3c] sm:$0xff]
        %v1456 = vld [vmem:[%s1446 + $0x44] sm:$0xf]
        %v1467 = vunpack.c.l.b16 %v1447
        %v1468 = vunpack.c.h.b16 %v1447
        %v1469 = vunpack.c.l.b16 %v1448
        %v1470 = vunpack.c.h.b16 %v1448
        %v1471 = vunpack.c.l.b16 %v1449
        %v1472 = vunpack.c.h.b16 %v1449
        %v1473 = vunpack.c.l.b16 %v1450
        %v1474 = vunpack.c.h.b16 %v1450
        %v1475 = vunpack.c.l.b16 %v1451
        %v1476 = vunpack.c.l.b16 %v1452
        %v1477 = vunpack.c.h.b16 %v1452
        %v1478 = vunpack.c.l.b16 %v1453
        %v1479 = vunpack.c.h.b16 %v1453
        %v1480 = vunpack.c.l.b16 %v1454
        %v1481 = vunpack.c.h.b16 %v1454
        %v1482 = vunpack.c.l.b16 %v1455
        %v1483 = vunpack.c.h.b16 %v1455
        %v1484 = vunpack.c.l.b16 %v1456
        %v1485 = vpack.c.b16 %v1476, %v1467
        %v1486 = vpack.c.b16 %v1477, %v1468
        %v1487 = vpack.c.b16 %v1478, %v1469
        %v1488 = vpack.c.b16 %v1479, %v1470
        %v1489 = vpack.c.b16 %v1480, %v1471
        %v1490 = vpack.c.b16 %v1481, %v1472
        %v1491 = vpack.c.b16 %v1482, %v1473
        %v1492 = vpack.c.b16 %v1483, %v1474
        %v1493 = vpack.c.b16 %v1484, %v1475
        %v1503 = vsel %vm967, %v1493, 0
        %1505 = vmatprep.subr.bf16.mxu0 0
        %1506 = vmatpush1.bf16.msra.mxu0 %v836
        %1507 = vmatprep.subr.bf16.mxu0 0
        %1508 = vmatpush1.bf16.msra.mxu0 %v837
        %1509 = vmatprep.subr.bf16.mxu0 0
        %1510 = vmatpush1.bf16.msra.mxu0 %v838
        %1511 = vmatprep.subr.bf16.mxu0 0
        %1512 = vmatpush1.bf16.msra.mxu0 %v839
        %1513 = vmatprep.subr.bf16.mxu0 0
        %1514 = vmatpush1.bf16.msra.mxu0 %v840
        %1515 = vmatprep.subr.bf16.mxu0 0
        %1516 = vmatpush1.bf16.msra.mxu0 %v841
        %1517 = vmatprep.subr.bf16.mxu0 0
        %1518 = vmatpush1.bf16.msra.mxu0 %v842
        %1519 = vmatprep.subr.bf16.mxu0 0
        %1520 = vmatpush1.bf16.msra.mxu0 %v843
        %1521 = vmatprep.subr.bf16.mxu0 0
        %1522 = vmatpush1.bf16.msra.mxu0 %v844
        %1523 = vmatprep.subr.bf16.mxu0 0
        %1524 = vmatpush1.bf16.msra.mxu0 %v845
        %1525 = vmatprep.subr.bf16.mxu0 0
        %1526 = vmatpush1.bf16.msra.mxu0 %v846
        %1527 = vmatprep.subr.bf16.mxu0 0
        %1528 = vmatpush1.bf16.msra.mxu0 %v847
        %1529 = vmatprep.subr.bf16.mxu0 0
        %1530 = vmatpush1.bf16.msra.mxu0 %v848
        %1531 = vmatprep.subr.bf16.mxu0 0
        %1532 = vmatpush1.bf16.msra.mxu0 %v849
        %1533 = vmatprep.subr.bf16.mxu0 0
        %1534 = vmatpush1.bf16.msra.mxu0 %v850
        %1535 = vmatprep.subr.bf16.mxu0 0
        %1536 = vmatpush1.bf16.msra.mxu0 %v851
        %1537 = vmatprep.mubr.bf16.mxu0 %v1486
        %1538 = vmatmul.mubr.bf16.gmra.mrb[0].mxu0 %v1485
        %v1539 = vpop.f32.mrb[0].mxu0
        %v1540 = vadd.f32 0.0, %v1539
        %v1541 = vpop.f32.mrb[0].mxu0
        %v1542 = vpop.f32.mrb[0].mxu0
        %v1543 = vadd.f32 0.0, %v1542
        %v1544 = vpop.f32.mrb[0].mxu0
        %1545 = vdwg.mxu0
        %1546 = vmatprep.subr.bf16.mxu0 0
        %1547 = vmatpush1.bf16.msra.mxu0 %v852
        %1548 = vmatprep.subr.bf16.mxu0 0
        %1549 = vmatpush1.bf16.msra.mxu0 %v853
        %1550 = vmatprep.subr.bf16.mxu0 0
        %1551 = vmatpush1.bf16.msra.mxu0 %v854
        %1552 = vmatprep.subr.bf16.mxu0 0
        %1553 = vmatpush1.bf16.msra.mxu0 %v855
        %1554 = vmatprep.subr.bf16.mxu0 0
        %1555 = vmatpush1.bf16.msra.mxu0 %v856
        %1556 = vmatprep.subr.bf16.mxu0 0
        %1557 = vmatpush1.bf16.msra.mxu0 %v857
        %1558 = vmatprep.subr.bf16.mxu0 0
        %1559 = vmatpush1.bf16.msra.mxu0 %v858
        %1560 = vmatprep.subr.bf16.mxu0 0
        %1561 = vmatpush1.bf16.msra.mxu0 %v859
        %1562 = vmatprep.subr.bf16.mxu0 0
        %1563 = vmatpush1.bf16.msra.mxu0 %v860
        %1564 = vmatprep.subr.bf16.mxu0 0
        %1565 = vmatpush1.bf16.msra.mxu0 %v861
        %1566 = vmatprep.subr.bf16.mxu0 0
        %1567 = vmatpush1.bf16.msra.mxu0 %v862
        %1568 = vmatprep.subr.bf16.mxu0 0
        %1569 = vmatpush1.bf16.msra.mxu0 %v863
        %1570 = vmatprep.subr.bf16.mxu0 0
        %1571 = vmatpush1.bf16.msra.mxu0 %v864
        %1572 = vmatprep.subr.bf16.mxu0 0
        %1573 = vmatpush1.bf16.msra.mxu0 %v865
        %1574 = vmatprep.subr.bf16.mxu0 0
        %1575 = vmatpush1.bf16.msra.mxu0 %v866
        %1576 = vmatprep.subr.bf16.mxu0 0
        %1577 = vmatpush1.bf16.msra.mxu0 %v867
        %1578 = vmatprep.mubr.bf16.mxu0 %v1488
        %1579 = vmatmul.mubr.bf16.gmra.mrb[0].mxu0 %v1487
        %v1580 = vpop.f32.mrb[0].mxu0
        %v1581 = vadd.f32 %v1540, %v1580
        %v1582 = vpop.f32.mrb[0].mxu0
        %v1583 = vpop.f32.mrb[0].mxu0
        %v1584 = vadd.f32 %v1543, %v1583
        %v1585 = vpop.f32.mrb[0].mxu0
        %1586 = vdwg.mxu0
        %1587 = vmatprep.subr.bf16.mxu0 0
        %1588 = vmatpush1.bf16.msra.mxu0 %v868
        %1589 = vmatprep.subr.bf16.mxu0 0
        %1590 = vmatpush1.bf16.msra.mxu0 %v869
        %1591 = vmatprep.subr.bf16.mxu0 0
        %1592 = vmatpush1.bf16.msra.mxu0 %v870
        %1593 = vmatprep.subr.bf16.mxu0 0
        %1594 = vmatpush1.bf16.msra.mxu0 %v871
        %1595 = vmatprep.subr.bf16.mxu0 0
        %1596 = vmatpush1.bf16.msra.mxu0 %v872
        %1597 = vmatprep.subr.bf16.mxu0 0
        %1598 = vmatpush1.bf16.msra.mxu0 %v873
        %1599 = vmatprep.subr.bf16.mxu0 0
        %1600 = vmatpush1.bf16.msra.mxu0 %v874
        %1601 = vmatprep.subr.bf16.mxu0 0
        %1602 = vmatpush1.bf16.msra.mxu0 %v875
        %1603 = vmatprep.subr.bf16.mxu0 0
        %1604 = vmatpush1.bf16.msra.mxu0 %v876
        %1605 = vmatprep.subr.bf16.mxu0 0
        %1606 = vmatpush1.bf16.msra.mxu0 %v877
        %1607 = vmatprep.subr.bf16.mxu0 0
        %1608 = vmatpush1.bf16.msra.mxu0 %v878
        %1609 = vmatprep.subr.bf16.mxu0 0
        %1610 = vmatpush1.bf16.msra.mxu0 %v879
        %1611 = vmatprep.subr.bf16.mxu0 0
        %1612 = vmatpush1.bf16.msra.mxu0 %v880
        %1613 = vmatprep.subr.bf16.mxu0 0
        %1614 = vmatpush1.bf16.msra.mxu0 %v881
        %1615 = vmatprep.subr.bf16.mxu0 0
        %1616 = vmatpush1.bf16.msra.mxu0 %v882
        %1617 = vmatprep.subr.bf16.mxu0 0
        %1618 = vmatpush1.bf16.msra.mxu0 %v883
        %1619 = vmatprep.mubr.bf16.mxu0 %v1490
        %1620 = vmatmul.mubr.bf16.gmra.mrb[0].mxu0 %v1489
        %v1621 = vpop.f32.mrb[0].mxu0
        %v1622 = vadd.f32 %v1581, %v1621
        %v1623 = vpop.f32.mrb[0].mxu0
        %v1624 = vpop.f32.mrb[0].mxu0
        %v1625 = vadd.f32 %v1584, %v1624
        %v1626 = vpop.f32.mrb[0].mxu0
        %1627 = vdwg.mxu0
        %1628 = vmatprep.subr.bf16.mxu0 0
        %1629 = vmatpush1.bf16.msra.mxu0 %v884
        %1630 = vmatprep.subr.bf16.mxu0 0
        %1631 = vmatpush1.bf16.msra.mxu0 %v885
        %1632 = vmatprep.subr.bf16.mxu0 0
        %1633 = vmatpush1.bf16.msra.mxu0 %v886
        %1634 = vmatprep.subr.bf16.mxu0 0
        %1635 = vmatpush1.bf16.msra.mxu0 %v887
        %1636 = vmatprep.subr.bf16.mxu0 0
        %1637 = vmatpush1.bf16.msra.mxu0 %v888
        %1638 = vmatprep.subr.bf16.mxu0 0
        %1639 = vmatpush1.bf16.msra.mxu0 %v889
        %1640 = vmatprep.subr.bf16.mxu0 0
        %1641 = vmatpush1.bf16.msra.mxu0 %v890
        %1642 = vmatprep.subr.bf16.mxu0 0
        %1643 = vmatpush1.bf16.msra.mxu0 %v891
        %1644 = vmatprep.subr.bf16.mxu0 0
        %1645 = vmatpush1.bf16.msra.mxu0 %v892
        %1646 = vmatprep.subr.bf16.mxu0 0
        %1647 = vmatpush1.bf16.msra.mxu0 %v893
        %1648 = vmatprep.subr.bf16.mxu0 0
        %1649 = vmatpush1.bf16.msra.mxu0 %v894
        %1650 = vmatprep.subr.bf16.mxu0 0
        %1651 = vmatpush1.bf16.msra.mxu0 %v895
        %1652 = vmatprep.subr.bf16.mxu0 0
        %1653 = vmatpush1.bf16.msra.mxu0 %v896
        %1654 = vmatprep.subr.bf16.mxu0 0
        %1655 = vmatpush1.bf16.msra.mxu0 %v897
        %1656 = vmatprep.subr.bf16.mxu0 0
        %1657 = vmatpush1.bf16.msra.mxu0 %v898
        %1658 = vmatprep.subr.bf16.mxu0 0
        %1659 = vmatpush1.bf16.msra.mxu0 %v899
        %1660 = vmatprep.mubr.bf16.mxu0 %v1492
        %1661 = vmatmul.mubr.bf16.gmra.mrb[0].mxu0 %v1491
        %v1662 = vpop.f32.mrb[0].mxu0
        %v1663 = vadd.f32 %v1622, %v1662
        %v1664 = vpop.f32.mrb[0].mxu0
        %v1665 = vpop.f32.mrb[0].mxu0
        %v1666 = vadd.f32 %v1625, %v1665
        %v1667 = vpop.f32.mrb[0].mxu0
        %1668 = vdwg.mxu0
        %1669 = vmatprep.subr.bf16.mxu0 0
        %1670 = vmatpush1.bf16.msra.mxu0 %v900
        %1671 = vmatprep.subr.bf16.mxu0 0
        %1672 = vmatpush1.bf16.msra.mxu0 %v973
        %1673 = vmatprep.subr.bf16.mxu0 0
        %1674 = vmatpush1.bf16.msra.mxu0 0
        %1675 = vmatprep.subr.bf16.mxu0 0
        %1676 = vmatpush1.bf16.msra.mxu0 0
        %1677 = vmatprep.subr.bf16.mxu0 0
        %1678 = vmatpush1.bf16.msra.mxu0 0
        %1679 = vmatprep.subr.bf16.mxu0 0
        %1680 = vmatpush1.bf16.msra.mxu0 0
        %1681 = vmatprep.subr.bf16.mxu0 0
        %1682 = vmatpush1.bf16.msra.mxu0 0
        %1683 = vmatprep.subr.bf16.mxu0 0
        %1684 = vmatpush1.bf16.msra.mxu0 0
        %1685 = vmatprep.subr.bf16.mxu0 0
        %1686 = vmatpush1.bf16.msra.mxu0 0
        %1687 = vmatprep.subr.bf16.mxu0 0
        %1688 = vmatpush1.bf16.msra.mxu0 0
        %1689 = vmatprep.subr.bf16.mxu0 0
        %1690 = vmatpush1.bf16.msra.mxu0 0
        %1691 = vmatprep.subr.bf16.mxu0 0
        %1692 = vmatpush1.bf16.msra.mxu0 0
        %1693 = vmatprep.subr.bf16.mxu0 0
        %1694 = vmatpush1.bf16.msra.mxu0 0
        %1695 = vmatprep.subr.bf16.mxu0 0
        %1696 = vmatpush1.bf16.msra.mxu0 0
        %1697 = vmatprep.subr.bf16.mxu0 0
        %1698 = vmatpush1.bf16.msra.mxu0 0
        %1699 = vmatprep.subr.bf16.mxu0 0
        %1700 = vmatpush1.bf16.msra.mxu0 0
        %1701 = vmatprep.mubr.bf16.mxu0 0
        %1702 = vmatmul.mubr.bf16.gmra.mrb[0].mxu0 %v1503
        %v1703 = vpop.f32.mrb[0].mxu0
        %v1704 = vadd.f32 %v1663, %v1703
        %v1705 = vpop.f32.mrb[0].mxu0
        %v1706 = vpop.f32.mrb[0].mxu0
        %v1707 = vadd.f32 %v1666, %v1706
        %v1708 = vpop.f32.mrb[0].mxu0
        %1709 = vdwg.mxu0
        %v1710 = vmax.f32 %v1444, %v1704
        %v1711 = vmax.f32 %v1445, %v1707
        %s1712 = scalar_lea.vmem %s383, 216
        %v1713 = vld [vmem:[%s1712] sm:$0xff]
        %v1714 = vld [vmem:[%s1712 + $0x8] sm:$0xff]
        %v1715 = vld [vmem:[%s1712 + $0x10] sm:$0xff]
        %v1716 = vld [vmem:[%s1712 + $0x18] sm:$0xff]
        %v1717 = vld [vmem:[%s1712 + $0x20] sm:$0xf]
        %v1718 = vld [vmem:[%s1712 + $0x24] sm:$0xff]
        %v1719 = vld [vmem:[%s1712 + $0x2c] sm:$0xff]
        %v1720 = vld [vmem:[%s1712 + $0x34] sm:$0xff]
        %v1721 = vld [vmem:[%s1712 + $0x3c] sm:$0xff]
        %v1722 = vld [vmem:[%s1712 + $0x44] sm:$0xf]
        %v1733 = vunpack.c.l.b16 %v1713
        %v1734 = vunpack.c.h.b16 %v1713
        %v1735 = vunpack.c.l.b16 %v1714
        %v1736 = vunpack.c.h.b16 %v1714
        %v1737 = vunpack.c.l.b16 %v1715
        %v1738 = vunpack.c.h.b16 %v1715
        %v1739 = vunpack.c.l.b16 %v1716
        %v1740 = vunpack.c.h.b16 %v1716
        %v1741 = vunpack.c.l.b16 %v1717
        %v1742 = vunpack.c.l.b16 %v1718
        %v1743 = vunpack.c.h.b16 %v1718
        %v1744 = vunpack.c.l.b16 %v1719
        %v1745 = vunpack.c.h.b16 %v1719
        %v1746 = vunpack.c.l.b16 %v1720
        %v1747 = vunpack.c.h.b16 %v1720
        %v1748 = vunpack.c.l.b16 %v1721
        %v1749 = vunpack.c.h.b16 %v1721
        %v1750 = vunpack.c.l.b16 %v1722
        %v1751 = vpack.c.b16 %v1742, %v1733
        %v1752 = vpack.c.b16 %v1743, %v1734
        %v1753 = vpack.c.b16 %v1744, %v1735
        %v1754 = vpack.c.b16 %v1745, %v1736
        %v1755 = vpack.c.b16 %v1746, %v1737
        %v1756 = vpack.c.b16 %v1747, %v1738
        %v1757 = vpack.c.b16 %v1748, %v1739
        %v1758 = vpack.c.b16 %v1749, %v1740
        %v1759 = vpack.c.b16 %v1750, %v1741
        %v1769 = vsel %vm967, %v1759, 0
        %1771 = vmatprep.subr.bf16.mxu0 0
        %1772 = vmatpush1.bf16.msra.mxu0 %v836
        %1773 = vmatprep.subr.bf16.mxu0 0
        %1774 = vmatpush1.bf16.msra.mxu0 %v837
        %1775 = vmatprep.subr.bf16.mxu0 0
        %1776 = vmatpush1.bf16.msra.mxu0 %v838
        %1777 = vmatprep.subr.bf16.mxu0 0
        %1778 = vmatpush1.bf16.msra.mxu0 %v839
        %1779 = vmatprep.subr.bf16.mxu0 0
        %1780 = vmatpush1.bf16.msra.mxu0 %v840
        %1781 = vmatprep.subr.bf16.mxu0 0
        %1782 = vmatpush1.bf16.msra.mxu0 %v841
        %1783 = vmatprep.subr.bf16.mxu0 0
        %1784 = vmatpush1.bf16.msra.mxu0 %v842
        %1785 = vmatprep.subr.bf16.mxu0 0
        %1786 = vmatpush1.bf16.msra.mxu0 %v843
        %1787 = vmatprep.subr.bf16.mxu0 0
        %1788 = vmatpush1.bf16.msra.mxu0 %v844
        %1789 = vmatprep.subr.bf16.mxu0 0
        %1790 = vmatpush1.bf16.msra.mxu0 %v845
        %1791 = vmatprep.subr.bf16.mxu0 0
        %1792 = vmatpush1.bf16.msra.mxu0 %v846
        %1793 = vmatprep.subr.bf16.mxu0 0
        %1794 = vmatpush1.bf16.msra.mxu0 %v847
        %1795 = vmatprep.subr.bf16.mxu0 0
        %1796 = vmatpush1.bf16.msra.mxu0 %v848
        %1797 = vmatprep.subr.bf16.mxu0 0
        %1798 = vmatpush1.bf16.msra.mxu0 %v849
        %1799 = vmatprep.subr.bf16.mxu0 0
        %1800 = vmatpush1.bf16.msra.mxu0 %v850
        %1801 = vmatprep.subr.bf16.mxu0 0
        %1802 = vmatpush1.bf16.msra.mxu0 %v851
        %1803 = vmatprep.mubr.bf16.mxu0 %v1752
        %1804 = vmatmul.mubr.bf16.gmra.mrb[0].mxu0 %v1751
        %v1805 = vpop.f32.mrb[0].mxu0
        %v1806 = vadd.f32 0.0, %v1805
        %v1807 = vpop.f32.mrb[0].mxu0
        %v1808 = vpop.f32.mrb[0].mxu0
        %v1809 = vadd.f32 0.0, %v1808
        %v1810 = vpop.f32.mrb[0].mxu0
        %1811 = vdwg.mxu0
        %1812 = vmatprep.subr.bf16.mxu0 0
        %1813 = vmatpush1.bf16.msra.mxu0 %v852
        %1814 = vmatprep.subr.bf16.mxu0 0
        %1815 = vmatpush1.bf16.msra.mxu0 %v853
        %1816 = vmatprep.subr.bf16.mxu0 0
        %1817 = vmatpush1.bf16.msra.mxu0 %v854
        %1818 = vmatprep.subr.bf16.mxu0 0
        %1819 = vmatpush1.bf16.msra.mxu0 %v855
        %1820 = vmatprep.subr.bf16.mxu0 0
        %1821 = vmatpush1.bf16.msra.mxu0 %v856
        %1822 = vmatprep.subr.bf16.mxu0 0
        %1823 = vmatpush1.bf16.msra.mxu0 %v857
        %1824 = vmatprep.subr.bf16.mxu0 0
        %1825 = vmatpush1.bf16.msra.mxu0 %v858
        %1826 = vmatprep.subr.bf16.mxu0 0
        %1827 = vmatpush1.bf16.msra.mxu0 %v859
        %1828 = vmatprep.subr.bf16.mxu0 0
        %1829 = vmatpush1.bf16.msra.mxu0 %v860
        %1830 = vmatprep.subr.bf16.mxu0 0
        %1831 = vmatpush1.bf16.msra.mxu0 %v861
        %1832 = vmatprep.subr.bf16.mxu0 0
        %1833 = vmatpush1.bf16.msra.mxu0 %v862
        %1834 = vmatprep.subr.bf16.mxu0 0
        %1835 = vmatpush1.bf16.msra.mxu0 %v863
        %1836 = vmatprep.subr.bf16.mxu0 0
        %1837 = vmatpush1.bf16.msra.mxu0 %v864
        %1838 = vmatprep.subr.bf16.mxu0 0
        %1839 = vmatpush1.bf16.msra.mxu0 %v865
        %1840 = vmatprep.subr.bf16.mxu0 0
        %1841 = vmatpush1.bf16.msra.mxu0 %v866
        %1842 = vmatprep.subr.bf16.mxu0 0
        %1843 = vmatpush1.bf16.msra.mxu0 %v867
        %1844 = vmatprep.mubr.bf16.mxu0 %v1754
        %1845 = vmatmul.mubr.bf16.gmra.mrb[0].mxu0 %v1753
        %v1846 = vpop.f32.mrb[0].mxu0
        %v1847 = vadd.f32 %v1806, %v1846
        %v1848 = vpop.f32.mrb[0].mxu0
        %v1849 = vpop.f32.mrb[0].mxu0
        %v1850 = vadd.f32 %v1809, %v1849
        %v1851 = vpop.f32.mrb[0].mxu0
        %1852 = vdwg.mxu0
        %1853 = vmatprep.subr.bf16.mxu0 0
        %1854 = vmatpush1.bf16.msra.mxu0 %v868
        %1855 = vmatprep.subr.bf16.mxu0 0
        %1856 = vmatpush1.bf16.msra.mxu0 %v869
        %1857 = vmatprep.subr.bf16.mxu0 0
        %1858 = vmatpush1.bf16.msra.mxu0 %v870
        %1859 = vmatprep.subr.bf16.mxu0 0
        %1860 = vmatpush1.bf16.msra.mxu0 %v871
        %1861 = vmatprep.subr.bf16.mxu0 0
        %1862 = vmatpush1.bf16.msra.mxu0 %v872
        %1863 = vmatprep.subr.bf16.mxu0 0
        %1864 = vmatpush1.bf16.msra.mxu0 %v873
        %1865 = vmatprep.subr.bf16.mxu0 0
        %1866 = vmatpush1.bf16.msra.mxu0 %v874
        %1867 = vmatprep.subr.bf16.mxu0 0
        %1868 = vmatpush1.bf16.msra.mxu0 %v875
        %1869 = vmatprep.subr.bf16.mxu0 0
        %1870 = vmatpush1.bf16.msra.mxu0 %v876
        %1871 = vmatprep.subr.bf16.mxu0 0
        %1872 = vmatpush1.bf16.msra.mxu0 %v877
        %1873 = vmatprep.subr.bf16.mxu0 0
        %1874 = vmatpush1.bf16.msra.mxu0 %v878
        %1875 = vmatprep.subr.bf16.mxu0 0
        %1876 = vmatpush1.bf16.msra.mxu0 %v879
        %1877 = vmatprep.subr.bf16.mxu0 0
        %1878 = vmatpush1.bf16.msra.mxu0 %v880
        %1879 = vmatprep.subr.bf16.mxu0 0
        %1880 = vmatpush1.bf16.msra.mxu0 %v881
        %1881 = vmatprep.subr.bf16.mxu0 0
        %1882 = vmatpush1.bf16.msra.mxu0 %v882
        %1883 = vmatprep.subr.bf16.mxu0 0
        %1884 = vmatpush1.bf16.msra.mxu0 %v883
        %1885 = vmatprep.mubr.bf16.mxu0 %v1756
        %1886 = vmatmul.mubr.bf16.gmra.mrb[0].mxu0 %v1755
        %v1887 = vpop.f32.mrb[0].mxu0
        %v1888 = vadd.f32 %v1847, %v1887
        %v1889 = vpop.f32.mrb[0].mxu0
        %v1890 = vpop.f32.mrb[0].mxu0
        %v1891 = vadd.f32 %v1850, %v1890
        %v1892 = vpop.f32.mrb[0].mxu0
        %1893 = vdwg.mxu0
        %1894 = vmatprep.subr.bf16.mxu0 0
        %1895 = vmatpush1.bf16.msra.mxu0 %v884
        %1896 = vmatprep.subr.bf16.mxu0 0
        %1897 = vmatpush1.bf16.msra.mxu0 %v885
        %1898 = vmatprep.subr.bf16.mxu0 0
        %1899 = vmatpush1.bf16.msra.mxu0 %v886
        %1900 = vmatprep.subr.bf16.mxu0 0
        %1901 = vmatpush1.bf16.msra.mxu0 %v887
        %1902 = vmatprep.subr.bf16.mxu0 0
        %1903 = vmatpush1.bf16.msra.mxu0 %v888
        %1904 = vmatprep.subr.bf16.mxu0 0
        %1905 = vmatpush1.bf16.msra.mxu0 %v889
        %1906 = vmatprep.subr.bf16.mxu0 0
        %1907 = vmatpush1.bf16.msra.mxu0 %v890
        %1908 = vmatprep.subr.bf16.mxu0 0
        %1909 = vmatpush1.bf16.msra.mxu0 %v891
        %1910 = vmatprep.subr.bf16.mxu0 0
        %1911 = vmatpush1.bf16.msra.mxu0 %v892
        %1912 = vmatprep.subr.bf16.mxu0 0
        %1913 = vmatpush1.bf16.msra.mxu0 %v893
        %1914 = vmatprep.subr.bf16.mxu0 0
        %1915 = vmatpush1.bf16.msra.mxu0 %v894
        %1916 = vmatprep.subr.bf16.mxu0 0
        %1917 = vmatpush1.bf16.msra.mxu0 %v895
        %1918 = vmatprep.subr.bf16.mxu0 0
        %1919 = vmatpush1.bf16.msra.mxu0 %v896
        %1920 = vmatprep.subr.bf16.mxu0 0
        %1921 = vmatpush1.bf16.msra.mxu0 %v897
        %1922 = vmatprep.subr.bf16.mxu0 0
        %1923 = vmatpush1.bf16.msra.mxu0 %v898
        %1924 = vmatprep.subr.bf16.mxu0 0
        %1925 = vmatpush1.bf16.msra.mxu0 %v899
        %1926 = vmatprep.mubr.bf16.mxu0 %v1758
        %1927 = vmatmul.mubr.bf16.gmra.mrb[0].mxu0 %v1757
        %v1928 = vpop.f32.mrb[0].mxu0
        %v1929 = vadd.f32 %v1888, %v1928
        %v1930 = vpop.f32.mrb[0].mxu0
        %v1931 = vpop.f32.mrb[0].mxu0
        %v1932 = vadd.f32 %v1891, %v1931
        %v1933 = vpop.f32.mrb[0].mxu0
        %1934 = vdwg.mxu0
        %1935 = vmatprep.subr.bf16.mxu0 0
        %1936 = vmatpush1.bf16.msra.mxu0 %v900
        %1937 = vmatprep.subr.bf16.mxu0 0
        %1938 = vmatpush1.bf16.msra.mxu0 %v973
        %1939 = vmatprep.subr.bf16.mxu0 0
        %1940 = vmatpush1.bf16.msra.mxu0 0
        %1941 = vmatprep.subr.bf16.mxu0 0
        %1942 = vmatpush1.bf16.msra.mxu0 0
        %1943 = vmatprep.subr.bf16.mxu0 0
        %1944 = vmatpush1.bf16.msra.mxu0 0
        %1945 = vmatprep.subr.bf16.mxu0 0
        %1946 = vmatpush1.bf16.msra.mxu0 0
        %1947 = vmatprep.subr.bf16.mxu0 0
        %1948 = vmatpush1.bf16.msra.mxu0 0
        %1949 = vmatprep.subr.bf16.mxu0 0
        %1950 = vmatpush1.bf16.msra.mxu0 0
        %1951 = vmatprep.subr.bf16.mxu0 0
        %1952 = vmatpush1.bf16.msra.mxu0 0
        %1953 = vmatprep.subr.bf16.mxu0 0
        %1954 = vmatpush1.bf16.msra.mxu0 0
        %1955 = vmatprep.subr.bf16.mxu0 0
        %1956 = vmatpush1.bf16.msra.mxu0 0
        %1957 = vmatprep.subr.bf16.mxu0 0
        %1958 = vmatpush1.bf16.msra.mxu0 0
        %1959 = vmatprep.subr.bf16.mxu0 0
        %1960 = vmatpush1.bf16.msra.mxu0 0
        %1961 = vmatprep.subr.bf16.mxu0 0
        %1962 = vmatpush1.bf16.msra.mxu0 0
        %1963 = vmatprep.subr.bf16.mxu0 0
        %1964 = vmatpush1.bf16.msra.mxu0 0
        %1965 = vmatprep.subr.bf16.mxu0 0
        %1966 = vmatpush1.bf16.msra.mxu0 0
        %1967 = vmatprep.mubr.bf16.mxu0 0
        %1968 = vmatmul.mubr.bf16.gmra.mrb[0].mxu0 %v1769
        %v1969 = vpop.f32.mrb[0].mxu0
        %v1970 = vadd.f32 %v1929, %v1969
        %v1971 = vpop.f32.mrb[0].mxu0
        %v1972 = vpop.f32.mrb[0].mxu0
        %v1973 = vadd.f32 %v1932, %v1972
        %v1974 = vpop.f32.mrb[0].mxu0
        %1975 = vdwg.mxu0
        %v1976 = vmax.f32 %v1710, %v1970
        %v1977 = vmax.f32 %v1711, %v1973
        %v1978 = vld [vmem:[%s2] sm:$0x1]
        %v1980 = vlaneseq
        %v1981 = vshrl.u32 %v1980, 7
        %v1982 = vsub.s32 0, %v1981
        %v1983 = vrot.slane %v1978, %v1982
        %v1985 = vadd.f32 %v1976, %v1983
        %v1986 = vadd.f32 %v1977, %v1983
        %v1987 = vmax.f32 %v1985, 0.0
        %v1988 = vmax.f32 %v1986, 0.0
        %vm1989 = vcmask 687104
        %1990 = vst.msk [vmem:[#allocation2] sm:$0xff] %vm1989, %v1987
        %1991 = vst.msk [vmem:[#allocation2 + $0x8] sm:$0xff] %vm1989, %v1988
        %1992 = vst.msk [vmem:[#allocation2 + $0x10] sm:$0xff] %vm1989, 0.0
        %v1993 = vld [vmem:[#allocation2] sm:$0xff]
        %v1994 = vpack.c.bf16 %v1993, %v1993
        %v1995 = vld [vmem:[%s3] sm:$0xf]
        %v1996 = vld [vmem:[%s3 + $0x4] sm:$0xf]
        %v1997 = vld [vmem:[%s3 + $0x8] sm:$0xf]
        %v1998 = vld [vmem:[%s3 + $0xc] sm:$0xf]
        %v1999 = vld [vmem:[%s3 + $0x10] sm:$0xf]
        %v2000 = vld [vmem:[%s3 + $0x14] sm:$0xf]
        %v2001 = vld [vmem:[%s3 + $0x18] sm:$0xf]
        %v2002 = vld [vmem:[%s3 + $0x1c] sm:$0xf]
        %v2003 = vld [vmem:[%s3 + $0x20] sm:$0xf]
        %v2004 = vld [vmem:[%s3 + $0x24] sm:$0xf]
        %v2005 = vld [vmem:[%s3 + $0x28] sm:$0x3]
        %v2006 = vld [vmem:[#allocation2 + $0x8] sm:$0xff]
        %v2007 = vpack.c.bf16 %v2006, %v2006
        %s2008 = scalar_lea.vmem %s3, 44
        %v2009 = vld [vmem:[%s2008] sm:$0xf]
        %v2010 = vld [vmem:[%s2008 + $0x4] sm:$0xf]
        %v2011 = vld [vmem:[%s2008 + $0x8] sm:$0xf]
        %v2012 = vld [vmem:[%s2008 + $0xc] sm:$0xf]
        %v2013 = vld [vmem:[%s2008 + $0x10] sm:$0xf]
        %v2014 = vld [vmem:[%s2008 + $0x14] sm:$0xf]
        %v2015 = vld [vmem:[%s2008 + $0x18] sm:$0xf]
        %v2016 = vld [vmem:[%s2008 + $0x1c] sm:$0xf]
        %v2017 = vld [vmem:[%s2008 + $0x20] sm:$0xf]
        %v2018 = vld [vmem:[%s2008 + $0x24] sm:$0xf]
        %v2019 = vld [vmem:[%s2008 + $0x28] sm:$0x3]
        %v2031 = vunpack.c.l.b16 %v2009
        %v2032 = vunpack.c.l.b16 %v2010
        %v2033 = vunpack.c.l.b16 %v2011
        %v2034 = vunpack.c.l.b16 %v2012
        %v2035 = vunpack.c.l.b16 %v2013
        %v2036 = vunpack.c.l.b16 %v2014
        %v2037 = vunpack.c.l.b16 %v2015
        %v2038 = vunpack.c.l.b16 %v2016
        %v2039 = vunpack.c.l.b16 %v2017
        %v2040 = vunpack.c.l.b16 %v2018
        %v2041 = vunpack.c.l.b16 %v2019
        %v2042 = vpack.c.b16 %v2032, %v2031
        %v2043 = vpack.c.b16 %v2034, %v2033
        %v2044 = vpack.c.b16 %v2036, %v2035
        %v2045 = vpack.c.b16 %v2038, %v2037
        %v2046 = vpack.c.b16 %v2040, %v2039
        %v2047 = vpack.c.b16 %v2041, %v2041
        %v2054 = vsel %vm1989, %v2007, 0
        %vm2056 = vcmask 1041408
        %v2058 = vsel %vm2056, %v2047, 0
        %2060 = vmatprep.subr.bf16.mxu0 0
        %2061 = vmatpush1.bf16.msra.mxu0 %v2042
        %2062 = vmatprep.subr.bf16.mxu0 0
        %2063 = vmatpush1.bf16.msra.mxu0 %v2043
        %2064 = vmatprep.subr.bf16.mxu0 0
        %2065 = vmatpush1.bf16.msra.mxu0 %v2044
        %2066 = vmatprep.subr.bf16.mxu0 0
        %2067 = vmatpush1.bf16.msra.mxu0 %v2045
        %2068 = vmatprep.subr.bf16.mxu0 0
        %2069 = vmatpush1.bf16.msra.mxu0 %v2046
        %2070 = vmatprep.subr.bf16.mxu0 0
        %2071 = vmatpush1.bf16.msra.mxu0 %v2058
        %2072 = vmatprep.subr.bf16.mxu0 0
        %2073 = vmatpush1.bf16.msra.mxu0 0
        %2074 = vmatprep.subr.bf16.mxu0 0
        %2075 = vmatpush1.bf16.msra.mxu0 0
        %2076 = vmatprep.subr.bf16.mxu0 0
        %2077 = vmatpush1.bf16.msra.mxu0 0
        %2078 = vmatprep.subr.bf16.mxu0 0
        %2079 = vmatpush1.bf16.msra.mxu0 0
        %2080 = vmatprep.subr.bf16.mxu0 0
        %2081 = vmatpush1.bf16.msra.mxu0 0
        %2082 = vmatprep.subr.bf16.mxu0 0
        %2083 = vmatpush1.bf16.msra.mxu0 0
        %2084 = vmatprep.subr.bf16.mxu0 0
        %2085 = vmatpush1.bf16.msra.mxu0 0
        %2086 = vmatprep.subr.bf16.mxu0 0
        %2087 = vmatpush1.bf16.msra.mxu0 0
        %2088 = vmatprep.subr.bf16.mxu0 0
        %2089 = vmatpush1.bf16.msra.mxu0 0
        %2090 = vmatprep.subr.bf16.mxu0 0
        %2091 = vmatpush1.bf16.msra.mxu0 0
        %2092 = vmatprep.mubr.bf16.mxu0 0
        %2093 = vmatmul.mubr.bf16.gmra.mrb[0].mxu0 %v2054
        %v2094 = vpop.f32.mrb[0].mxu0
        %v2095 = vadd.f32 0.0, %v2094
        %v2096 = vpop.f32.mrb[0].mxu0
        %v2097 = vpop.f32.mrb[0].mxu0
        %v2098 = vpop.f32.mrb[0].mxu0
        %2099 = vdwg.mxu0
        %v2100 = vld [vmem:[#allocation2 + $0x1] sm:$0xff]
        %v2101 = vpack.c.bf16 %v2100, %v2100
        %s2102 = scalar_lea.vmem %s3, 88
        %v2103 = vld [vmem:[%s2102] sm:$0xf]
        %v2104 = vld [vmem:[%s2102 + $0x4] sm:$0xf]
        %v2105 = vld [vmem:[%s2102 + $0x8] sm:$0xf]
        %v2106 = vld [vmem:[%s2102 + $0xc] sm:$0xf]
        %v2107 = vld [vmem:[%s2102 + $0x10] sm:$0xf]
        %v2108 = vld [vmem:[%s2102 + $0x14] sm:$0xf]
        %v2109 = vld [vmem:[%s2102 + $0x18] sm:$0xf]
        %v2110 = vld [vmem:[%s2102 + $0x1c] sm:$0xf]
        %v2111 = vld [vmem:[%s2102 + $0x20] sm:$0xf]
        %v2112 = vld [vmem:[%s2102 + $0x24] sm:$0xf]
        %v2113 = vld [vmem:[%s2102 + $0x28] sm:$0x3]
        %v2114 = vld [vmem:[#allocation2 + $0x9] sm:$0xff]
        %v2115 = vpack.c.bf16 %v2114, %v2114
        %s2116 = scalar_lea.vmem %s3, 132
        %v2117 = vld [vmem:[%s2116] sm:$0xf]
        %v2118 = vld [vmem:[%s2116 + $0x4] sm:$0xf]
        %v2119 = vld [vmem:[%s2116 + $0x8] sm:$0xf]
        %v2120 = vld [vmem:[%s2116 + $0xc] sm:$0xf]
        %v2121 = vld [vmem:[%s2116 + $0x10] sm:$0xf]
        %v2122 = vld [vmem:[%s2116 + $0x14] sm:$0xf]
        %v2123 = vld [vmem:[%s2116 + $0x18] sm:$0xf]
        %v2124 = vld [vmem:[%s2116 + $0x1c] sm:$0xf]
        %v2125 = vld [vmem:[%s2116 + $0x20] sm:$0xf]
        %v2126 = vld [vmem:[%s2116 + $0x24] sm:$0xf]
        %v2127 = vld [vmem:[%s2116 + $0x28] sm:$0x3]
        %v2139 = vunpack.c.l.b16 %v2117
        %v2140 = vunpack.c.l.b16 %v2118
        %v2141 = vunpack.c.l.b16 %v2119
        %v2142 = vunpack.c.l.b16 %v2120
        %v2143 = vunpack.c.l.b16 %v2121
        %v2144 = vunpack.c.l.b16 %v2122
        %v2145 = vunpack.c.l.b16 %v2123
        %v2146 = vunpack.c.l.b16 %v2124
        %v2147 = vunpack.c.l.b16 %v2125
        %v2148 = vunpack.c.l.b16 %v2126
        %v2149 = vunpack.c.l.b16 %v2127
        %v2150 = vpack.c.b16 %v2140, %v2139
        %v2151 = vpack.c.b16 %v2142, %v2141
        %v2152 = vpack.c.b16 %v2144, %v2143
        %v2153 = vpack.c.b16 %v2146, %v2145
        %v2154 = vpack.c.b16 %v2148, %v2147
        %v2155 = vpack.c.b16 %v2149, %v2149
        %v2162 = vsel %vm1989, %v2115, 0
        %v2165 = vsel %vm2056, %v2155, 0
        %2167 = vmatprep.subr.bf16.mxu0 0
        %2168 = vmatpush1.bf16.msra.mxu0 %v2150
        %2169 = vmatprep.subr.bf16.mxu0 0
        %2170 = vmatpush1.bf16.msra.mxu0 %v2151
        %2171 = vmatprep.subr.bf16.mxu0 0
        %2172 = vmatpush1.bf16.msra.mxu0 %v2152
        %2173 = vmatprep.subr.bf16.mxu0 0
        %2174 = vmatpush1.bf16.msra.mxu0 %v2153
        %2175 = vmatprep.subr.bf16.mxu0 0
        %2176 = vmatpush1.bf16.msra.mxu0 %v2154
        %2177 = vmatprep.subr.bf16.mxu0 0
        %2178 = vmatpush1.bf16.msra.mxu0 %v2165
        %2179 = vmatprep.subr.bf16.mxu0 0
        %2180 = vmatpush1.bf16.msra.mxu0 0
        %2181 = vmatprep.subr.bf16.mxu0 0
        %2182 = vmatpush1.bf16.msra.mxu0 0
        %2183 = vmatprep.subr.bf16.mxu0 0
        %2184 = vmatpush1.bf16.msra.mxu0 0
        %2185 = vmatprep.subr.bf16.mxu0 0
        %2186 = vmatpush1.bf16.msra.mxu0 0
        %2187 = vmatprep.subr.bf16.mxu0 0
        %2188 = vmatpush1.bf16.msra.mxu0 0
        %2189 = vmatprep.subr.bf16.mxu0 0
        %2190 = vmatpush1.bf16.msra.mxu0 0
        %2191 = vmatprep.subr.bf16.mxu0 0
        %2192 = vmatpush1.bf16.msra.mxu0 0
        %2193 = vmatprep.subr.bf16.mxu0 0
        %2194 = vmatpush1.bf16.msra.mxu0 0
        %2195 = vmatprep.subr.bf16.mxu0 0
        %2196 = vmatpush1.bf16.msra.mxu0 0
        %2197 = vmatprep.subr.bf16.mxu0 0
        %2198 = vmatpush1.bf16.msra.mxu0 0
        %2199 = vmatprep.mubr.bf16.mxu0 0
        %2200 = vmatmul.mubr.bf16.gmra.mrb[0].mxu0 %v2162
        %v2201 = vpop.f32.mrb[0].mxu0
        %v2202 = vadd.f32 0.0, %v2201
        %v2203 = vpop.f32.mrb[0].mxu0
        %v2204 = vpop.f32.mrb[0].mxu0
        %v2205 = vpop.f32.mrb[0].mxu0
        %2206 = vdwg.mxu0
        %v2207 = vld [vmem:[#allocation2 + $0x2] sm:$0xff]
        %v2208 = vpack.c.bf16 %v2207, %v2207
        %s2209 = scalar_lea.vmem %s3, 176
        %v2210 = vld [vmem:[%s2209] sm:$0xf]
        %v2211 = vld [vmem:[%s2209 + $0x4] sm:$0xf]
        %v2212 = vld [vmem:[%s2209 + $0x8] sm:$0xf]
        %v2213 = vld [vmem:[%s2209 + $0xc] sm:$0xf]
        %v2214 = vld [vmem:[%s2209 + $0x10] sm:$0xf]
        %v2215 = vld [vmem:[%s2209 + $0x14] sm:$0xf]
        %v2216 = vld [vmem:[%s2209 + $0x18] sm:$0xf]
        %v2217 = vld [vmem:[%s2209 + $0x1c] sm:$0xf]
        %v2218 = vld [vmem:[%s2209 + $0x20] sm:$0xf]
        %v2219 = vld [vmem:[%s2209 + $0x24] sm:$0xf]
        %v2220 = vld [vmem:[%s2209 + $0x28] sm:$0x3]
        %v2232 = vunpack.c.l.b16 %v2210
        %v2233 = vunpack.c.l.b16 %v2211
        %v2234 = vunpack.c.l.b16 %v2212
        %v2235 = vunpack.c.l.b16 %v2213
        %v2236 = vunpack.c.l.b16 %v2214
        %v2237 = vunpack.c.l.b16 %v2215
        %v2238 = vunpack.c.l.b16 %v2216
        %v2239 = vunpack.c.l.b16 %v2217
        %v2240 = vunpack.c.l.b16 %v2218
        %v2241 = vunpack.c.l.b16 %v2219
        %v2242 = vunpack.c.l.b16 %v2220
        %v2243 = vpack.c.b16 %v2233, %v2232
        %v2244 = vpack.c.b16 %v2235, %v2234
        %v2245 = vpack.c.b16 %v2237, %v2236
        %v2246 = vpack.c.b16 %v2239, %v2238
        %v2247 = vpack.c.b16 %v2241, %v2240
        %v2248 = vpack.c.b16 %v2242, %v2242
        %v2255 = vsel %vm1989, %v2208, 0
        %v2258 = vsel %vm2056, %v2248, 0
        %2260 = vmatprep.subr.bf16.mxu0 0
        %2261 = vmatpush1.bf16.msra.mxu0 %v2243
        %2262 = vmatprep.subr.bf16.mxu0 0
        %2263 = vmatpush1.bf16.msra.mxu0 %v2244
        %2264 = vmatprep.subr.bf16.mxu0 0
        %2265 = vmatpush1.bf16.msra.mxu0 %v2245
        %2266 = vmatprep.subr.bf16.mxu0 0
        %2267 = vmatpush1.bf16.msra.mxu0 %v2246
        %2268 = vmatprep.subr.bf16.mxu0 0
        %2269 = vmatpush1.bf16.msra.mxu0 %v2247
        %2270 = vmatprep.subr.bf16.mxu0 0
        %2271 = vmatpush1.bf16.msra.mxu0 %v2258
        %2272 = vmatprep.subr.bf16.mxu0 0
        %2273 = vmatpush1.bf16.msra.mxu0 0
        %2274 = vmatprep.subr.bf16.mxu0 0
        %2275 = vmatpush1.bf16.msra.mxu0 0
        %2276 = vmatprep.subr.bf16.mxu0 0
        %2277 = vmatpush1.bf16.msra.mxu0 0
        %2278 = vmatprep.subr.bf16.mxu0 0
        %2279 = vmatpush1.bf16.msra.mxu0 0
        %2280 = vmatprep.subr.bf16.mxu0 0
        %2281 = vmatpush1.bf16.msra.mxu0 0
        %2282 = vmatprep.subr.bf16.mxu0 0
        %2283 = vmatpush1.bf16.msra.mxu0 0
        %2284 = vmatprep.subr.bf16.mxu0 0
        %2285 = vmatpush1.bf16.msra.mxu0 0
        %2286 = vmatprep.subr.bf16.mxu0 0
        %2287 = vmatpush1.bf16.msra.mxu0 0
        %2288 = vmatprep.subr.bf16.mxu0 0
        %2289 = vmatpush1.bf16.msra.mxu0 0
        %2290 = vmatprep.subr.bf16.mxu0 0
        %2291 = vmatpush1.bf16.msra.mxu0 0
        %2292 = vmatprep.mubr.bf16.mxu0 0
        %2293 = vmatmul.mubr.bf16.gmra.mrb[0].mxu0 %v2255
        %v2294 = vpop.f32.mrb[0].mxu0
        %v2295 = vadd.f32 0.0, %v2294
        %v2296 = vpop.f32.mrb[0].mxu0
        %v2297 = vpop.f32.mrb[0].mxu0
        %v2298 = vpop.f32.mrb[0].mxu0
        %2299 = vdwg.mxu0
        %v2311 = vunpack.c.l.b16 %v1995
        %v2312 = vunpack.c.l.b16 %v1996
        %v2313 = vunpack.c.l.b16 %v1997
        %v2314 = vunpack.c.l.b16 %v1998
        %v2315 = vunpack.c.l.b16 %v1999
        %v2316 = vunpack.c.l.b16 %v2000
        %v2317 = vunpack.c.l.b16 %v2001
        %v2318 = vunpack.c.l.b16 %v2002
        %v2319 = vunpack.c.l.b16 %v2003
        %v2320 = vunpack.c.l.b16 %v2004
        %v2321 = vunpack.c.l.b16 %v2005
        %v2322 = vpack.c.b16 %v2312, %v2311
        %v2323 = vpack.c.b16 %v2314, %v2313
        %v2324 = vpack.c.b16 %v2316, %v2315
        %v2325 = vpack.c.b16 %v2318, %v2317
        %v2326 = vpack.c.b16 %v2320, %v2319
        %v2327 = vpack.c.b16 %v2321, %v2321
        %v2334 = vsel %vm1989, %v1994, 0
        %v2337 = vsel %vm2056, %v2327, 0
        %2339 = vmatprep.subr.bf16.mxu0 0
        %2340 = vmatpush1.bf16.msra.mxu0 %v2322
        %2341 = vmatprep.subr.bf16.mxu0 0
        %2342 = vmatpush1.bf16.msra.mxu0 %v2323
        %2343 = vmatprep.subr.bf16.mxu0 0
        %2344 = vmatpush1.bf16.msra.mxu0 %v2324
        %2345 = vmatprep.subr.bf16.mxu0 0
        %2346 = vmatpush1.bf16.msra.mxu0 %v2325
        %2347 = vmatprep.subr.bf16.mxu0 0
        %2348 = vmatpush1.bf16.msra.mxu0 %v2326
        %2349 = vmatprep.subr.bf16.mxu0 0
        %2350 = vmatpush1.bf16.msra.mxu0 %v2337
        %2351 = vmatprep.subr.bf16.mxu0 0
        %2352 = vmatpush1.bf16.msra.mxu0 0
        %2353 = vmatprep.subr.bf16.mxu0 0
        %2354 = vmatpush1.bf16.msra.mxu0 0
        %2355 = vmatprep.subr.bf16.mxu0 0
        %2356 = vmatpush1.bf16.msra.mxu0 0
        %2357 = vmatprep.subr.bf16.mxu0 0
        %2358 = vmatpush1.bf16.msra.mxu0 0
        %2359 = vmatprep.subr.bf16.mxu0 0
        %2360 = vmatpush1.bf16.msra.mxu0 0
        %2361 = vmatprep.subr.bf16.mxu0 0
        %2362 = vmatpush1.bf16.msra.mxu0 0
        %2363 = vmatprep.subr.bf16.mxu0 0
        %2364 = vmatpush1.bf16.msra.mxu0 0
        %2365 = vmatprep.subr.bf16.mxu0 0
        %2366 = vmatpush1.bf16.msra.mxu0 0
        %2367 = vmatprep.subr.bf16.mxu0 0
        %2368 = vmatpush1.bf16.msra.mxu0 0
        %2369 = vmatprep.subr.bf16.mxu0 0
        %2370 = vmatpush1.bf16.msra.mxu0 0
        %2371 = vmatprep.mubr.bf16.mxu0 0
        %2372 = vmatmul.mubr.bf16.gmra.mrb[0].mxu0 %v2334
        %v2373 = vpop.f32.mrb[0].mxu0
        %v2374 = vadd.f32 %v2095, %v2373
        %v2375 = vpop.f32.mrb[0].mxu0
        %v2376 = vpop.f32.mrb[0].mxu0
        %v2377 = vpop.f32.mrb[0].mxu0
        %2378 = vdwg.mxu0
        %v2390 = vunpack.c.l.b16 %v2103
        %v2391 = vunpack.c.l.b16 %v2104
        %v2392 = vunpack.c.l.b16 %v2105
        %v2393 = vunpack.c.l.b16 %v2106
        %v2394 = vunpack.c.l.b16 %v2107
        %v2395 = vunpack.c.l.b16 %v2108
        %v2396 = vunpack.c.l.b16 %v2109
        %v2397 = vunpack.c.l.b16 %v2110
        %v2398 = vunpack.c.l.b16 %v2111
        %v2399 = vunpack.c.l.b16 %v2112
        %v2400 = vunpack.c.l.b16 %v2113
        %v2401 = vpack.c.b16 %v2391, %v2390
        %v2402 = vpack.c.b16 %v2393, %v2392
        %v2403 = vpack.c.b16 %v2395, %v2394
        %v2404 = vpack.c.b16 %v2397, %v2396
        %v2405 = vpack.c.b16 %v2399, %v2398
        %v2406 = vpack.c.b16 %v2400, %v2400
        %v2413 = vsel %vm1989, %v2101, 0
        %v2416 = vsel %vm2056, %v2406, 0
        %2418 = vmatprep.subr.bf16.mxu0 0
        %2419 = vmatpush1.bf16.msra.mxu0 %v2401
        %2420 = vmatprep.subr.bf16.mxu0 0
        %2421 = vmatpush1.bf16.msra.mxu0 %v2402
        %2422 = vmatprep.subr.bf16.mxu0 0
        %2423 = vmatpush1.bf16.msra.mxu0 %v2403
        %2424 = vmatprep.subr.bf16.mxu0 0
        %2425 = vmatpush1.bf16.msra.mxu0 %v2404
        %2426 = vmatprep.subr.bf16.mxu0 0
        %2427 = vmatpush1.bf16.msra.mxu0 %v2405
        %2428 = vmatprep.subr.bf16.mxu0 0
        %2429 = vmatpush1.bf16.msra.mxu0 %v2416
        %2430 = vmatprep.subr.bf16.mxu0 0
        %2431 = vmatpush1.bf16.msra.mxu0 0
        %2432 = vmatprep.subr.bf16.mxu0 0
        %2433 = vmatpush1.bf16.msra.mxu0 0
        %2434 = vmatprep.subr.bf16.mxu0 0
        %2435 = vmatpush1.bf16.msra.mxu0 0
        %2436 = vmatprep.subr.bf16.mxu0 0
        %2437 = vmatpush1.bf16.msra.mxu0 0
        %2438 = vmatprep.subr.bf16.mxu0 0
        %2439 = vmatpush1.bf16.msra.mxu0 0
        %2440 = vmatprep.subr.bf16.mxu0 0
        %2441 = vmatpush1.bf16.msra.mxu0 0
        %2442 = vmatprep.subr.bf16.mxu0 0
        %2443 = vmatpush1.bf16.msra.mxu0 0
        %2444 = vmatprep.subr.bf16.mxu0 0
        %2445 = vmatpush1.bf16.msra.mxu0 0
        %2446 = vmatprep.subr.bf16.mxu0 0
        %2447 = vmatpush1.bf16.msra.mxu0 0
        %2448 = vmatprep.subr.bf16.mxu0 0
        %2449 = vmatpush1.bf16.msra.mxu0 0
        %2450 = vmatprep.mubr.bf16.mxu0 0
        %2451 = vmatmul.mubr.bf16.gmra.mrb[0].mxu0 %v2413
        %v2452 = vpop.f32.mrb[0].mxu0
        %v2453 = vadd.f32 %v2202, %v2452
        %v2454 = vpop.f32.mrb[0].mxu0
        %v2455 = vpop.f32.mrb[0].mxu0
        %v2456 = vpop.f32.mrb[0].mxu0
        %2457 = vdwg.mxu0
        %v2458 = vadd.f32 %v2374, %v2453
        %v2459 = vadd.f32 %v2458, %v2295
        %s2460 = scalar_lea.vmem %s3, 220
        %v2461 = vld [vmem:[%s2460] sm:$0xf]
        %v2462 = vld [vmem:[%s2460 + $0x4] sm:$0xf]
        %v2463 = vld [vmem:[%s2460 + $0x8] sm:$0xf]
        %v2464 = vld [vmem:[%s2460 + $0xc] sm:$0xf]
        %v2465 = vld [vmem:[%s2460 + $0x10] sm:$0xf]
        %v2466 = vld [vmem:[%s2460 + $0x14] sm:$0xf]
        %v2467 = vld [vmem:[%s2460 + $0x18] sm:$0xf]
        %v2468 = vld [vmem:[%s2460 + $0x1c] sm:$0xf]
        %v2469 = vld [vmem:[%s2460 + $0x20] sm:$0xf]
        %v2470 = vld [vmem:[%s2460 + $0x24] sm:$0xf]
        %v2471 = vld [vmem:[%s2460 + $0x28] sm:$0x3]
        %s2472 = scalar_lea.vmem %s3, 264
        %v2473 = vld [vmem:[%s2472] sm:$0xf]
        %v2474 = vld [vmem:[%s2472 + $0x4] sm:$0xf]
        %v2475 = vld [vmem:[%s2472 + $0x8] sm:$0xf]
        %v2476 = vld [vmem:[%s2472 + $0xc] sm:$0xf]
        %v2477 = vld [vmem:[%s2472 + $0x10] sm:$0xf]
        %v2478 = vld [vmem:[%s2472 + $0x14] sm:$0xf]
        %v2479 = vld [vmem:[%s2472 + $0x18] sm:$0xf]
        %v2480 = vld [vmem:[%s2472 + $0x1c] sm:$0xf]
        %v2481 = vld [vmem:[%s2472 + $0x20] sm:$0xf]
        %v2482 = vld [vmem:[%s2472 + $0x24] sm:$0xf]
        %v2483 = vld [vmem:[%s2472 + $0x28] sm:$0x3]
        %v2495 = vunpack.c.l.b16 %v2473
        %v2496 = vunpack.c.l.b16 %v2474
        %v2497 = vunpack.c.l.b16 %v2475
        %v2498 = vunpack.c.l.b16 %v2476
        %v2499 = vunpack.c.l.b16 %v2477
        %v2500 = vunpack.c.l.b16 %v2478
        %v2501 = vunpack.c.l.b16 %v2479
        %v2502 = vunpack.c.l.b16 %v2480
        %v2503 = vunpack.c.l.b16 %v2481
        %v2504 = vunpack.c.l.b16 %v2482
        %v2505 = vunpack.c.l.b16 %v2483
        %v2506 = vpack.c.b16 %v2496, %v2495
        %v2507 = vpack.c.b16 %v2498, %v2497
        %v2508 = vpack.c.b16 %v2500, %v2499
        %v2509 = vpack.c.b16 %v2502, %v2501
        %v2510 = vpack.c.b16 %v2504, %v2503
        %v2511 = vpack.c.b16 %v2505, %v2505
        %v2518 = vsel %vm2056, %v2511, 0
        %2520 = vmatprep.subr.bf16.mxu0 0
        %2521 = vmatpush1.bf16.msra.mxu0 %v2506
        %2522 = vmatprep.subr.bf16.mxu0 0
        %2523 = vmatpush1.bf16.msra.mxu0 %v2507
        %2524 = vmatprep.subr.bf16.mxu0 0
        %2525 = vmatpush1.bf16.msra.mxu0 %v2508
        %2526 = vmatprep.subr.bf16.mxu0 0
        %2527 = vmatpush1.bf16.msra.mxu0 %v2509
        %2528 = vmatprep.subr.bf16.mxu0 0
        %2529 = vmatpush1.bf16.msra.mxu0 %v2510
        %2530 = vmatprep.subr.bf16.mxu0 0
        %2531 = vmatpush1.bf16.msra.mxu0 %v2518
        %2532 = vmatprep.subr.bf16.mxu0 0
        %2533 = vmatpush1.bf16.msra.mxu0 0
        %2534 = vmatprep.subr.bf16.mxu0 0
        %2535 = vmatpush1.bf16.msra.mxu0 0
        %2536 = vmatprep.subr.bf16.mxu0 0
        %2537 = vmatpush1.bf16.msra.mxu0 0
        %2538 = vmatprep.subr.bf16.mxu0 0
        %2539 = vmatpush1.bf16.msra.mxu0 0
        %2540 = vmatprep.subr.bf16.mxu0 0
        %2541 = vmatpush1.bf16.msra.mxu0 0
        %2542 = vmatprep.subr.bf16.mxu0 0
        %2543 = vmatpush1.bf16.msra.mxu0 0
        %2544 = vmatprep.subr.bf16.mxu0 0
        %2545 = vmatpush1.bf16.msra.mxu0 0
        %2546 = vmatprep.subr.bf16.mxu0 0
        %2547 = vmatpush1.bf16.msra.mxu0 0
        %2548 = vmatprep.subr.bf16.mxu0 0
        %2549 = vmatpush1.bf16.msra.mxu0 0
        %2550 = vmatprep.subr.bf16.mxu0 0
        %2551 = vmatpush1.bf16.msra.mxu0 0
        %2552 = vmatprep.mubr.bf16.mxu0 0
        %2553 = vmatmul.mubr.bf16.gmra.mrb[0].mxu0 %v2054
        %v2554 = vpop.f32.mrb[0].mxu0
        %v2555 = vadd.f32 0.0, %v2554
        %v2556 = vpop.f32.mrb[0].mxu0
        %v2557 = vpop.f32.mrb[0].mxu0
        %v2558 = vpop.f32.mrb[0].mxu0
        %2559 = vdwg.mxu0
        %s2560 = scalar_lea.vmem %s3, 308
        %v2561 = vld [vmem:[%s2560] sm:$0xf]
        %v2562 = vld [vmem:[%s2560 + $0x4] sm:$0xf]
        %v2563 = vld [vmem:[%s2560 + $0x8] sm:$0xf]
        %v2564 = vld [vmem:[%s2560 + $0xc] sm:$0xf]
        %v2565 = vld [vmem:[%s2560 + $0x10] sm:$0xf]
        %v2566 = vld [vmem:[%s2560 + $0x14] sm:$0xf]
        %v2567 = vld [vmem:[%s2560 + $0x18] sm:$0xf]
        %v2568 = vld [vmem:[%s2560 + $0x1c] sm:$0xf]
        %v2569 = vld [vmem:[%s2560 + $0x20] sm:$0xf]
        %v2570 = vld [vmem:[%s2560 + $0x24] sm:$0xf]
        %v2571 = vld [vmem:[%s2560 + $0x28] sm:$0x3]
        %s2572 = scalar_lea.vmem %s3, 352
        %v2573 = vld [vmem:[%s2572] sm:$0xf]
        %v2574 = vld [vmem:[%s2572 + $0x4] sm:$0xf]
        %v2575 = vld [vmem:[%s2572 + $0x8] sm:$0xf]
        %v2576 = vld [vmem:[%s2572 + $0xc] sm:$0xf]
        %v2577 = vld [vmem:[%s2572 + $0x10] sm:$0xf]
        %v2578 = vld [vmem:[%s2572 + $0x14] sm:$0xf]
        %v2579 = vld [vmem:[%s2572 + $0x18] sm:$0xf]
        %v2580 = vld [vmem:[%s2572 + $0x1c] sm:$0xf]
        %v2581 = vld [vmem:[%s2572 + $0x20] sm:$0xf]
        %v2582 = vld [vmem:[%s2572 + $0x24] sm:$0xf]
        %v2583 = vld [vmem:[%s2572 + $0x28] sm:$0x3]
        %v2595 = vunpack.c.l.b16 %v2573
        %v2596 = vunpack.c.l.b16 %v2574
        %v2597 = vunpack.c.l.b16 %v2575
        %v2598 = vunpack.c.l.b16 %v2576
        %v2599 = vunpack.c.l.b16 %v2577
        %v2600 = vunpack.c.l.b16 %v2578
        %v2601 = vunpack.c.l.b16 %v2579
        %v2602 = vunpack.c.l.b16 %v2580
        %v2603 = vunpack.c.l.b16 %v2581
        %v2604 = vunpack.c.l.b16 %v2582
        %v2605 = vunpack.c.l.b16 %v2583
        %v2606 = vpack.c.b16 %v2596, %v2595
        %v2607 = vpack.c.b16 %v2598, %v2597
        %v2608 = vpack.c.b16 %v2600, %v2599
        %v2609 = vpack.c.b16 %v2602, %v2601
        %v2610 = vpack.c.b16 %v2604, %v2603
        %v2611 = vpack.c.b16 %v2605, %v2605
        %v2618 = vsel %vm2056, %v2611, 0
        %2620 = vmatprep.subr.bf16.mxu0 0
        %2621 = vmatpush1.bf16.msra.mxu0 %v2606
        %2622 = vmatprep.subr.bf16.mxu0 0
        %2623 = vmatpush1.bf16.msra.mxu0 %v2607
        %2624 = vmatprep.subr.bf16.mxu0 0
        %2625 = vmatpush1.bf16.msra.mxu0 %v2608
        %2626 = vmatprep.subr.bf16.mxu0 0
        %2627 = vmatpush1.bf16.msra.mxu0 %v2609
        %2628 = vmatprep.subr.bf16.mxu0 0
        %2629 = vmatpush1.bf16.msra.mxu0 %v2610
        %2630 = vmatprep.subr.bf16.mxu0 0
        %2631 = vmatpush1.bf16.msra.mxu0 %v2618
        %2632 = vmatprep.subr.bf16.mxu0 0
        %2633 = vmatpush1.bf16.msra.mxu0 0
        %2634 = vmatprep.subr.bf16.mxu0 0
        %2635 = vmatpush1.bf16.msra.mxu0 0
        %2636 = vmatprep.subr.bf16.mxu0 0
        %2637 = vmatpush1.bf16.msra.mxu0 0
        %2638 = vmatprep.subr.bf16.mxu0 0
        %2639 = vmatpush1.bf16.msra.mxu0 0
        %2640 = vmatprep.subr.bf16.mxu0 0
        %2641 = vmatpush1.bf16.msra.mxu0 0
        %2642 = vmatprep.subr.bf16.mxu0 0
        %2643 = vmatpush1.bf16.msra.mxu0 0
        %2644 = vmatprep.subr.bf16.mxu0 0
        %2645 = vmatpush1.bf16.msra.mxu0 0
        %2646 = vmatprep.subr.bf16.mxu0 0
        %2647 = vmatpush1.bf16.msra.mxu0 0
        %2648 = vmatprep.subr.bf16.mxu0 0
        %2649 = vmatpush1.bf16.msra.mxu0 0
        %2650 = vmatprep.subr.bf16.mxu0 0
        %2651 = vmatpush1.bf16.msra.mxu0 0
        %2652 = vmatprep.mubr.bf16.mxu0 0
        %2653 = vmatmul.mubr.bf16.gmra.mrb[0].mxu0 %v2162
        %v2654 = vpop.f32.mrb[0].mxu0
        %v2655 = vadd.f32 0.0, %v2654
        %v2656 = vpop.f32.mrb[0].mxu0
        %v2657 = vpop.f32.mrb[0].mxu0
        %v2658 = vpop.f32.mrb[0].mxu0
        %2659 = vdwg.mxu0
        %s2660 = scalar_lea.vmem %s3, 396
        %v2661 = vld [vmem:[%s2660] sm:$0xf]
        %v2662 = vld [vmem:[%s2660 + $0x4] sm:$0xf]
        %v2663 = vld [vmem:[%s2660 + $0x8] sm:$0xf]
        %v2664 = vld [vmem:[%s2660 + $0xc] sm:$0xf]
        %v2665 = vld [vmem:[%s2660 + $0x10] sm:$0xf]
        %v2666 = vld [vmem:[%s2660 + $0x14] sm:$0xf]
        %v2667 = vld [vmem:[%s2660 + $0x18] sm:$0xf]
        %v2668 = vld [vmem:[%s2660 + $0x1c] sm:$0xf]
        %v2669 = vld [vmem:[%s2660 + $0x20] sm:$0xf]
        %v2670 = vld [vmem:[%s2660 + $0x24] sm:$0xf]
        %v2671 = vld [vmem:[%s2660 + $0x28] sm:$0x3]
        %v2683 = vunpack.c.l.b16 %v2661
        %v2684 = vunpack.c.l.b16 %v2662
        %v2685 = vunpack.c.l.b16 %v2663
        %v2686 = vunpack.c.l.b16 %v2664
        %v2687 = vunpack.c.l.b16 %v2665
        %v2688 = vunpack.c.l.b16 %v2666
        %v2689 = vunpack.c.l.b16 %v2667
        %v2690 = vunpack.c.l.b16 %v2668
        %v2691 = vunpack.c.l.b16 %v2669
        %v2692 = vunpack.c.l.b16 %v2670
        %v2693 = vunpack.c.l.b16 %v2671
        %v2694 = vpack.c.b16 %v2684, %v2683
        %v2695 = vpack.c.b16 %v2686, %v2685
        %v2696 = vpack.c.b16 %v2688, %v2687
        %v2697 = vpack.c.b16 %v2690, %v2689
        %v2698 = vpack.c.b16 %v2692, %v2691
        %v2699 = vpack.c.b16 %v2693, %v2693
        %v2706 = vsel %vm2056, %v2699, 0
        %2708 = vmatprep.subr.bf16.mxu0 0
        %2709 = vmatpush1.bf16.msra.mxu0 %v2694
        %2710 = vmatprep.subr.bf16.mxu0 0
        %2711 = vmatpush1.bf16.msra.mxu0 %v2695
        %2712 = vmatprep.subr.bf16.mxu0 0
        %2713 = vmatpush1.bf16.msra.mxu0 %v2696
        %2714 = vmatprep.subr.bf16.mxu0 0
        %2715 = vmatpush1.bf16.msra.mxu0 %v2697
        %2716 = vmatprep.subr.bf16.mxu0 0
        %2717 = vmatpush1.bf16.msra.mxu0 %v2698
        %2718 = vmatprep.subr.bf16.mxu0 0
        %2719 = vmatpush1.bf16.msra.mxu0 %v2706
        %2720 = vmatprep.subr.bf16.mxu0 0
        %2721 = vmatpush1.bf16.msra.mxu0 0
        %2722 = vmatprep.subr.bf16.mxu0 0
        %2723 = vmatpush1.bf16.msra.mxu0 0
        %2724 = vmatprep.subr.bf16.mxu0 0
        %2725 = vmatpush1.bf16.msra.mxu0 0
        %2726 = vmatprep.subr.bf16.mxu0 0
        %2727 = vmatpush1.bf16.msra.mxu0 0
        %2728 = vmatprep.subr.bf16.mxu0 0
        %2729 = vmatpush1.bf16.msra.mxu0 0
        %2730 = vmatprep.subr.bf16.mxu0 0
        %2731 = vmatpush1.bf16.msra.mxu0 0
        %2732 = vmatprep.subr.bf16.mxu0 0
        %2733 = vmatpush1.bf16.msra.mxu0 0
        %2734 = vmatprep.subr.bf16.mxu0 0
        %2735 = vmatpush1.bf16.msra.mxu0 0
        %2736 = vmatprep.subr.bf16.mxu0 0
        %2737 = vmatpush1.bf16.msra.mxu0 0
        %2738 = vmatprep.subr.bf16.mxu0 0
        %2739 = vmatpush1.bf16.msra.mxu0 0
        %2740 = vmatprep.mubr.bf16.mxu0 0
        %2741 = vmatmul.mubr.bf16.gmra.mrb[0].mxu0 %v2255
        %v2742 = vpop.f32.mrb[0].mxu0
        %v2743 = vadd.f32 0.0, %v2742
        %v2744 = vpop.f32.mrb[0].mxu0
        %v2745 = vpop.f32.mrb[0].mxu0
        %v2746 = vpop.f32.mrb[0].mxu0
        %2747 = vdwg.mxu0
        %v2759 = vunpack.c.l.b16 %v2461
        %v2760 = vunpack.c.l.b16 %v2462
        %v2761 = vunpack.c.l.b16 %v2463
        %v2762 = vunpack.c.l.b16 %v2464
        %v2763 = vunpack.c.l.b16 %v2465
        %v2764 = vunpack.c.l.b16 %v2466
        %v2765 = vunpack.c.l.b16 %v2467
        %v2766 = vunpack.c.l.b16 %v2468
        %v2767 = vunpack.c.l.b16 %v2469
        %v2768 = vunpack.c.l.b16 %v2470
        %v2769 = vunpack.c.l.b16 %v2471
        %v2770 = vpack.c.b16 %v2760, %v2759
        %v2771 = vpack.c.b16 %v2762, %v2761
        %v2772 = vpack.c.b16 %v2764, %v2763
        %v2773 = vpack.c.b16 %v2766, %v2765
        %v2774 = vpack.c.b16 %v2768, %v2767
        %v2775 = vpack.c.b16 %v2769, %v2769
        %v2782 = vsel %vm2056, %v2775, 0
        %2784 = vmatprep.subr.bf16.mxu0 0
        %2785 = vmatpush1.bf16.msra.mxu0 %v2770
        %2786 = vmatprep.subr.bf16.mxu0 0
        %2787 = vmatpush1.bf16.msra.mxu0 %v2771
        %2788 = vmatprep.subr.bf16.mxu0 0
        %2789 = vmatpush1.bf16.msra.mxu0 %v2772
        %2790 = vmatprep.subr.bf16.mxu0 0
        %2791 = vmatpush1.bf16.msra.mxu0 %v2773
        %2792 = vmatprep.subr.bf16.mxu0 0
        %2793 = vmatpush1.bf16.msra.mxu0 %v2774
        %2794 = vmatprep.subr.bf16.mxu0 0
        %2795 = vmatpush1.bf16.msra.mxu0 %v2782
        %2796 = vmatprep.subr.bf16.mxu0 0
        %2797 = vmatpush1.bf16.msra.mxu0 0
        %2798 = vmatprep.subr.bf16.mxu0 0
        %2799 = vmatpush1.bf16.msra.mxu0 0
        %2800 = vmatprep.subr.bf16.mxu0 0
        %2801 = vmatpush1.bf16.msra.mxu0 0
        %2802 = vmatprep.subr.bf16.mxu0 0
        %2803 = vmatpush1.bf16.msra.mxu0 0
        %2804 = vmatprep.subr.bf16.mxu0 0
        %2805 = vmatpush1.bf16.msra.mxu0 0
        %2806 = vmatprep.subr.bf16.mxu0 0
        %2807 = vmatpush1.bf16.msra.mxu0 0
        %2808 = vmatprep.subr.bf16.mxu0 0
        %2809 = vmatpush1.bf16.msra.mxu0 0
        %2810 = vmatprep.subr.bf16.mxu0 0
        %2811 = vmatpush1.bf16.msra.mxu0 0
        %2812 = vmatprep.subr.bf16.mxu0 0
        %2813 = vmatpush1.bf16.msra.mxu0 0
        %2814 = vmatprep.subr.bf16.mxu0 0
        %2815 = vmatpush1.bf16.msra.mxu0 0
        %2816 = vmatprep.mubr.bf16.mxu0 0
        %2817 = vmatmul.mubr.bf16.gmra.mrb[0].mxu0 %v2334
        %v2818 = vpop.f32.mrb[0].mxu0
        %v2819 = vadd.f32 %v2555, %v2818
        %v2820 = vpop.f32.mrb[0].mxu0
        %v2821 = vpop.f32.mrb[0].mxu0
        %v2822 = vpop.f32.mrb[0].mxu0
        %2823 = vdwg.mxu0
        %v2835 = vunpack.c.l.b16 %v2561
        %v2836 = vunpack.c.l.b16 %v2562
        %v2837 = vunpack.c.l.b16 %v2563
        %v2838 = vunpack.c.l.b16 %v2564
        %v2839 = vunpack.c.l.b16 %v2565
        %v2840 = vunpack.c.l.b16 %v2566
        %v2841 = vunpack.c.l.b16 %v2567
        %v2842 = vunpack.c.l.b16 %v2568
        %v2843 = vunpack.c.l.b16 %v2569
        %v2844 = vunpack.c.l.b16 %v2570
        %v2845 = vunpack.c.l.b16 %v2571
        %v2846 = vpack.c.b16 %v2836, %v2835
        %v2847 = vpack.c.b16 %v2838, %v2837
        %v2848 = vpack.c.b16 %v2840, %v2839
        %v2849 = vpack.c.b16 %v2842, %v2841
        %v2850 = vpack.c.b16 %v2844, %v2843
        %v2851 = vpack.c.b16 %v2845, %v2845
        %v2858 = vsel %vm2056, %v2851, 0
        %2860 = vmatprep.subr.bf16.mxu0 0
        %2861 = vmatpush1.bf16.msra.mxu0 %v2846
        %2862 = vmatprep.subr.bf16.mxu0 0
        %2863 = vmatpush1.bf16.msra.mxu0 %v2847
        %2864 = vmatprep.subr.bf16.mxu0 0
        %2865 = vmatpush1.bf16.msra.mxu0 %v2848
        %2866 = vmatprep.subr.bf16.mxu0 0
        %2867 = vmatpush1.bf16.msra.mxu0 %v2849
        %2868 = vmatprep.subr.bf16.mxu0 0
        %2869 = vmatpush1.bf16.msra.mxu0 %v2850
        %2870 = vmatprep.subr.bf16.mxu0 0
        %2871 = vmatpush1.bf16.msra.mxu0 %v2858
        %2872 = vmatprep.subr.bf16.mxu0 0
        %2873 = vmatpush1.bf16.msra.mxu0 0
        %2874 = vmatprep.subr.bf16.mxu0 0
        %2875 = vmatpush1.bf16.msra.mxu0 0
        %2876 = vmatprep.subr.bf16.mxu0 0
        %2877 = vmatpush1.bf16.msra.mxu0 0
        %2878 = vmatprep.subr.bf16.mxu0 0
        %2879 = vmatpush1.bf16.msra.mxu0 0
        %2880 = vmatprep.subr.bf16.mxu0 0
        %2881 = vmatpush1.bf16.msra.mxu0 0
        %2882 = vmatprep.subr.bf16.mxu0 0
        %2883 = vmatpush1.bf16.msra.mxu0 0
        %2884 = vmatprep.subr.bf16.mxu0 0
        %2885 = vmatpush1.bf16.msra.mxu0 0
        %2886 = vmatprep.subr.bf16.mxu0 0
        %2887 = vmatpush1.bf16.msra.mxu0 0
        %2888 = vmatprep.subr.bf16.mxu0 0
        %2889 = vmatpush1.bf16.msra.mxu0 0
        %2890 = vmatprep.subr.bf16.mxu0 0
        %2891 = vmatpush1.bf16.msra.mxu0 0
        %2892 = vmatprep.mubr.bf16.mxu0 0
        %2893 = vmatmul.mubr.bf16.gmra.mrb[0].mxu0 %v2413
        %v2894 = vpop.f32.mrb[0].mxu0
        %v2895 = vadd.f32 %v2655, %v2894
        %v2896 = vpop.f32.mrb[0].mxu0
        %v2897 = vpop.f32.mrb[0].mxu0
        %v2898 = vpop.f32.mrb[0].mxu0
        %2899 = vdwg.mxu0
        %v2900 = vadd.f32 %v2819, %v2895
        %v2901 = vadd.f32 %v2900, %v2743
        %v2902 = vmax.f32 %v2459, %v2901
        %2903 = vmatprep.subr.bf16.mxu0 0
        %2904 = vmatpush1.bf16.msra.mxu0 %v2042
        %2905 = vmatprep.subr.bf16.mxu0 0
        %2906 = vmatpush1.bf16.msra.mxu0 %v2043
        %2907 = vmatprep.subr.bf16.mxu0 0
        %2908 = vmatpush1.bf16.msra.mxu0 %v2044
        %2909 = vmatprep.subr.bf16.mxu0 0
        %2910 = vmatpush1.bf16.msra.mxu0 %v2045
        %2911 = vmatprep.subr.bf16.mxu0 0
        %2912 = vmatpush1.bf16.msra.mxu0 %v2046
        %2913 = vmatprep.subr.bf16.mxu0 0
        %2914 = vmatpush1.bf16.msra.mxu0 %v2058
        %2915 = vmatprep.subr.bf16.mxu0 0
        %2916 = vmatpush1.bf16.msra.mxu0 0
        %2917 = vmatprep.subr.bf16.mxu0 0
        %2918 = vmatpush1.bf16.msra.mxu0 0
        %2919 = vmatprep.subr.bf16.mxu0 0
        %2920 = vmatpush1.bf16.msra.mxu0 0
        %2921 = vmatprep.subr.bf16.mxu0 0
        %2922 = vmatpush1.bf16.msra.mxu0 0
        %2923 = vmatprep.subr.bf16.mxu0 0
        %2924 = vmatpush1.bf16.msra.mxu0 0
        %2925 = vmatprep.subr.bf16.mxu0 0
        %2926 = vmatpush1.bf16.msra.mxu0 0
        %2927 = vmatprep.subr.bf16.mxu0 0
        %2928 = vmatpush1.bf16.msra.mxu0 0
        %2929 = vmatprep.subr.bf16.mxu0 0
        %2930 = vmatpush1.bf16.msra.mxu0 0
        %2931 = vmatprep.subr.bf16.mxu0 0
        %2932 = vmatpush1.bf16.msra.mxu0 0
        %2933 = vmatprep.subr.bf16.mxu0 0
        %2934 = vmatpush1.bf16.msra.mxu0 0
        %2935 = vmatprep.mubr.bf16.mxu0 0
        %2936 = vmatmul.mubr.bf16.gmra.mrb[0].mxu0 %v2413
        %v2937 = vpop.f32.mrb[0].mxu0
        %v2938 = vadd.f32 0.0, %v2937
        %v2939 = vpop.f32.mrb[0].mxu0
        %v2940 = vpop.f32.mrb[0].mxu0
        %v2941 = vpop.f32.mrb[0].mxu0
        %2942 = vdwg.mxu0
        %2943 = vmatprep.subr.bf16.mxu0 0
        %2944 = vmatpush1.bf16.msra.mxu0 %v2150
        %2945 = vmatprep.subr.bf16.mxu0 0
        %2946 = vmatpush1.bf16.msra.mxu0 %v2151
        %2947 = vmatprep.subr.bf16.mxu0 0
        %2948 = vmatpush1.bf16.msra.mxu0 %v2152
        %2949 = vmatprep.subr.bf16.mxu0 0
        %2950 = vmatpush1.bf16.msra.mxu0 %v2153
        %2951 = vmatprep.subr.bf16.mxu0 0
        %2952 = vmatpush1.bf16.msra.mxu0 %v2154
        %2953 = vmatprep.subr.bf16.mxu0 0
        %2954 = vmatpush1.bf16.msra.mxu0 %v2165
        %2955 = vmatprep.subr.bf16.mxu0 0
        %2956 = vmatpush1.bf16.msra.mxu0 0
        %2957 = vmatprep.subr.bf16.mxu0 0
        %2958 = vmatpush1.bf16.msra.mxu0 0
        %2959 = vmatprep.subr.bf16.mxu0 0
        %2960 = vmatpush1.bf16.msra.mxu0 0
        %2961 = vmatprep.subr.bf16.mxu0 0
        %2962 = vmatpush1.bf16.msra.mxu0 0
        %2963 = vmatprep.subr.bf16.mxu0 0
        %2964 = vmatpush1.bf16.msra.mxu0 0
        %2965 = vmatprep.subr.bf16.mxu0 0
        %2966 = vmatpush1.bf16.msra.mxu0 0
        %2967 = vmatprep.subr.bf16.mxu0 0
        %2968 = vmatpush1.bf16.msra.mxu0 0
        %2969 = vmatprep.subr.bf16.mxu0 0
        %2970 = vmatpush1.bf16.msra.mxu0 0
        %2971 = vmatprep.subr.bf16.mxu0 0
        %2972 = vmatpush1.bf16.msra.mxu0 0
        %2973 = vmatprep.subr.bf16.mxu0 0
        %2974 = vmatpush1.bf16.msra.mxu0 0
        %2975 = vmatprep.mubr.bf16.mxu0 0
        %2976 = vmatmul.mubr.bf16.gmra.mrb[0].mxu0 %v2255
        %v2977 = vpop.f32.mrb[0].mxu0
        %v2978 = vadd.f32 0.0, %v2977
        %v2979 = vpop.f32.mrb[0].mxu0
        %v2980 = vpop.f32.mrb[0].mxu0
        %v2981 = vpop.f32.mrb[0].mxu0
        %2982 = vdwg.mxu0
        %v2983 = vld [vmem:[#allocation2 + $0xa] sm:$0xff]
        %v2984 = vpack.c.bf16 %v2983, %v2983
        %v2986 = vsel %vm1989, %v2984, 0
        %2988 = vmatprep.subr.bf16.mxu0 0
        %2989 = vmatpush1.bf16.msra.mxu0 %v2243
        %2990 = vmatprep.subr.bf16.mxu0 0
        %2991 = vmatpush1.bf16.msra.mxu0 %v2244
        %2992 = vmatprep.subr.bf16.mxu0 0
        %2993 = vmatpush1.bf16.msra.mxu0 %v2245
        %2994 = vmatprep.subr.bf16.mxu0 0
        %2995 = vmatpush1.bf16.msra.mxu0 %v2246
        %2996 = vmatprep.subr.bf16.mxu0 0
        %2997 = vmatpush1.bf16.msra.mxu0 %v2247
        %2998 = vmatprep.subr.bf16.mxu0 0
        %2999 = vmatpush1.bf16.msra.mxu0 %v2258
        %3000 = vmatprep.subr.bf16.mxu0 0
        %3001 = vmatpush1.bf16.msra.mxu0 0
        %3002 = vmatprep.subr.bf16.mxu0 0
        %3003 = vmatpush1.bf16.msra.mxu0 0
        %3004 = vmatprep.subr.bf16.mxu0 0
        %3005 = vmatpush1.bf16.msra.mxu0 0
        %3006 = vmatprep.subr.bf16.mxu0 0
        %3007 = vmatpush1.bf16.msra.mxu0 0
        %3008 = vmatprep.subr.bf16.mxu0 0
        %3009 = vmatpush1.bf16.msra.mxu0 0
        %3010 = vmatprep.subr.bf16.mxu0 0
        %3011 = vmatpush1.bf16.msra.mxu0 0
        %3012 = vmatprep.subr.bf16.mxu0 0
        %3013 = vmatpush1.bf16.msra.mxu0 0
        %3014 = vmatprep.subr.bf16.mxu0 0
        %3015 = vmatpush1.bf16.msra.mxu0 0
        %3016 = vmatprep.subr.bf16.mxu0 0
        %3017 = vmatpush1.bf16.msra.mxu0 0
        %3018 = vmatprep.subr.bf16.mxu0 0
        %3019 = vmatpush1.bf16.msra.mxu0 0
        %3020 = vmatprep.mubr.bf16.mxu0 0
        %3021 = vmatmul.mubr.bf16.gmra.mrb[0].mxu0 %v2986
        %v3022 = vpop.f32.mrb[0].mxu0
        %v3023 = vadd.f32 0.0, %v3022
        %v3024 = vpop.f32.mrb[0].mxu0
        %v3025 = vpop.f32.mrb[0].mxu0
        %v3026 = vpop.f32.mrb[0].mxu0
        %3027 = vdwg.mxu0
        %3028 = vmatprep.subr.bf16.mxu0 0
        %3029 = vmatpush1.bf16.msra.mxu0 %v2322
        %3030 = vmatprep.subr.bf16.mxu0 0
        %3031 = vmatpush1.bf16.msra.mxu0 %v2323
        %3032 = vmatprep.subr.bf16.mxu0 0
        %3033 = vmatpush1.bf16.msra.mxu0 %v2324
        %3034 = vmatprep.subr.bf16.mxu0 0
        %3035 = vmatpush1.bf16.msra.mxu0 %v2325
        %3036 = vmatprep.subr.bf16.mxu0 0
        %3037 = vmatpush1.bf16.msra.mxu0 %v2326
        %3038 = vmatprep.subr.bf16.mxu0 0
        %3039 = vmatpush1.bf16.msra.mxu0 %v2337
        %3040 = vmatprep.subr.bf16.mxu0 0
        %3041 = vmatpush1.bf16.msra.mxu0 0
        %3042 = vmatprep.subr.bf16.mxu0 0
        %3043 = vmatpush1.bf16.msra.mxu0 0
        %3044 = vmatprep.subr.bf16.mxu0 0
        %3045 = vmatpush1.bf16.msra.mxu0 0
        %3046 = vmatprep.subr.bf16.mxu0 0
        %3047 = vmatpush1.bf16.msra.mxu0 0
        %3048 = vmatprep.subr.bf16.mxu0 0
        %3049 = vmatpush1.bf16.msra.mxu0 0
        %3050 = vmatprep.subr.bf16.mxu0 0
        %3051 = vmatpush1.bf16.msra.mxu0 0
        %3052 = vmatprep.subr.bf16.mxu0 0
        %3053 = vmatpush1.bf16.msra.mxu0 0
        %3054 = vmatprep.subr.bf16.mxu0 0
        %3055 = vmatpush1.bf16.msra.mxu0 0
        %3056 = vmatprep.subr.bf16.mxu0 0
        %3057 = vmatpush1.bf16.msra.mxu0 0
        %3058 = vmatprep.subr.bf16.mxu0 0
        %3059 = vmatpush1.bf16.msra.mxu0 0
        %3060 = vmatprep.mubr.bf16.mxu0 0
        %3061 = vmatmul.mubr.bf16.gmra.mrb[0].mxu0 %v2054
        %v3062 = vpop.f32.mrb[0].mxu0
        %v3063 = vadd.f32 %v2938, %v3062
        %v3064 = vpop.f32.mrb[0].mxu0
        %v3065 = vpop.f32.mrb[0].mxu0
        %v3066 = vpop.f32.mrb[0].mxu0
        %3067 = vdwg.mxu0
        %3068 = vmatprep.subr.bf16.mxu0 0
        %3069 = vmatpush1.bf16.msra.mxu0 %v2401
        %3070 = vmatprep.subr.bf16.mxu0 0
        %3071 = vmatpush1.bf16.msra.mxu0 %v2402
        %3072 = vmatprep.subr.bf16.mxu0 0
        %3073 = vmatpush1.bf16.msra.mxu0 %v2403
        %3074 = vmatprep.subr.bf16.mxu0 0
        %3075 = vmatpush1.bf16.msra.mxu0 %v2404
        %3076 = vmatprep.subr.bf16.mxu0 0
        %3077 = vmatpush1.bf16.msra.mxu0 %v2405
        %3078 = vmatprep.subr.bf16.mxu0 0
        %3079 = vmatpush1.bf16.msra.mxu0 %v2416
        %3080 = vmatprep.subr.bf16.mxu0 0
        %3081 = vmatpush1.bf16.msra.mxu0 0
        %3082 = vmatprep.subr.bf16.mxu0 0
        %3083 = vmatpush1.bf16.msra.mxu0 0
        %3084 = vmatprep.subr.bf16.mxu0 0
        %3085 = vmatpush1.bf16.msra.mxu0 0
        %3086 = vmatprep.subr.bf16.mxu0 0
        %3087 = vmatpush1.bf16.msra.mxu0 0
        %3088 = vmatprep.subr.bf16.mxu0 0
        %3089 = vmatpush1.bf16.msra.mxu0 0
        %3090 = vmatprep.subr.bf16.mxu0 0
        %3091 = vmatpush1.bf16.msra.mxu0 0
        %3092 = vmatprep.subr.bf16.mxu0 0
        %3093 = vmatpush1.bf16.msra.mxu0 0
        %3094 = vmatprep.subr.bf16.mxu0 0
        %3095 = vmatpush1.bf16.msra.mxu0 0
        %3096 = vmatprep.subr.bf16.mxu0 0
        %3097 = vmatpush1.bf16.msra.mxu0 0
        %3098 = vmatprep.subr.bf16.mxu0 0
        %3099 = vmatpush1.bf16.msra.mxu0 0
        %3100 = vmatprep.mubr.bf16.mxu0 0
        %3101 = vmatmul.mubr.bf16.gmra.mrb[0].mxu0 %v2162
        %v3102 = vpop.f32.mrb[0].mxu0
        %v3103 = vadd.f32 %v2978, %v3102
        %v3104 = vpop.f32.mrb[0].mxu0
        %v3105 = vpop.f32.mrb[0].mxu0
        %v3106 = vpop.f32.mrb[0].mxu0
        %3107 = vdwg.mxu0
        %v3108 = vadd.f32 %v3063, %v3103
        %v3109 = vadd.f32 %v3108, %v3023
        %v3110 = vmax.f32 %v2902, %v3109
        %3111 = vmatprep.subr.bf16.mxu0 0
        %3112 = vmatpush1.bf16.msra.mxu0 %v2506
        %3113 = vmatprep.subr.bf16.mxu0 0
        %3114 = vmatpush1.bf16.msra.mxu0 %v2507
        %3115 = vmatprep.subr.bf16.mxu0 0
        %3116 = vmatpush1.bf16.msra.mxu0 %v2508
        %3117 = vmatprep.subr.bf16.mxu0 0
        %3118 = vmatpush1.bf16.msra.mxu0 %v2509
        %3119 = vmatprep.subr.bf16.mxu0 0
        %3120 = vmatpush1.bf16.msra.mxu0 %v2510
        %3121 = vmatprep.subr.bf16.mxu0 0
        %3122 = vmatpush1.bf16.msra.mxu0 %v2518
        %3123 = vmatprep.subr.bf16.mxu0 0
        %3124 = vmatpush1.bf16.msra.mxu0 0
        %3125 = vmatprep.subr.bf16.mxu0 0
        %3126 = vmatpush1.bf16.msra.mxu0 0
        %3127 = vmatprep.subr.bf16.mxu0 0
        %3128 = vmatpush1.bf16.msra.mxu0 0
        %3129 = vmatprep.subr.bf16.mxu0 0
        %3130 = vmatpush1.bf16.msra.mxu0 0
        %3131 = vmatprep.subr.bf16.mxu0 0
        %3132 = vmatpush1.bf16.msra.mxu0 0
        %3133 = vmatprep.subr.bf16.mxu0 0
        %3134 = vmatpush1.bf16.msra.mxu0 0
        %3135 = vmatprep.subr.bf16.mxu0 0
        %3136 = vmatpush1.bf16.msra.mxu0 0
        %3137 = vmatprep.subr.bf16.mxu0 0
        %3138 = vmatpush1.bf16.msra.mxu0 0
        %3139 = vmatprep.subr.bf16.mxu0 0
        %3140 = vmatpush1.bf16.msra.mxu0 0
        %3141 = vmatprep.subr.bf16.mxu0 0
        %3142 = vmatpush1.bf16.msra.mxu0 0
        %3143 = vmatprep.mubr.bf16.mxu0 0
        %3144 = vmatmul.mubr.bf16.gmra.mrb[0].mxu0 %v2413
        %v3145 = vpop.f32.mrb[0].mxu0
        %v3146 = vadd.f32 0.0, %v3145
        %v3147 = vpop.f32.mrb[0].mxu0
        %v3148 = vpop.f32.mrb[0].mxu0
        %v3149 = vpop.f32.mrb[0].mxu0
        %3150 = vdwg.mxu0
        %3151 = vmatprep.subr.bf16.mxu0 0
        %3152 = vmatpush1.bf16.msra.mxu0 %v2606
        %3153 = vmatprep.subr.bf16.mxu0 0
        %3154 = vmatpush1.bf16.msra.mxu0 %v2607
        %3155 = vmatprep.subr.bf16.mxu0 0
        %3156 = vmatpush1.bf16.msra.mxu0 %v2608
        %3157 = vmatprep.subr.bf16.mxu0 0
        %3158 = vmatpush1.bf16.msra.mxu0 %v2609
        %3159 = vmatprep.subr.bf16.mxu0 0
        %3160 = vmatpush1.bf16.msra.mxu0 %v2610
        %3161 = vmatprep.subr.bf16.mxu0 0
        %3162 = vmatpush1.bf16.msra.mxu0 %v2618
        %3163 = vmatprep.subr.bf16.mxu0 0
        %3164 = vmatpush1.bf16.msra.mxu0 0
        %3165 = vmatprep.subr.bf16.mxu0 0
        %3166 = vmatpush1.bf16.msra.mxu0 0
        %3167 = vmatprep.subr.bf16.mxu0 0
        %3168 = vmatpush1.bf16.msra.mxu0 0
        %3169 = vmatprep.subr.bf16.mxu0 0
        %3170 = vmatpush1.bf16.msra.mxu0 0
        %3171 = vmatprep.subr.bf16.mxu0 0
        %3172 = vmatpush1.bf16.msra.mxu0 0
        %3173 = vmatprep.subr.bf16.mxu0 0
        %3174 = vmatpush1.bf16.msra.mxu0 0
        %3175 = vmatprep.subr.bf16.mxu0 0
        %3176 = vmatpush1.bf16.msra.mxu0 0
        %3177 = vmatprep.subr.bf16.mxu0 0
        %3178 = vmatpush1.bf16.msra.mxu0 0
        %3179 = vmatprep.subr.bf16.mxu0 0
        %3180 = vmatpush1.bf16.msra.mxu0 0
        %3181 = vmatprep.subr.bf16.mxu0 0
        %3182 = vmatpush1.bf16.msra.mxu0 0
        %3183 = vmatprep.mubr.bf16.mxu0 0
        %3184 = vmatmul.mubr.bf16.gmra.mrb[0].mxu0 %v2255
        %v3185 = vpop.f32.mrb[0].mxu0
        %v3186 = vadd.f32 0.0, %v3185
        %v3187 = vpop.f32.mrb[0].mxu0
        %v3188 = vpop.f32.mrb[0].mxu0
        %v3189 = vpop.f32.mrb[0].mxu0
        %3190 = vdwg.mxu0
        %3191 = vmatprep.subr.bf16.mxu0 0
        %3192 = vmatpush1.bf16.msra.mxu0 %v2694
        %3193 = vmatprep.subr.bf16.mxu0 0
        %3194 = vmatpush1.bf16.msra.mxu0 %v2695
        %3195 = vmatprep.subr.bf16.mxu0 0
        %3196 = vmatpush1.bf16.msra.mxu0 %v2696
        %3197 = vmatprep.subr.bf16.mxu0 0
        %3198 = vmatpush1.bf16.msra.mxu0 %v2697
        %3199 = vmatprep.subr.bf16.mxu0 0
        %3200 = vmatpush1.bf16.msra.mxu0 %v2698
        %3201 = vmatprep.subr.bf16.mxu0 0
        %3202 = vmatpush1.bf16.msra.mxu0 %v2706
        %3203 = vmatprep.subr.bf16.mxu0 0
        %3204 = vmatpush1.bf16.msra.mxu0 0
        %3205 = vmatprep.subr.bf16.mxu0 0
        %3206 = vmatpush1.bf16.msra.mxu0 0
        %3207 = vmatprep.subr.bf16.mxu0 0
        %3208 = vmatpush1.bf16.msra.mxu0 0
        %3209 = vmatprep.subr.bf16.mxu0 0
        %3210 = vmatpush1.bf16.msra.mxu0 0
        %3211 = vmatprep.subr.bf16.mxu0 0
        %3212 = vmatpush1.bf16.msra.mxu0 0
        %3213 = vmatprep.subr.bf16.mxu0 0
        %3214 = vmatpush1.bf16.msra.mxu0 0
        %3215 = vmatprep.subr.bf16.mxu0 0
        %3216 = vmatpush1.bf16.msra.mxu0 0
        %3217 = vmatprep.subr.bf16.mxu0 0
        %3218 = vmatpush1.bf16.msra.mxu0 0
        %3219 = vmatprep.subr.bf16.mxu0 0
        %3220 = vmatpush1.bf16.msra.mxu0 0
        %3221 = vmatprep.subr.bf16.mxu0 0
        %3222 = vmatpush1.bf16.msra.mxu0 0
        %3223 = vmatprep.mubr.bf16.mxu0 0
        %3224 = vmatmul.mubr.bf16.gmra.mrb[0].mxu0 %v2986
        %v3225 = vpop.f32.mrb[0].mxu0
        %v3226 = vadd.f32 0.0, %v3225
        %v3227 = vpop.f32.mrb[0].mxu0
        %v3228 = vpop.f32.mrb[0].mxu0
        %v3229 = vpop.f32.mrb[0].mxu0
        %3230 = vdwg.mxu0
        %3231 = vmatprep.subr.bf16.mxu0 0
        %3232 = vmatpush1.bf16.msra.mxu0 %v2770
        %3233 = vmatprep.subr.bf16.mxu0 0
        %3234 = vmatpush1.bf16.msra.mxu0 %v2771
        %3235 = vmatprep.subr.bf16.mxu0 0
        %3236 = vmatpush1.bf16.msra.mxu0 %v2772
        %3237 = vmatprep.subr.bf16.mxu0 0
        %3238 = vmatpush1.bf16.msra.mxu0 %v2773
        %3239 = vmatprep.subr.bf16.mxu0 0
        %3240 = vmatpush1.bf16.msra.mxu0 %v2774
        %3241 = vmatprep.subr.bf16.mxu0 0
        %3242 = vmatpush1.bf16.msra.mxu0 %v2782
        %3243 = vmatprep.subr.bf16.mxu0 0
        %3244 = vmatpush1.bf16.msra.mxu0 0
        %3245 = vmatprep.subr.bf16.mxu0 0
        %3246 = vmatpush1.bf16.msra.mxu0 0
        %3247 = vmatprep.subr.bf16.mxu0 0
        %3248 = vmatpush1.bf16.msra.mxu0 0
        %3249 = vmatprep.subr.bf16.mxu0 0
        %3250 = vmatpush1.bf16.msra.mxu0 0
        %3251 = vmatprep.subr.bf16.mxu0 0
        %3252 = vmatpush1.bf16.msra.mxu0 0
        %3253 = vmatprep.subr.bf16.mxu0 0
        %3254 = vmatpush1.bf16.msra.mxu0 0
        %3255 = vmatprep.subr.bf16.mxu0 0
        %3256 = vmatpush1.bf16.msra.mxu0 0
        %3257 = vmatprep.subr.bf16.mxu0 0
        %3258 = vmatpush1.bf16.msra.mxu0 0
        %3259 = vmatprep.subr.bf16.mxu0 0
        %3260 = vmatpush1.bf16.msra.mxu0 0
        %3261 = vmatprep.subr.bf16.mxu0 0
        %3262 = vmatpush1.bf16.msra.mxu0 0
        %3263 = vmatprep.mubr.bf16.mxu0 0
        %3264 = vmatmul.mubr.bf16.gmra.mrb[0].mxu0 %v2054
        %v3265 = vpop.f32.mrb[0].mxu0
        %v3266 = vadd.f32 %v3146, %v3265
        %v3267 = vpop.f32.mrb[0].mxu0
        %v3268 = vpop.f32.mrb[0].mxu0
        %v3269 = vpop.f32.mrb[0].mxu0
        %3270 = vdwg.mxu0
        %3271 = vmatprep.subr.bf16.mxu0 0
        %3272 = vmatpush1.bf16.msra.mxu0 %v2846
        %3273 = vmatprep.subr.bf16.mxu0 0
        %3274 = vmatpush1.bf16.msra.mxu0 %v2847
        %3275 = vmatprep.subr.bf16.mxu0 0
        %3276 = vmatpush1.bf16.msra.mxu0 %v2848
        %3277 = vmatprep.subr.bf16.mxu0 0
        %3278 = vmatpush1.bf16.msra.mxu0 %v2849
        %3279 = vmatprep.subr.bf16.mxu0 0
        %3280 = vmatpush1.bf16.msra.mxu0 %v2850
        %3281 = vmatprep.subr.bf16.mxu0 0
        %3282 = vmatpush1.bf16.msra.mxu0 %v2858
        %3283 = vmatprep.subr.bf16.mxu0 0
        %3284 = vmatpush1.bf16.msra.mxu0 0
        %3285 = vmatprep.subr.bf16.mxu0 0
        %3286 = vmatpush1.bf16.msra.mxu0 0
        %3287 = vmatprep.subr.bf16.mxu0 0
        %3288 = vmatpush1.bf16.msra.mxu0 0
        %3289 = vmatprep.subr.bf16.mxu0 0
        %3290 = vmatpush1.bf16.msra.mxu0 0
        %3291 = vmatprep.subr.bf16.mxu0 0
        %3292 = vmatpush1.bf16.msra.mxu0 0
        %3293 = vmatprep.subr.bf16.mxu0 0
        %3294 = vmatpush1.bf16.msra.mxu0 0
        %3295 = vmatprep.subr.bf16.mxu0 0
        %3296 = vmatpush1.bf16.msra.mxu0 0
        %3297 = vmatprep.subr.bf16.mxu0 0
        %3298 = vmatpush1.bf16.msra.mxu0 0
        %3299 = vmatprep.subr.bf16.mxu0 0
        %3300 = vmatpush1.bf16.msra.mxu0 0
        %3301 = vmatprep.subr.bf16.mxu0 0
        %3302 = vmatpush1.bf16.msra.mxu0 0
        %3303 = vmatprep.mubr.bf16.mxu0 0
        %3304 = vmatmul.mubr.bf16.gmra.mrb[0].mxu0 %v2162
        %v3305 = vpop.f32.mrb[0].mxu0
        %v3306 = vadd.f32 %v3186, %v3305
        %v3307 = vpop.f32.mrb[0].mxu0
        %v3308 = vpop.f32.mrb[0].mxu0
        %v3309 = vpop.f32.mrb[0].mxu0
        %3310 = vdwg.mxu0
        %v3311 = vadd.f32 %v3266, %v3306
        %v3312 = vadd.f32 %v3311, %v3226
        %v3313 = vmax.f32 %v3110, %v3312
        %v3314 = vld [vmem:[%s4] sm:$0x1]
        %v3316 = vlaneseq
        %v3317 = vshrl.u32 %v3316, 7
        %v3318 = vsub.s32 0, %v3317
        %v3319 = vrot.slane %v3314, %v3318
        %v3321 = vadd.f32 %v3313, %v3319
        %v3322 = vmax.f32 %v3321, 0.0
        %vm3323 = vcmask 916480
        %3324 = vst.msk [vmem:[#allocation3] sm:$0xff] %vm3323, %v3322
        %3325 = vst.msk [vmem:[#allocation3 + $0x8] sm:$0xff] %vm3323, 0.0
        %v3326 = vld [vmem:[#allocation3] sm:$0xff]
        %v3327 = vpack.c.bf16 %v3326, %v3326
        %v3328 = vld [vmem:[%s5] sm:$0xf]
        %v3329 = vld [vmem:[%s5 + $0x4] sm:$0xf]
        %v3330 = vld [vmem:[%s5 + $0x8] sm:$0xf]
        %v3331 = vld [vmem:[%s5 + $0xc] sm:$0xf]
        %v3332 = vld [vmem:[%s5 + $0x10] sm:$0xf]
        %v3333 = vld [vmem:[%s5 + $0x14] sm:$0xf]
        %v3334 = vld [vmem:[%s5 + $0x18] sm:$0xf]
        %v3335 = vld [vmem:[%s5 + $0x1c] sm:$0xf]
        %v3336 = vld [vmem:[%s5 + $0x20] sm:$0xf]
        %v3337 = vld [vmem:[%s5 + $0x24] sm:$0xf]
        %v3338 = vld [vmem:[%s5 + $0x28] sm:$0xf]
        %v3339 = vld [vmem:[%s5 + $0x2c] sm:$0xf]
        %v3340 = vld [vmem:[%s5 + $0x30] sm:$0xf]
        %v3341 = vld [vmem:[%s5 + $0x34] sm:$0xf]
        %v3342 = vld [vmem:[#allocation3 + $0x1] sm:$0xff]
        %v3343 = vpack.c.bf16 %v3342, %v3342
        %s3344 = scalar_lea.vmem %s5, 56
        %v3345 = vld [vmem:[%s3344] sm:$0xf]
        %v3346 = vld [vmem:[%s3344 + $0x4] sm:$0xf]
        %v3347 = vld [vmem:[%s3344 + $0x8] sm:$0xf]
        %v3348 = vld [vmem:[%s3344 + $0xc] sm:$0xf]
        %v3349 = vld [vmem:[%s3344 + $0x10] sm:$0xf]
        %v3350 = vld [vmem:[%s3344 + $0x14] sm:$0xf]
        %v3351 = vld [vmem:[%s3344 + $0x18] sm:$0xf]
        %v3352 = vld [vmem:[%s3344 + $0x1c] sm:$0xf]
        %v3353 = vld [vmem:[%s3344 + $0x20] sm:$0xf]
        %v3354 = vld [vmem:[%s3344 + $0x24] sm:$0xf]
        %v3355 = vld [vmem:[%s3344 + $0x28] sm:$0xf]
        %v3356 = vld [vmem:[%s3344 + $0x2c] sm:$0xf]
        %v3357 = vld [vmem:[%s3344 + $0x30] sm:$0xf]
        %v3358 = vld [vmem:[%s3344 + $0x34] sm:$0xf]
        %v3373 = vunpack.c.l.b16 %v3345
        %v3374 = vunpack.c.l.b16 %v3346
        %v3375 = vunpack.c.l.b16 %v3347
        %v3376 = vunpack.c.l.b16 %v3348
        %v3377 = vunpack.c.l.b16 %v3349
        %v3378 = vunpack.c.l.b16 %v3350
        %v3379 = vunpack.c.l.b16 %v3351
        %v3380 = vunpack.c.l.b16 %v3352
        %v3381 = vunpack.c.l.b16 %v3353
        %v3382 = vunpack.c.l.b16 %v3354
        %v3383 = vunpack.c.l.b16 %v3355
        %v3384 = vunpack.c.l.b16 %v3356
        %v3385 = vunpack.c.l.b16 %v3357
        %v3386 = vunpack.c.l.b16 %v3358
        %v3387 = vpack.c.b16 %v3374, %v3373
        %v3388 = vpack.c.b16 %v3376, %v3375
        %v3389 = vpack.c.b16 %v3378, %v3377
        %v3390 = vpack.c.b16 %v3380, %v3379
        %v3391 = vpack.c.b16 %v3382, %v3381
        %v3392 = vpack.c.b16 %v3384, %v3383
        %v3393 = vpack.c.b16 %v3386, %v3385
        %v3402 = vsel %vm3323, %v3343, 0
        %3404 = vmatprep.subr.bf16.mxu0 0
        %3405 = vmatpush1.bf16.msra.mxu0 %v3387
        %3406 = vmatprep.subr.bf16.mxu0 0
        %3407 = vmatpush1.bf16.msra.mxu0 %v3388
        %3408 = vmatprep.subr.bf16.mxu0 0
        %3409 = vmatpush1.bf16.msra.mxu0 %v3389
        %3410 = vmatprep.subr.bf16.mxu0 0
        %3411 = vmatpush1.bf16.msra.mxu0 %v3390
        %3412 = vmatprep.subr.bf16.mxu0 0
        %3413 = vmatpush1.bf16.msra.mxu0 %v3391
        %3414 = vmatprep.subr.bf16.mxu0 0
        %3415 = vmatpush1.bf16.msra.mxu0 %v3392
        %3416 = vmatprep.subr.bf16.mxu0 0
        %3417 = vmatpush1.bf16.msra.mxu0 %v3393
        %3418 = vmatprep.subr.bf16.mxu0 0
        %3419 = vmatpush1.bf16.msra.mxu0 0
        %3420 = vmatprep.subr.bf16.mxu0 0
        %3421 = vmatpush1.bf16.msra.mxu0 0
        %3422 = vmatprep.subr.bf16.mxu0 0
        %3423 = vmatpush1.bf16.msra.mxu0 0
        %3424 = vmatprep.subr.bf16.mxu0 0
        %3425 = vmatpush1.bf16.msra.mxu0 0
        %3426 = vmatprep.subr.bf16.mxu0 0
        %3427 = vmatpush1.bf16.msra.mxu0 0
        %3428 = vmatprep.subr.bf16.mxu0 0
        %3429 = vmatpush1.bf16.msra.mxu0 0
        %3430 = vmatprep.subr.bf16.mxu0 0
        %3431 = vmatpush1.bf16.msra.mxu0 0
        %3432 = vmatprep.subr.bf16.mxu0 0
        %3433 = vmatpush1.bf16.msra.mxu0 0
        %3434 = vmatprep.subr.bf16.mxu0 0
        %3435 = vmatpush1.bf16.msra.mxu0 0
        %3436 = vmatprep.mubr.bf16.mxu0 0
        %3437 = vmatmul.mubr.bf16.gmra.mrb[0].mxu0 %v3402
        %v3438 = vpop.f32.mrb[0].mxu0
        %v3439 = vadd.f32 0.0, %v3438
        %v3440 = vpop.f32.mrb[0].mxu0
        %v3441 = vpop.f32.mrb[0].mxu0
        %v3442 = vpop.f32.mrb[0].mxu0
        %3443 = vdwg.mxu0
        %v3444 = vld [vmem:[#allocation3 + $0x2] sm:$0xff]
        %v3445 = vpack.c.bf16 %v3444, %v3444
        %s3446 = scalar_lea.vmem %s5, 112
        %v3447 = vld [vmem:[%s3446] sm:$0xf]
        %v3448 = vld [vmem:[%s3446 + $0x4] sm:$0xf]
        %v3449 = vld [vmem:[%s3446 + $0x8] sm:$0xf]
        %v3450 = vld [vmem:[%s3446 + $0xc] sm:$0xf]
        %v3451 = vld [vmem:[%s3446 + $0x10] sm:$0xf]
        %v3452 = vld [vmem:[%s3446 + $0x14] sm:$0xf]
        %v3453 = vld [vmem:[%s3446 + $0x18] sm:$0xf]
        %v3454 = vld [vmem:[%s3446 + $0x1c] sm:$0xf]
        %v3455 = vld [vmem:[%s3446 + $0x20] sm:$0xf]
        %v3456 = vld [vmem:[%s3446 + $0x24] sm:$0xf]
        %v3457 = vld [vmem:[%s3446 + $0x28] sm:$0xf]
        %v3458 = vld [vmem:[%s3446 + $0x2c] sm:$0xf]
        %v3459 = vld [vmem:[%s3446 + $0x30] sm:$0xf]
        %v3460 = vld [vmem:[%s3446 + $0x34] sm:$0xf]
        %v3461 = vld [vmem:[#allocation3 + $0x3] sm:$0xff]
        %v3462 = vpack.c.bf16 %v3461, %v3461
        %s3463 = scalar_lea.vmem %s5, 168
        %v3464 = vld [vmem:[%s3463] sm:$0xf]
        %v3465 = vld [vmem:[%s3463 + $0x4] sm:$0xf]
        %v3466 = vld [vmem:[%s3463 + $0x8] sm:$0xf]
        %v3467 = vld [vmem:[%s3463 + $0xc] sm:$0xf]
        %v3468 = vld [vmem:[%s3463 + $0x10] sm:$0xf]
        %v3469 = vld [vmem:[%s3463 + $0x14] sm:$0xf]
        %v3470 = vld [vmem:[%s3463 + $0x18] sm:$0xf]
        %v3471 = vld [vmem:[%s3463 + $0x1c] sm:$0xf]
        %v3472 = vld [vmem:[%s3463 + $0x20] sm:$0xf]
        %v3473 = vld [vmem:[%s3463 + $0x24] sm:$0xf]
        %v3474 = vld [vmem:[%s3463 + $0x28] sm:$0xf]
        %v3475 = vld [vmem:[%s3463 + $0x2c] sm:$0xf]
        %v3476 = vld [vmem:[%s3463 + $0x30] sm:$0xf]
        %v3477 = vld [vmem:[%s3463 + $0x34] sm:$0xf]
        %v3492 = vunpack.c.l.b16 %v3464
        %v3493 = vunpack.c.l.b16 %v3465
        %v3494 = vunpack.c.l.b16 %v3466
        %v3495 = vunpack.c.l.b16 %v3467
        %v3496 = vunpack.c.l.b16 %v3468
        %v3497 = vunpack.c.l.b16 %v3469
        %v3498 = vunpack.c.l.b16 %v3470
        %v3499 = vunpack.c.l.b16 %v3471
        %v3500 = vunpack.c.l.b16 %v3472
        %v3501 = vunpack.c.l.b16 %v3473
        %v3502 = vunpack.c.l.b16 %v3474
        %v3503 = vunpack.c.l.b16 %v3475
        %v3504 = vunpack.c.l.b16 %v3476
        %v3505 = vunpack.c.l.b16 %v3477
        %v3506 = vpack.c.b16 %v3493, %v3492
        %v3507 = vpack.c.b16 %v3495, %v3494
        %v3508 = vpack.c.b16 %v3497, %v3496
        %v3509 = vpack.c.b16 %v3499, %v3498
        %v3510 = vpack.c.b16 %v3501, %v3500
        %v3511 = vpack.c.b16 %v3503, %v3502
        %v3512 = vpack.c.b16 %v3505, %v3504
        %v3521 = vsel %vm3323, %v3462, 0
        %3523 = vmatprep.subr.bf16.mxu0 0
        %3524 = vmatpush1.bf16.msra.mxu0 %v3506
        %3525 = vmatprep.subr.bf16.mxu0 0
        %3526 = vmatpush1.bf16.msra.mxu0 %v3507
        %3527 = vmatprep.subr.bf16.mxu0 0
        %3528 = vmatpush1.bf16.msra.mxu0 %v3508
        %3529 = vmatprep.subr.bf16.mxu0 0
        %3530 = vmatpush1.bf16.msra.mxu0 %v3509
        %3531 = vmatprep.subr.bf16.mxu0 0
        %3532 = vmatpush1.bf16.msra.mxu0 %v3510
        %3533 = vmatprep.subr.bf16.mxu0 0
        %3534 = vmatpush1.bf16.msra.mxu0 %v3511
        %3535 = vmatprep.subr.bf16.mxu0 0
        %3536 = vmatpush1.bf16.msra.mxu0 %v3512
        %3537 = vmatprep.subr.bf16.mxu0 0
        %3538 = vmatpush1.bf16.msra.mxu0 0
        %3539 = vmatprep.subr.bf16.mxu0 0
        %3540 = vmatpush1.bf16.msra.mxu0 0
        %3541 = vmatprep.subr.bf16.mxu0 0
        %3542 = vmatpush1.bf16.msra.mxu0 0
        %3543 = vmatprep.subr.bf16.mxu0 0
        %3544 = vmatpush1.bf16.msra.mxu0 0
        %3545 = vmatprep.subr.bf16.mxu0 0
        %3546 = vmatpush1.bf16.msra.mxu0 0
        %3547 = vmatprep.subr.bf16.mxu0 0
        %3548 = vmatpush1.bf16.msra.mxu0 0
        %3549 = vmatprep.subr.bf16.mxu0 0
        %3550 = vmatpush1.bf16.msra.mxu0 0
        %3551 = vmatprep.subr.bf16.mxu0 0
        %3552 = vmatpush1.bf16.msra.mxu0 0
        %3553 = vmatprep.subr.bf16.mxu0 0
        %3554 = vmatpush1.bf16.msra.mxu0 0
        %3555 = vmatprep.mubr.bf16.mxu0 0
        %3556 = vmatmul.mubr.bf16.gmra.mrb[0].mxu0 %v3521
        %v3557 = vpop.f32.mrb[0].mxu0
        %v3558 = vadd.f32 0.0, %v3557
        %v3559 = vpop.f32.mrb[0].mxu0
        %v3560 = vpop.f32.mrb[0].mxu0
        %v3561 = vpop.f32.mrb[0].mxu0
        %3562 = vdwg.mxu0
        %v3563 = vld [vmem:[#allocation3 + $0x4] sm:$0xff]
        %v3564 = vpack.c.bf16 %v3563, %v3563
        %s3565 = scalar_lea.vmem %s5, 224
        %v3566 = vld [vmem:[%s3565] sm:$0xf]
        %v3567 = vld [vmem:[%s3565 + $0x4] sm:$0xf]
        %v3568 = vld [vmem:[%s3565 + $0x8] sm:$0xf]
        %v3569 = vld [vmem:[%s3565 + $0xc] sm:$0xf]
        %v3570 = vld [vmem:[%s3565 + $0x10] sm:$0xf]
        %v3571 = vld [vmem:[%s3565 + $0x14] sm:$0xf]
        %v3572 = vld [vmem:[%s3565 + $0x18] sm:$0xf]
        %v3573 = vld [vmem:[%s3565 + $0x1c] sm:$0xf]
        %v3574 = vld [vmem:[%s3565 + $0x20] sm:$0xf]
        %v3575 = vld [vmem:[%s3565 + $0x24] sm:$0xf]
        %v3576 = vld [vmem:[%s3565 + $0x28] sm:$0xf]
        %v3577 = vld [vmem:[%s3565 + $0x2c] sm:$0xf]
        %v3578 = vld [vmem:[%s3565 + $0x30] sm:$0xf]
        %v3579 = vld [vmem:[%s3565 + $0x34] sm:$0xf]
        %v3594 = vunpack.c.l.b16 %v3566
        %v3595 = vunpack.c.l.b16 %v3567
        %v3596 = vunpack.c.l.b16 %v3568
        %v3597 = vunpack.c.l.b16 %v3569
        %v3598 = vunpack.c.l.b16 %v3570
        %v3599 = vunpack.c.l.b16 %v3571
        %v3600 = vunpack.c.l.b16 %v3572
        %v3601 = vunpack.c.l.b16 %v3573
        %v3602 = vunpack.c.l.b16 %v3574
        %v3603 = vunpack.c.l.b16 %v3575
        %v3604 = vunpack.c.l.b16 %v3576
        %v3605 = vunpack.c.l.b16 %v3577
        %v3606 = vunpack.c.l.b16 %v3578
        %v3607 = vunpack.c.l.b16 %v3579
        %v3608 = vpack.c.b16 %v3595, %v3594
        %v3609 = vpack.c.b16 %v3597, %v3596
        %v3610 = vpack.c.b16 %v3599, %v3598
        %v3611 = vpack.c.b16 %v3601, %v3600
        %v3612 = vpack.c.b16 %v3603, %v3602
        %v3613 = vpack.c.b16 %v3605, %v3604
        %v3614 = vpack.c.b16 %v3607, %v3606
        %v3623 = vsel %vm3323, %v3564, 0
        %3625 = vmatprep.subr.bf16.mxu0 0
        %3626 = vmatpush1.bf16.msra.mxu0 %v3608
        %3627 = vmatprep.subr.bf16.mxu0 0
        %3628 = vmatpush1.bf16.msra.mxu0 %v3609
        %3629 = vmatprep.subr.bf16.mxu0 0
        %3630 = vmatpush1.bf16.msra.mxu0 %v3610
        %3631 = vmatprep.subr.bf16.mxu0 0
        %3632 = vmatpush1.bf16.msra.mxu0 %v3611
        %3633 = vmatprep.subr.bf16.mxu0 0
        %3634 = vmatpush1.bf16.msra.mxu0 %v3612
        %3635 = vmatprep.subr.bf16.mxu0 0
        %3636 = vmatpush1.bf16.msra.mxu0 %v3613
        %3637 = vmatprep.subr.bf16.mxu0 0
        %3638 = vmatpush1.bf16.msra.mxu0 %v3614
        %3639 = vmatprep.subr.bf16.mxu0 0
        %3640 = vmatpush1.bf16.msra.mxu0 0
        %3641 = vmatprep.subr.bf16.mxu0 0
        %3642 = vmatpush1.bf16.msra.mxu0 0
        %3643 = vmatprep.subr.bf16.mxu0 0
        %3644 = vmatpush1.bf16.msra.mxu0 0
        %3645 = vmatprep.subr.bf16.mxu0 0
        %3646 = vmatpush1.bf16.msra.mxu0 0
        %3647 = vmatprep.subr.bf16.mxu0 0
        %3648 = vmatpush1.bf16.msra.mxu0 0
        %3649 = vmatprep.subr.bf16.mxu0 0
        %3650 = vmatpush1.bf16.msra.mxu0 0
        %3651 = vmatprep.subr.bf16.mxu0 0
        %3652 = vmatpush1.bf16.msra.mxu0 0
        %3653 = vmatprep.subr.bf16.mxu0 0
        %3654 = vmatpush1.bf16.msra.mxu0 0
        %3655 = vmatprep.subr.bf16.mxu0 0
        %3656 = vmatpush1.bf16.msra.mxu0 0
        %3657 = vmatprep.mubr.bf16.mxu0 0
        %3658 = vmatmul.mubr.bf16.gmra.mrb[0].mxu0 %v3623
        %v3659 = vpop.f32.mrb[0].mxu0
        %v3660 = vadd.f32 0.0, %v3659
        %v3661 = vpop.f32.mrb[0].mxu0
        %v3662 = vpop.f32.mrb[0].mxu0
        %v3663 = vpop.f32.mrb[0].mxu0
        %3664 = vdwg.mxu0
        %v3679 = vunpack.c.l.b16 %v3328
        %v3680 = vunpack.c.l.b16 %v3329
        %v3681 = vunpack.c.l.b16 %v3330
        %v3682 = vunpack.c.l.b16 %v3331
        %v3683 = vunpack.c.l.b16 %v3332
        %v3684 = vunpack.c.l.b16 %v3333
        %v3685 = vunpack.c.l.b16 %v3334
        %v3686 = vunpack.c.l.b16 %v3335
        %v3687 = vunpack.c.l.b16 %v3336
        %v3688 = vunpack.c.l.b16 %v3337
        %v3689 = vunpack.c.l.b16 %v3338
        %v3690 = vunpack.c.l.b16 %v3339
        %v3691 = vunpack.c.l.b16 %v3340
        %v3692 = vunpack.c.l.b16 %v3341
        %v3693 = vpack.c.b16 %v3680, %v3679
        %v3694 = vpack.c.b16 %v3682, %v3681
        %v3695 = vpack.c.b16 %v3684, %v3683
        %v3696 = vpack.c.b16 %v3686, %v3685
        %v3697 = vpack.c.b16 %v3688, %v3687
        %v3698 = vpack.c.b16 %v3690, %v3689
        %v3699 = vpack.c.b16 %v3692, %v3691
        %v3708 = vsel %vm3323, %v3327, 0
        %3710 = vmatprep.subr.bf16.mxu0 0
        %3711 = vmatpush1.bf16.msra.mxu0 %v3693
        %3712 = vmatprep.subr.bf16.mxu0 0
        %3713 = vmatpush1.bf16.msra.mxu0 %v3694
        %3714 = vmatprep.subr.bf16.mxu0 0
        %3715 = vmatpush1.bf16.msra.mxu0 %v3695
        %3716 = vmatprep.subr.bf16.mxu0 0
        %3717 = vmatpush1.bf16.msra.mxu0 %v3696
        %3718 = vmatprep.subr.bf16.mxu0 0
        %3719 = vmatpush1.bf16.msra.mxu0 %v3697
        %3720 = vmatprep.subr.bf16.mxu0 0
        %3721 = vmatpush1.bf16.msra.mxu0 %v3698
        %3722 = vmatprep.subr.bf16.mxu0 0
        %3723 = vmatpush1.bf16.msra.mxu0 %v3699
        %3724 = vmatprep.subr.bf16.mxu0 0
        %3725 = vmatpush1.bf16.msra.mxu0 0
        %3726 = vmatprep.subr.bf16.mxu0 0
        %3727 = vmatpush1.bf16.msra.mxu0 0
        %3728 = vmatprep.subr.bf16.mxu0 0
        %3729 = vmatpush1.bf16.msra.mxu0 0
        %3730 = vmatprep.subr.bf16.mxu0 0
        %3731 = vmatpush1.bf16.msra.mxu0 0
        %3732 = vmatprep.subr.bf16.mxu0 0
        %3733 = vmatpush1.bf16.msra.mxu0 0
        %3734 = vmatprep.subr.bf16.mxu0 0
        %3735 = vmatpush1.bf16.msra.mxu0 0
        %3736 = vmatprep.subr.bf16.mxu0 0
        %3737 = vmatpush1.bf16.msra.mxu0 0
        %3738 = vmatprep.subr.bf16.mxu0 0
        %3739 = vmatpush1.bf16.msra.mxu0 0
        %3740 = vmatprep.subr.bf16.mxu0 0
        %3741 = vmatpush1.bf16.msra.mxu0 0
        %3742 = vmatprep.mubr.bf16.mxu0 0
        %3743 = vmatmul.mubr.bf16.gmra.mrb[0].mxu0 %v3708
        %v3744 = vpop.f32.mrb[0].mxu0
        %v3745 = vadd.f32 %v3439, %v3744
        %v3746 = vpop.f32.mrb[0].mxu0
        %v3747 = vpop.f32.mrb[0].mxu0
        %v3748 = vpop.f32.mrb[0].mxu0
        %3749 = vdwg.mxu0
        %v3764 = vunpack.c.l.b16 %v3447
        %v3765 = vunpack.c.l.b16 %v3448
        %v3766 = vunpack.c.l.b16 %v3449
        %v3767 = vunpack.c.l.b16 %v3450
        %v3768 = vunpack.c.l.b16 %v3451
        %v3769 = vunpack.c.l.b16 %v3452
        %v3770 = vunpack.c.l.b16 %v3453
        %v3771 = vunpack.c.l.b16 %v3454
        %v3772 = vunpack.c.l.b16 %v3455
        %v3773 = vunpack.c.l.b16 %v3456
        %v3774 = vunpack.c.l.b16 %v3457
        %v3775 = vunpack.c.l.b16 %v3458
        %v3776 = vunpack.c.l.b16 %v3459
        %v3777 = vunpack.c.l.b16 %v3460
        %v3778 = vpack.c.b16 %v3765, %v3764
        %v3779 = vpack.c.b16 %v3767, %v3766
        %v3780 = vpack.c.b16 %v3769, %v3768
        %v3781 = vpack.c.b16 %v3771, %v3770
        %v3782 = vpack.c.b16 %v3773, %v3772
        %v3783 = vpack.c.b16 %v3775, %v3774
        %v3784 = vpack.c.b16 %v3777, %v3776
        %v3793 = vsel %vm3323, %v3445, 0
        %3795 = vmatprep.subr.bf16.mxu0 0
        %3796 = vmatpush1.bf16.msra.mxu0 %v3778
        %3797 = vmatprep.subr.bf16.mxu0 0
        %3798 = vmatpush1.bf16.msra.mxu0 %v3779
        %3799 = vmatprep.subr.bf16.mxu0 0
        %3800 = vmatpush1.bf16.msra.mxu0 %v3780
        %3801 = vmatprep.subr.bf16.mxu0 0
        %3802 = vmatpush1.bf16.msra.mxu0 %v3781
        %3803 = vmatprep.subr.bf16.mxu0 0
        %3804 = vmatpush1.bf16.msra.mxu0 %v3782
        %3805 = vmatprep.subr.bf16.mxu0 0
        %3806 = vmatpush1.bf16.msra.mxu0 %v3783
        %3807 = vmatprep.subr.bf16.mxu0 0
        %3808 = vmatpush1.bf16.msra.mxu0 %v3784
        %3809 = vmatprep.subr.bf16.mxu0 0
        %3810 = vmatpush1.bf16.msra.mxu0 0
        %3811 = vmatprep.subr.bf16.mxu0 0
        %3812 = vmatpush1.bf16.msra.mxu0 0
        %3813 = vmatprep.subr.bf16.mxu0 0
        %3814 = vmatpush1.bf16.msra.mxu0 0
        %3815 = vmatprep.subr.bf16.mxu0 0
        %3816 = vmatpush1.bf16.msra.mxu0 0
        %3817 = vmatprep.subr.bf16.mxu0 0
        %3818 = vmatpush1.bf16.msra.mxu0 0
        %3819 = vmatprep.subr.bf16.mxu0 0
        %3820 = vmatpush1.bf16.msra.mxu0 0
        %3821 = vmatprep.subr.bf16.mxu0 0
        %3822 = vmatpush1.bf16.msra.mxu0 0
        %3823 = vmatprep.subr.bf16.mxu0 0
        %3824 = vmatpush1.bf16.msra.mxu0 0
        %3825 = vmatprep.subr.bf16.mxu0 0
        %3826 = vmatpush1.bf16.msra.mxu0 0
        %3827 = vmatprep.mubr.bf16.mxu0 0
        %3828 = vmatmul.mubr.bf16.gmra.mrb[0].mxu0 %v3793
        %v3829 = vpop.f32.mrb[0].mxu0
        %v3830 = vadd.f32 %v3558, %v3829
        %v3831 = vpop.f32.mrb[0].mxu0
        %v3832 = vpop.f32.mrb[0].mxu0
        %v3833 = vpop.f32.mrb[0].mxu0
        %3834 = vdwg.mxu0
        %v3835 = vadd.f32 %v3745, %v3830
        %v3836 = vadd.f32 %v3835, %v3660
        %v3837 = vld [vmem:[%s6] sm:$0x1]
        %v3839 = vlaneseq
        %v3840 = vshrl.u32 %v3839, 7
        %v3841 = vsub.s32 0, %v3840
        %v3842 = vrot.slane %v3837, %v3841
        %v3844 = vadd.f32 %v3836, %v3842
        %v3845 = vmax.f32 %v3844, 0.0
        %v3846 = vld [vmem:[%s7] sm:$0xff]
        %v3847 = vld [vmem:[%s7 + $0x8] sm:$0xff]
        %v3848 = vld [vmem:[%s7 + $0x10] sm:$0xff]
        %v3849 = vld [vmem:[%s7 + $0x18] sm:$0xff]
        %v3850 = vld [vmem:[%s7 + $0x20] sm:$0xff]
        %v3851 = vld [vmem:[%s7 + $0x28] sm:$0xff]
        %v3852 = vld [vmem:[%s7 + $0x30] sm:$0xff]
        %v3853 = vld [vmem:[%s7 + $0x38] sm:$0xff]
        %v3854 = vld [vmem:[%s7 + $0x40] sm:$0xff]
        %v3855 = vld [vmem:[%s7 + $0x48] sm:$0xff]
        %v3856 = vld [vmem:[%s7 + $0x50] sm:$0xff]
        %v3857 = vld [vmem:[%s7 + $0x58] sm:$0xff]
        %v3858 = vld [vmem:[%s7 + $0x60] sm:$0xff]
        %v3859 = vld [vmem:[%s7 + $0x68] sm:$0xff]
        %v3860 = vld [vmem:[%s7 + $0x70] sm:$0xff]
        %v3861 = vld [vmem:[%s8] sm:$0x1]
        %v3863 = vlaneseq
        %v3864 = vshrl.u32 %v3863, 7
        %v3865 = vsub.s32 0, %v3864
        %v3866 = vrot.slane %v3861, %v3865
        %vm3868 = vcmask 982016
        %v3870 = vsel %vm3868, %v3845, 0
        %3872 = vmatprep.subr.mxu0 0.0
        %3873 = vmatpush1.msra.mxu0 %v3846
        %3874 = vmatprep.subr.mxu0 0.0
        %3875 = vmatpush1.msra.mxu0 %v3847
        %3876 = vmatprep.subr.mxu0 0.0
        %3877 = vmatpush1.msra.mxu0 %v3848
        %3878 = vmatprep.subr.mxu0 0.0
        %3879 = vmatpush1.msra.mxu0 %v3849
        %3880 = vmatprep.subr.mxu0 0.0
        %3881 = vmatpush1.msra.mxu0 %v3850
        %3882 = vmatprep.subr.mxu0 0.0
        %3883 = vmatpush1.msra.mxu0 %v3851
        %3884 = vmatprep.subr.mxu0 0.0
        %3885 = vmatpush1.msra.mxu0 %v3852
        %3886 = vmatprep.subr.mxu0 0.0
        %3887 = vmatpush1.msra.mxu0 %v3853
        %3888 = vmatprep.subr.mxu0 0.0
        %3889 = vmatpush1.msra.mxu0 %v3854
        %3890 = vmatprep.subr.mxu0 0.0
        %3891 = vmatpush1.msra.mxu0 %v3855
        %3892 = vmatprep.subr.mxu0 0.0
        %3893 = vmatpush1.msra.mxu0 %v3856
        %3894 = vmatprep.subr.mxu0 0.0
        %3895 = vmatpush1.msra.mxu0 %v3857
        %3896 = vmatprep.subr.mxu0 0.0
        %3897 = vmatpush1.msra.mxu0 %v3858
        %3898 = vmatprep.subr.mxu0 0.0
        %3899 = vmatpush1.msra.mxu0 %v3859
        %3900 = vmatprep.subr.mxu0 0.0
        %3901 = vmatpush1.msra.mxu0 %v3860
        %3902 = vmatprep.subr.mxu0 0.0
        %3903 = vmatpush1.msra.mxu0 0.0
        %3904 = vmatprep.subr.mxu0 0.0
        %3905 = vmatpush1.msra.mxu0 0.0
        %3906 = vmatprep.subr.mxu0 0.0
        %3907 = vmatpush1.msra.mxu0 0.0
        %3908 = vmatprep.subr.mxu0 0.0
        %3909 = vmatpush1.msra.mxu0 0.0
        %3910 = vmatprep.subr.mxu0 0.0
        %3911 = vmatpush1.msra.mxu0 0.0
        %3912 = vmatprep.subr.mxu0 0.0
        %3913 = vmatpush1.msra.mxu0 0.0
        %3914 = vmatprep.subr.mxu0 0.0
        %3915 = vmatpush1.msra.mxu0 0.0
        %3916 = vmatprep.subr.mxu0 0.0
        %3917 = vmatpush1.msra.mxu0 0.0
        %3918 = vmatprep.subr.mxu0 0.0
        %3919 = vmatpush1.msra.mxu0 0.0
        %3920 = vmatprep.subr.mxu0 0.0
        %3921 = vmatpush1.msra.mxu0 0.0
        %3922 = vmatprep.subr.mxu0 0.0
        %3923 = vmatpush1.msra.mxu0 0.0
        %3924 = vmatprep.subr.mxu0 0.0
        %3925 = vmatpush1.msra.mxu0 0.0
        %3926 = vmatprep.subr.mxu0 0.0
        %3927 = vmatpush1.msra.mxu0 0.0
        %3928 = vmatprep.subr.mxu0 0.0
        %3929 = vmatpush1.msra.mxu0 0.0
        %3930 = vmatprep.subr.mxu0 0.0
        %3931 = vmatpush1.msra.mxu0 0.0
        %3932 = vmatprep.subr.mxu0 0.0
        %3933 = vmatpush1.msra.mxu0 0.0
        %3934 = vmatprep.subr.mxu0 0.0
        %3935 = vmatpush1.msra.mxu0 0.0
        %3936 = vmatprep.mubr.f32.mxu0 0.0
        %3937 = vmatmul.mubr.f32.gmra.mrb[0].mxu0 %v3870
        %v3938 = vpop.f32.mrb[0].mxu0
        %v3939 = vadd.f32 %v3866, %v3938
        %v3940 = vpop.f32.mrb[0].mxu0
        %3941 = vdwg.mxu0
        %v3942 = vmax.f32 %v3939, 0.0
        %v3943 = vld [vmem:[%s9] sm:$0xff]
        %v3944 = vld [vmem:[%s9 + $0x8] sm:$0xff]
        %v3945 = vld [vmem:[%s9 + $0x10] sm:$0xff]
        %v3946 = vld [vmem:[%s9 + $0x18] sm:$0xff]
        %v3947 = vld [vmem:[%s9 + $0x20] sm:$0xff]
        %v3948 = vld [vmem:[%s9 + $0x28] sm:$0xff]
        %v3949 = vld [vmem:[%s9 + $0x30] sm:$0xff]
        %v3950 = vld [vmem:[%s9 + $0x38] sm:$0xff]
        %v3951 = vld [vmem:[%s9 + $0x40] sm:$0xff]
        %v3952 = vld [vmem:[%s9 + $0x48] sm:$0xff]
        %v3953 = vld [vmem:[%s9 + $0x50] sm:$0xf]
        %v3954 = vld [vmem:[%s10] sm:$0x1]
        %v3956 = vlaneseq
        %v3957 = vshrl.u32 %v3956, 7
        %v3958 = vsub.s32 0, %v3957
        %v3959 = vrot.slane %v3954, %v3958
        %v3962 = vsel %vm1989, %v3942, 0
        %vm3964 = vcmask 1043456
        %v3966 = vsel %vm3964, %v3953, 0
        %3968 = vmatprep.subr.mxu0 0.0
        %3969 = vmatpush1.msra.mxu0 %v3943
        %3970 = vmatprep.subr.mxu0 0.0
        %3971 = vmatpush1.msra.mxu0 %v3944
        %3972 = vmatprep.subr.mxu0 0.0
        %3973 = vmatpush1.msra.mxu0 %v3945
        %3974 = vmatprep.subr.mxu0 0.0
        %3975 = vmatpush1.msra.mxu0 %v3946
        %3976 = vmatprep.subr.mxu0 0.0
        %3977 = vmatpush1.msra.mxu0 %v3947
        %3978 = vmatprep.subr.mxu0 0.0
        %3979 = vmatpush1.msra.mxu0 %v3948
        %3980 = vmatprep.subr.mxu0 0.0
        %3981 = vmatpush1.msra.mxu0 %v3949
        %3982 = vmatprep.subr.mxu0 0.0
        %3983 = vmatpush1.msra.mxu0 %v3950
        %3984 = vmatprep.subr.mxu0 0.0
        %3985 = vmatpush1.msra.mxu0 %v3951
        %3986 = vmatprep.subr.mxu0 0.0
        %3987 = vmatpush1.msra.mxu0 %v3952
        %3988 = vmatprep.subr.mxu0 0.0
        %3989 = vmatpush1.msra.mxu0 %v3966
        %3990 = vmatprep.subr.mxu0 0.0
        %3991 = vmatpush1.msra.mxu0 0.0
        %3992 = vmatprep.subr.mxu0 0.0
        %3993 = vmatpush1.msra.mxu0 0.0
        %3994 = vmatprep.subr.mxu0 0.0
        %3995 = vmatpush1.msra.mxu0 0.0
        %3996 = vmatprep.subr.mxu0 0.0
        %3997 = vmatpush1.msra.mxu0 0.0
        %3998 = vmatprep.subr.mxu0 0.0
        %3999 = vmatpush1.msra.mxu0 0.0
        %4000 = vmatprep.subr.mxu0 0.0
        %4001 = vmatpush1.msra.mxu0 0.0
        %4002 = vmatprep.subr.mxu0 0.0
        %4003 = vmatpush1.msra.mxu0 0.0
        %4004 = vmatprep.subr.mxu0 0.0
        %4005 = vmatpush1.msra.mxu0 0.0
        %4006 = vmatprep.subr.mxu0 0.0
        %4007 = vmatpush1.msra.mxu0 0.0
        %4008 = vmatprep.subr.mxu0 0.0
        %4009 = vmatpush1.msra.mxu0 0.0
        %4010 = vmatprep.subr.mxu0 0.0
        %4011 = vmatpush1.msra.mxu0 0.0
        %4012 = vmatprep.subr.mxu0 0.0
        %4013 = vmatpush1.msra.mxu0 0.0
        %4014 = vmatprep.subr.mxu0 0.0
        %4015 = vmatpush1.msra.mxu0 0.0
        %4016 = vmatprep.subr.mxu0 0.0
        %4017 = vmatpush1.msra.mxu0 0.0
        %4018 = vmatprep.subr.mxu0 0.0
        %4019 = vmatpush1.msra.mxu0 0.0
        %4020 = vmatprep.subr.mxu0 0.0
        %4021 = vmatpush1.msra.mxu0 0.0
        %4022 = vmatprep.subr.mxu0 0.0
        %4023 = vmatpush1.msra.mxu0 0.0
        %4024 = vmatprep.subr.mxu0 0.0
        %4025 = vmatpush1.msra.mxu0 0.0
        %4026 = vmatprep.subr.mxu0 0.0
        %4027 = vmatpush1.msra.mxu0 0.0
        %4028 = vmatprep.subr.mxu0 0.0
        %4029 = vmatpush1.msra.mxu0 0.0
        %4030 = vmatprep.subr.mxu0 0.0
        %4031 = vmatpush1.msra.mxu0 0.0
        %4032 = vmatprep.mubr.f32.mxu0 0.0
        %4033 = vmatmul.mubr.f32.gmra.mrb[0].mxu0 %v3962
        %v4034 = vpop.f32.mrb[0].mxu0
        %v4035 = vadd.f32 %v3959, %v4034
        %v4036 = vpop.f32.mrb[0].mxu0
        %4037 = vdwg.mxu0
        %vm4038 = vcmask 73728
        %4039 = vst.msk [vmem:[%s378] sm:$0x1] %vm4038, %v4035
        %s4040 = sand.u32 %s269, 1
        %s4041 = scalar_lea.sflag [#allocation5], %s4040
        %s4042 = sand.u32 %s269, 1
        %s4043 = scalar_lea.vmem [#allocation4], %s4042
        // Predicated region
        $region65: #{net_forward.1} parent=63 // pred_check
          %p4044 = pneg %p279
        $region66: #{net_forward.1} parent=63 // pred_check_branch
          %4046 = sbr.rel (%p4044) target = $region68
        $region67: #{net_forward.1} parent=63 // pred_region
          %s4048 = ssub.s32 16, 16
          %4049 = vsyncadd %s4041, %s4048
          %s4050 = smul.addr %s25, 16
          %s4051 = scalar_lea.hbm %s11, %s4050
          %s4053 = sshll.u32 %s4043, 4
          %s4054 = int_to_ptr.vmem [resolvable:$true] %s4053
          %4056 = dma.vmem_to_hbm [thread:$0]  %s4054, 16, %s4051, %s4041
        $region68: #{net_forward.1} parent=63 // pred_fallthru
          _
      $region64: #{net_forward.1} parent=5 // pred_fallthru
        _
      %p4057 = scmp.le.s32.totalorder 2, %s20
      // Predicated region
      $region69: #{net_forward.1} parent=5 // pred_check
        %p4058 = pneg %p4057
      $region70: #{net_forward.1} parent=5 // pred_check_branch
        %4060 = sbr.rel (%p4058) target = $region72
      $region71: #{net_forward.1} parent=5 // pred_region
        %s4061 = ssub.s32 %s20, 2
        // Predicated region
        $region73: #{net_forward.1} parent=71 // pred_check
          %p4062 = pneg %p285
        $region74: #{net_forward.1} parent=71 // pred_check_branch
          %4064 = sbr.rel (%p4062) target = $region76
        $region75: #{net_forward.1} parent=71 // pred_region
          %s4065 = sand.u32 %s270, 1
          %s4066 = scalar_lea.sflag [#allocation5], %s4065
          %s4067 = sand.u32 %s270, 1
          %s4068 = scalar_lea.vmem [#allocation4], %s4067
          %4069 = dma.done %s4066, 16
        $region76: #{net_forward.1} parent=71 // pred_fallthru
          _
      $region72: #{net_forward.1} parent=5 // pred_fallthru
        _
    $region6: #{net_forward.1} parent=1 // loop_footer
      %s24 = sadd.s32 1, %s20
    $region7: #{net_forward.1} parent=1 // loop_footer_branch
      %19 = sbr.rel target = $region3
    $region8: #{net_forward.1} parent=1 // loop_exit
      _
    %4070 = vsyncpa [#allocation5], 1
    %s4071 = scalar_lea.sflag [#allocation5], 1
    %4072 = vsyncpa %s4071, 1

</llo_original>
